<compile_context>
chip_gen: v7x
topology: tpu7x:2x2x1
jax: 0.10.0
libtpu: 0.0.40
codegen_flags: <defaults>
</compile_context>

<pallas_src>
import math
import functools

import jax
import jax.numpy as jnp
from jax.experimental import pallas as pl
from jax.experimental.pallas import tpu as pltpu


NEG_INF = -1e9


def _vmem_limit_bytes():
    # Larger scoped-VMEM => bigger tiles / deeper pipelining, but keep headroom
    # on chips whose physical VMEM is only 64 MiB per TensorCore (v7x).
    try:
        cap = pltpu.get_tpu_info().vmem_capacity_bytes
        return min(64 * 1024 * 1024, (3 * cap) // 4)
    except Exception:
        return 48 * 1024 * 1024


_VMEM_LIMIT = _vmem_limit_bytes()


def _pick_tile(dim, target, align):
    """Largest block <= target that divides dim and is a multiple of align,
    falling back to the full dimension (always legal for Pallas blocks)."""
    if dim <= target:
        return dim
    t = (target // align) * align
    while t >= align:
        if dim % t == 0:
            return t
        t -= align
    return dim


# ----------------------------------------------------------------------------
# Tiled, pipelined linear:  y = x @ w + b   (optional ReLU)
#   x: (M, K) bf16   w: (K, N) bf16   b: (N,) f32   ->  (M, N) bf16 (default)
# ----------------------------------------------------------------------------
def _linear_kernel(x_ref, w_ref, b_ref, o_ref, acc_ref, *, relu):
    @pl.when(pl.program_id(2) == 0)
    def _():
        acc_ref[...] = jnp.zeros_like(acc_ref)

    acc_ref[...] += jnp.dot(x_ref[...], w_ref[...],
                            preferred_element_type=jnp.float32)

    @pl.when(pl.program_id(2) == pl.num_programs(2) - 1)
    def _():
        y = acc_ref[...] + b_ref[...]
        if relu:
            y = jnp.maximum(y, 0.0)
        o_ref[...] = y.astype(o_ref.dtype)


def linear_pallas(x, w, b, relu=False, out_dtype=jnp.bfloat16,
                  tm=512, tn=512, tk=1024):
    M, K = x.shape
    K2, N = w.shape
    assert K == K2
    tm = _pick_tile(M, tm, 8)
    tn = _pick_tile(N, tn, 128)
    tk = _pick_tile(K, tk, 128)
    x = x.astype(jnp.bfloat16)
    w = w.astype(jnp.bfloat16)
    kernel = functools.partial(_linear_kernel, relu=relu)
    out_bytes = jnp.dtype(out_dtype).itemsize
    return pl.pallas_call(
        kernel,
        out_shape=jax.ShapeDtypeStruct((M, N), out_dtype),
        grid=(M // tm, N // tn, K // tk),
        in_specs=[
            pl.BlockSpec((tm, tk), lambda i, j, k: (i, k)),
            pl.BlockSpec((tk, tn), lambda i, j, k: (k, j)),
            pl.BlockSpec((1, tn), lambda i, j, k: (0, j)),
        ],
        out_specs=pl.BlockSpec((tm, tn), lambda i, j, k: (i, j)),
        scratch_shapes=[pltpu.VMEM((tm, tn), jnp.float32)],
        compiler_params=pltpu.CompilerParams(
            dimension_semantics=("parallel", "parallel", "arbitrary"),
            vmem_limit_bytes=_VMEM_LIMIT),
        cost_estimate=pl.CostEstimate(
            flops=2 * M * N * K, transcendentals=0,
            bytes_accessed=M * K * 2 + K * N * 2 + M * N * out_bytes),
    )(x, w, b.reshape(1, N).astype(jnp.float32))


# ----------------------------------------------------------------------------
# Flash-style multi-head attention.
#   q: (B, H, Tq, dh)  k/v: (B, H, Tk, dh)  (bf16)
#   optional additive bias: (B, 1, Tk) f32 (source padding mask)
#   grid = (B, H, q_tiles, kv_tiles), online softmax across the kv axis.
# ----------------------------------------------------------------------------
def _flash_attn_kernel(*refs, scale, causal, has_bias, tq, tk):
    if has_bias:
        q_ref, k_ref, v_ref, bias_ref, o_ref, m_sc, l_sc, acc_sc = refs
    else:
        q_ref, k_ref, v_ref, o_ref, m_sc, l_sc, acc_sc = refs
        bias_ref = None

    qi = pl.program_id(2)
    ki = pl.program_id(3)
    q_start = qi * tq
    k_start = ki * tk

    @pl.when(ki == 0)
    def _():
        m_sc[...] = jnp.full_like(m_sc, -1e30)
        l_sc[...] = jnp.zeros_like(l_sc)
        acc_sc[...] = jnp.zeros_like(acc_sc)

    def compute():
        # fold 1/sqrt(dh) into q (tiny (tq,dh) bf16 multiply) instead of the
        # (tq,tk) f32 score matrix.
        q = q_ref[0, 0] * scale                       # (tq, dh) bf16
        k = k_ref[0, 0]                               # (tk, dh) bf16
        v = v_ref[0, 0]                               # (tk, dh) bf16
        # contract last dims directly -> no k transpose, f32 accumulation
        s = jax.lax.dot_general(q, k, (((1,), (1,)), ((), ())),
                                preferred_element_type=jnp.float32)  # (tq, tk)
        if has_bias:
            s = s + bias_ref[0]                       # (1, tk) broadcast
        if causal:
            row = q_start + jax.lax.broadcasted_iota(jnp.int32, (tq, tk), 0)
            col = k_start + jax.lax.broadcasted_iota(jnp.int32, (tq, tk), 1)
            s = jnp.where(col <= row, s, NEG_INF)

        m_prev = m_sc[...]
        m_new = jnp.maximum(m_prev, jnp.max(s, axis=-1, keepdims=True))
        alpha = jnp.exp(m_prev - m_new)
        p = jnp.exp(s - m_new)
        l_sc[...] = alpha * l_sc[...] + jnp.sum(p, axis=-1, keepdims=True)
        acc_sc[...] = alpha * acc_sc[...] + jnp.dot(
            p.astype(jnp.bfloat16), v, preferred_element_type=jnp.float32)
        m_sc[...] = m_new

    if causal:
        # skip kv tiles that lie entirely above the diagonal
        @pl.when(k_start <= q_start + tq - 1)
        def _():
            compute()
    else:
        compute()

    @pl.when(ki == pl.num_programs(3) - 1)
    def _():
        o_ref[0, 0] = (acc_sc[...] *
                       pl.reciprocal(l_sc[...], approx=True)).astype(o_ref.dtype)


def attention_pallas(q, k, v, bias=None, causal=False, tq=256, tk=256):
    B, H, Tq, dh = q.shape
    Tk = k.shape[2]
    tq = _pick_tile(Tq, tq, 8)
    tk = _pick_tile(Tk, tk, 8)
    has_bias = bias is not None
    kernel = functools.partial(
        _flash_attn_kernel, scale=1.0 / math.sqrt(dh), causal=causal,
        has_bias=has_bias, tq=tq, tk=tk)

    in_specs = [
        pl.BlockSpec((1, 1, tq, dh), lambda b, h, qi, ki: (b, h, qi, 0)),
        pl.BlockSpec((1, 1, tk, dh), lambda b, h, qi, ki: (b, h, ki, 0)),
        pl.BlockSpec((1, 1, tk, dh), lambda b, h, qi, ki: (b, h, ki, 0)),
    ]
    args = [q.astype(jnp.bfloat16), k.astype(jnp.bfloat16), v.astype(jnp.bfloat16)]
    if has_bias:
        in_specs.append(pl.BlockSpec((1, 1, tk), lambda b, h, qi, ki: (b, 0, ki)))
        args.append(bias.astype(jnp.float32))

    return pl.pallas_call(
        kernel,
        out_shape=jax.ShapeDtypeStruct((B, H, Tq, dh), jnp.bfloat16),
        grid=(B, H, Tq // tq, Tk // tk),
        in_specs=in_specs,
        out_specs=pl.BlockSpec((1, 1, tq, dh), lambda b, h, qi, ki: (b, h, qi, 0)),
        scratch_shapes=[pltpu.VMEM((tq, 1), jnp.float32),
                        pltpu.VMEM((tq, 1), jnp.float32),
                        pltpu.VMEM((tq, dh), jnp.float32)],
        compiler_params=pltpu.CompilerParams(
            dimension_semantics=("parallel", "parallel", "parallel", "arbitrary"),
            vmem_limit_bytes=_VMEM_LIMIT),
        cost_estimate=pl.CostEstimate(
            flops=4 * B * H * Tq * Tk * dh,
            transcendentals=B * H * Tq * Tk,
            bytes_accessed=2 * B * H * (2 * Tq * dh + 2 * Tk * dh)),
    )(*args)


# ----------------------------------------------------------------------------
# Fused: y = LayerNorm(residual + x @ w + b)   (attention output projection)
# ----------------------------------------------------------------------------
def _linear_add_ln_kernel(x_ref, w_ref, b_ref, r_ref, g_ref, bt_ref, o_ref, *, eps):
    y = jnp.dot(x_ref[...], w_ref[...],
                preferred_element_type=jnp.float32) + b_ref[...]
    h = y + r_ref[...].astype(jnp.float32)
    mean = jnp.mean(h, axis=-1, keepdims=True)
    var = jnp.mean(jnp.square(h - mean), axis=-1, keepdims=True)
    out = (h - mean) * jax.lax.rsqrt(var + eps) * g_ref[...] + bt_ref[...]
    o_ref[...] = out.astype(o_ref.dtype)


def linear_add_ln_pallas(x, w, b, residual, gamma, beta, eps=1e-5, tm=512):
    M, K = x.shape
    K2, N = w.shape
    assert K == K2 and residual.shape == (M, N)
    tm = _pick_tile(M, tm, 8)
    kernel = functools.partial(_linear_add_ln_kernel, eps=eps)
    return pl.pallas_call(
        kernel,
        out_shape=jax.ShapeDtypeStruct((M, N), jnp.bfloat16),
        grid=(M // tm,),
        in_specs=[
            pl.BlockSpec((tm, K), lambda i: (i, 0)),
            pl.BlockSpec((K, N), lambda i: (0, 0)),
            pl.BlockSpec((1, N), lambda i: (0, 0)),
            pl.BlockSpec((tm, N), lambda i: (i, 0)),
            pl.BlockSpec((1, N), lambda i: (0, 0)),
            pl.BlockSpec((1, N), lambda i: (0, 0)),
        ],
        out_specs=pl.BlockSpec((tm, N), lambda i: (i, 0)),
        compiler_params=pltpu.CompilerParams(
            dimension_semantics=("parallel",),
            vmem_limit_bytes=_VMEM_LIMIT),
        cost_estimate=pl.CostEstimate(
            flops=2 * M * N * K, transcendentals=0,
            bytes_accessed=M * K * 2 + K * N * 2 + 2 * M * N * 2),
    )(x.astype(jnp.bfloat16), w.astype(jnp.bfloat16),
      b.reshape(1, N).astype(jnp.float32),
      residual.astype(jnp.bfloat16),
      gamma.reshape(1, N).astype(jnp.float32),
      beta.reshape(1, N).astype(jnp.float32))


# ----------------------------------------------------------------------------
# Fused FFN block: y = LayerNorm(x + ReLU(x @ w1 + b1) @ w2 + b2)
# (the (tm, n_hidden) intermediate never leaves VMEM)
# ----------------------------------------------------------------------------
def _ffn_add_ln_kernel(x_ref, w1_ref, b1_ref, w2_ref, b2_ref, g_ref, bt_ref,
                       o_ref, *, eps):
    x = x_ref[...]
    h = jnp.dot(x, w1_ref[...], preferred_element_type=jnp.float32) + b1_ref[...]
    h = jnp.maximum(h, 0.0)
    y = jnp.dot(h.astype(jnp.bfloat16), w2_ref[...],
                preferred_element_type=jnp.float32) + b2_ref[...]
    hh = y + x.astype(jnp.float32)
    mean = jnp.mean(hh, axis=-1, keepdims=True)
    var = jnp.mean(jnp.square(hh - mean), axis=-1, keepdims=True)
    out = (hh - mean) * jax.lax.rsqrt(var + eps) * g_ref[...] + bt_ref[...]
    o_ref[...] = out.astype(o_ref.dtype)


def ffn_add_ln_pallas(x, w1, b1, w2, b2, gamma, beta, eps=1e-5, tm=512):
    M, D = x.shape
    D2, Hh = w1.shape
    assert D == D2 and w2.shape == (Hh, D)

    # VMEM guard (v7x has only 64 MiB per TensorCore): if keeping w1 + w2
    # fully resident (double-buffered bf16) would eat more than half the
    # scoped-VMEM budget, fall back to two tiled linear kernels.
    resident_weight_bytes = 2 * 2 * (D * Hh + Hh * D)
    if resident_weight_bytes > _VMEM_LIMIT // 2:
        # TODO(synk): a K-tiled fused FFN would avoid this HBM round trip.
        h = linear_pallas(x, w1, b1, relu=True)
        return linear_add_ln_pallas(h, w2, b2, x, gamma, beta, eps=eps)

    tm = _pick_tile(M, tm, 8)
    kernel = functools.partial(_ffn_add_ln_kernel, eps=eps)
    return pl.pallas_call(
        kernel,
        out_shape=jax.ShapeDtypeStruct((M, D), jnp.bfloat16),
        grid=(M // tm,),
        in_specs=[
            pl.BlockSpec((tm, D), lambda i: (i, 0)),
            pl.BlockSpec((D, Hh), lambda i: (0, 0)),
            pl.BlockSpec((1, Hh), lambda i: (0, 0)),
            pl.BlockSpec((Hh, D), lambda i: (0, 0)),
            pl.BlockSpec((1, D), lambda i: (0, 0)),
            pl.BlockSpec((1, D), lambda i: (0, 0)),
            pl.BlockSpec((1, D), lambda i: (0, 0)),
        ],
        out_specs=pl.BlockSpec((tm, D), lambda i: (i, 0)),
        compiler_params=pltpu.CompilerParams(
            dimension_semantics=("parallel",),
            vmem_limit_bytes=_VMEM_LIMIT),
        cost_estimate=pl.CostEstimate(
            flops=4 * M * D * Hh, transcendentals=0,
            bytes_accessed=2 * M * D * 2 + 2 * D * Hh * 2),
    )(x.astype(jnp.bfloat16), w1.astype(jnp.bfloat16),
      b1.reshape(1, Hh).astype(jnp.float32), w2.astype(jnp.bfloat16),
      b2.reshape(1, D).astype(jnp.float32),
      gamma.reshape(1, D).astype(jnp.float32),
      beta.reshape(1, D).astype(jnp.float32))


# ----------------------------------------------------------------------------
# Model building blocks (JAX glue around the kernels)
# ----------------------------------------------------------------------------
def positional_encoding(seq_len, d_model):
    pos = jnp.arange(seq_len, dtype=jnp.float32)[:, None]
    i = jnp.arange(0, d_model, 2, dtype=jnp.float32)
    div = jnp.exp(-math.log(10000.0) * i / d_model)
    pe = jnp.zeros((seq_len, d_model), dtype=jnp.float32)
    pe = pe.at[:, 0::2].set(jnp.sin(pos * div))
    pe = pe.at[:, 1::2].set(jnp.cos(pos * div))
    return pe


# TODO(synk): head split/merge are XLA-level transposes (now bf16 => half the
# bytes of the previous version); writing q/k/v per-head directly from the QKV
# buffer via BlockSpec column slices needs dh to be a multiple of 128 lanes.
def _split_heads(x2d, B, T, H, dh):
    return x2d.reshape(B, T, H, dh).transpose(0, 2, 1, 3)        # (B,H,T,dh)


def _merge_heads(x4d, B, T, H, dh):
    return x4d.transpose(0, 2, 1, 3).reshape(B * T, H * dh)      # (B*T, D)


def self_attention_block(x, ap, ln_g, ln_b, n_head, causal):
    """LN(x + MHA(x, x)) with fused QKV and fused out-proj+add+LN."""
    B, T, D = x.shape
    dh = D // n_head
    x2d = x.reshape(B * T, D)
    qkv = linear_pallas(x2d, ap["wqkv"], ap["bqkv"])             # (B*T, 3D) bf16
    q = _split_heads(qkv[:, :D], B, T, n_head, dh)
    k = _split_heads(qkv[:, D:2 * D], B, T, n_head, dh)
    v = _split_heads(qkv[:, 2 * D:], B, T, n_head, dh)
    ctx = attention_pallas(q, k, v, bias=None, causal=causal)    # (B,H,T,dh) bf16
    ctx2d = _merge_heads(ctx, B, T, n_head, dh)
    out = linear_add_ln_pallas(ctx2d, ap["wo"], ap["bo"], x2d, ln_g, ln_b)
    return out.reshape(B, T, D)


def cross_attention_block(x, memory, ap, ln_g, ln_b, n_head, src_bias):
    """LN(x + MHA(x, memory)) with fused KV projection and fused out-proj+add+LN."""
    B, T, D = x.shape
    S = memory.shape[1]
    dh = D // n_head
    x2d = x.reshape(B * T, D)
    m2d = memory.reshape(B * S, D)
    q = linear_pallas(x2d, ap["wq"], ap["bq"])                   # (B*T, D) bf16
    kv = linear_pallas(m2d, ap["wkv"], ap["bkv"])                # (B*S, 2D) bf16
    q = _split_heads(q, B, T, n_head, dh)
    k = _split_heads(kv[:, :D], B, S, n_head, dh)
    v = _split_heads(kv[:, D:], B, S, n_head, dh)
    ctx = attention_pallas(q, k, v, bias=src_bias, causal=False)
    ctx2d = _merge_heads(ctx, B, T, n_head, dh)
    out = linear_add_ln_pallas(ctx2d, ap["wo"], ap["bo"], x2d, ln_g, ln_b)
    return out.reshape(B, T, D)


def encoder_layer(x, p, n_head):
    B, S, D = x.shape
    x1 = self_attention_block(x, p["attn"], p["ln1_g"], p["ln1_b"],
                              n_head, causal=False)
    x2 = ffn_add_ln_pallas(x1.reshape(B * S, D), p["w1"], p["b1"],
                           p["w2"], p["b2"], p["ln2_g"], p["ln2_b"])
    return x2.reshape(B, S, D)


def decoder_layer(x, memory, p, src_bias, n_head):
    B, T, D = x.shape
    x1 = self_attention_block(x, p["self_attn"], p["ln1_g"], p["ln1_b"],
                              n_head, causal=True)
    x2 = cross_attention_block(x1, memory, p["cross_attn"], p["ln2_g"],
                               p["ln2_b"], n_head, src_bias)
    x3 = ffn_add_ln_pallas(x2.reshape(B * T, D), p["w1"], p["b1"],
                           p["w2"], p["b2"], p["ln3_g"], p["ln3_b"])
    return x3.reshape(B, T, D)


def transformer_forward(params, inp_src, inp_tgt, cfg):
    n_head = cfg["n_head"]
    B, S = inp_src.shape
    _, T = inp_tgt.shape
    D = cfg["d_model"]

    # source padding mask as a tiny additive bias (B, 1, S); the causal target
    # mask is generated inside the attention kernel (no (B*H, T, T) bias).
    # (matches the PyTorch reference: encoder self-attn is unmasked, decoder
    # self-attn is causal, decoder cross-attn uses the src padding mask)
    src_bias = jnp.where((inp_src != cfg["src_pad"])[:, None, :],
                         0.0, NEG_INF).astype(jnp.float32)

    # ---- encoder ----
    out = (jnp.take(params["enc_embed"], inp_src, axis=0)
           + positional_encoding(S, D)[None]).astype(jnp.bfloat16)
    for lp in params["enc_layers"]:
        out = encoder_layer(out, lp, n_head)
    memory = out

    # ---- decoder ----
    out_d = (jnp.take(params["dec_embed"], inp_tgt, axis=0)
             + positional_encoding(T, D)[None]).astype(jnp.bfloat16)
    for lp in params["dec_layers"]:
        out_d = decoder_layer(out_d, memory, lp, src_bias, n_head)

    logits = linear_pallas(out_d.reshape(B * T, D),
                           params["out_w"], params["out_b"],
                           out_dtype=jnp.float32)
    return logits.reshape(B, T, cfg["n_vocab_tgt"])


# ----------------------------------------------------------------------------
# Deterministic parameter init (xavier-normal for dim>1, like _init_weight).
# Matmul weights are stored in bf16 (MXU-native); LN params / biases / embeds f32.
# ----------------------------------------------------------------------------
def _key_stream(seed):
    key = jax.random.PRNGKey(seed)
    while True:
        key, sub = jax.random.split(key)
        yield sub


def _xavier(keys, shape, dtype=jnp.float32):
    std = math.sqrt(2.0 / (shape[0] + shape[1]))
    w = std * jax.random.normal(next(keys), shape, dtype=jnp.float32)
    return w.astype(dtype)


def _self_attn_params(keys, d):
    return {
        "wqkv": _xavier(keys, (d, 3 * d), jnp.bfloat16),
        "bqkv": jnp.zeros((3 * d,), jnp.float32),
        "wo": _xavier(keys, (d, d), jnp.bfloat16),
        "bo": jnp.zeros((d,), jnp.float32),
    }


def _cross_attn_params(keys, d):
    return {
        "wq": _xavier(keys, (d, d), jnp.bfloat16),
        "bq": jnp.zeros((d,), jnp.float32),
        "wkv": _xavier(keys, (d, 2 * d), jnp.bfloat16),
        "bkv": jnp.zeros((2 * d,), jnp.float32),
        "wo": _xavier(keys, (d, d), jnp.bfloat16),
        "bo": jnp.zeros((d,), jnp.float32),
    }


def init_params(cfg, seed=0):
    keys = _key_stream(seed)
    d, h = cfg["d_model"], cfg["n_hidden"]
    params = {
        "enc_embed": _xavier(keys, (cfg["n_vocab_src"], d)),
        "dec_embed": _xavier(keys, (cfg["n_vocab_tgt"], d)),
        "enc_layers": [],
        "dec_layers": [],
        "out_w": _xavier(keys, (d, cfg["n_vocab_tgt"]), jnp.bfloat16),
        "out_b": jnp.zeros((cfg["n_vocab_tgt"],), jnp.float32),
    }
    for _ in range(cfg["n_layer"]):
        params["enc_layers"].append({
            "attn": _self_attn_params(keys, d),
            "w1": _xavier(keys, (d, h), jnp.bfloat16), "b1": jnp.zeros((h,), jnp.float32),
            "w2": _xavier(keys, (h, d), jnp.bfloat16), "b2": jnp.zeros((d,), jnp.float32),
            "ln1_g": jnp.ones((d,), jnp.float32), "ln1_b": jnp.zeros((d,), jnp.float32),
            "ln2_g": jnp.ones((d,), jnp.float32), "ln2_b": jnp.zeros((d,), jnp.float32),
        })
    for _ in range(cfg["n_layer"]):
        params["dec_layers"].append({
            "self_attn": _self_attn_params(keys, d),
            "cross_attn": _cross_attn_params(keys, d),
            "w1": _xavier(keys, (d, h), jnp.bfloat16), "b1": jnp.zeros((h,), jnp.float32),
            "w2": _xavier(keys, (h, d), jnp.bfloat16), "b2": jnp.zeros((d,), jnp.float32),
            "ln1_g": jnp.ones((d,), jnp.float32), "ln1_b": jnp.zeros((d,), jnp.float32),
            "ln2_g": jnp.ones((d,), jnp.float32), "ln2_b": jnp.zeros((d,), jnp.float32),
            "ln3_g": jnp.ones((d,), jnp.float32), "ln3_b": jnp.zeros((d,), jnp.float32),
        })
    return params


# ----------------------------------------------------------------------------
if __name__ == "__main__":
    cfg = dict(
        n_vocab_src=64,
        n_vocab_tgt=96,
        d_model=32,
        n_hidden=64,
        n_head=4,
        n_layer=2,
        src_pad=0,
    )
    B, S_src, S_tgt = 2, 8, 8

    key = jax.random.PRNGKey(0)
    k_src, k_tgt = jax.random.split(key)
    inp_src = jax.random.randint(k_src, (B, S_src), 0, cfg["n_vocab_src"], dtype=jnp.int32)
    inp_tgt = jax.random.randint(k_tgt, (B, S_tgt), 0, cfg["n_vocab_tgt"], dtype=jnp.int32)

    params = init_params(cfg, seed=0)

    # TODO(synk): dropout is eval-mode identity; PositionalEncoding dropout not applied.
    fwd = jax.jit(functools.partial(transformer_forward, cfg=cfg))
    logits = fwd(params, inp_src, inp_tgt)
    jax.block_until_ready(logits)

    assert logits.shape == (B, S_tgt, cfg["n_vocab_tgt"])
    assert bool(jnp.all(jnp.isfinite(logits)))
    print("KERNEL_OK")
</pallas_src>

<mosaic_0001>
module attributes {stable_mosaic.version = 11 : i64} {
  func.func @_linear_kernel(%arg0: i32, %arg1: i32, %arg2: i32, %arg3: memref<16x32xbf16, #tpu.memory_space<vmem>>, %arg4: memref<32x96xbf16, #tpu.memory_space<vmem>>, %arg5: memref<1x96xf32, #tpu.memory_space<vmem>>, %arg6: memref<16x96xbf16, #tpu.memory_space<vmem>>, %arg7: memref<16x96xf32, #tpu.memory_space<vmem>>) attributes {dimension_semantics = [#tpu.dimension_semantics<parallel>, #tpu.dimension_semantics<parallel>, #tpu.dimension_semantics<arbitrary>], iteration_bounds = array<i64: 1, 1, 1>, scalar_prefetch = 0 : i64, scratch_operands = 1 : i64, tpu.core_type = #tpu.core_type<tc>, window_params = [{transform_indices = @transform_0, window_bounds = array<i64: 16, 32>}, {transform_indices = @transform_1, window_bounds = array<i64: 32, 96>}, {transform_indices = @transform_2, window_bounds = array<i64: 1, 96>}, {transform_indices = @transform_3, window_bounds = array<i64: 16, 96>}]} {
    %c0_i32 = arith.constant 0 : i32
    %0 = arith.cmpi eq, %arg2, %c0_i32 : i32
    %1 = arith.extui %0 : i1 to i32
    %c0_i32_0 = arith.constant 0 : i32
    %2 = arith.cmpi ne, %1, %c0_i32_0 : i32
    scf.if %2 {
      %cst_10 = arith.constant 0.000000e+00 : f32
      %12 = vector.broadcast %cst_10 : f32 to vector<16x96xf32>
      %c0_11 = arith.constant 0 : index
      %c0_12 = arith.constant 0 : index
      %13 = vector.load %arg7[%c0_11, %c0_12] : memref<16x96xf32, #tpu.memory_space<vmem>>, vector<16x96xf32>
      tpu.vector_store %arg7[%c0_11, %c0_12], %12 {strides = array<i32>} : memref<16x96xf32, #tpu.memory_space<vmem>>, vector<16x96xf32>,
    } else {
    }
    %c0 = arith.constant 0 : index
    %c0_1 = arith.constant 0 : index
    %3 = vector.load %arg7[%c0, %c0_1] : memref<16x96xf32, #tpu.memory_space<vmem>>, vector<16x96xf32>
    %c0_2 = arith.constant 0 : index
    %c0_3 = arith.constant 0 : index
    %4 = vector.load %arg3[%c0_2, %c0_3] : memref<16x32xbf16, #tpu.memory_space<vmem>>, vector<16x32xbf16>
    %c0_4 = arith.constant 0 : index
    %c0_5 = arith.constant 0 : index
    %5 = vector.load %arg4[%c0_4, %c0_5] : memref<32x96xbf16, #tpu.memory_space<vmem>>, vector<32x96xbf16>
    %cst = arith.constant dense<0.000000e+00> : vector<16x96xf32>
    %6 = tpu.matmul %4, %5, %cst {dimension_numbers = #tpu.dot_dimension_numbers<[1], [0], [0], [1], [0, 0, 1, 1], [], []>} : vector<16x32xbf16>, vector<32x96xbf16>, vector<16x96xf32> -> vector<16x96xf32>
    %7 = arith.addf %3, %6 : vector<16x96xf32>
    %c0_6 = arith.constant 0 : index
    %c0_7 = arith.constant 0 : index
    %8 = vector.load %arg7[%c0_6, %c0_7] : memref<16x96xf32, #tpu.memory_space<vmem>>, vector<16x96xf32>
    tpu.vector_store %arg7[%c0_6, %c0_7], %7 {strides = array<i32>} : memref<16x96xf32, #tpu.memory_space<vmem>>, vector<16x96xf32>,
    %c0_i32_8 = arith.constant 0 : i32
    %9 = arith.cmpi eq, %arg2, %c0_i32_8 : i32
    %10 = arith.extui %9 : i1 to i32
    %c0_i32_9 = arith.constant 0 : i32
    %11 = arith.cmpi ne, %10, %c0_i32_9 : i32
    scf.if %11 {
      %c0_10 = arith.constant 0 : index
      %c0_11 = arith.constant 0 : index
      %12 = vector.load %arg7[%c0_10, %c0_11] : memref<16x96xf32, #tpu.memory_space<vmem>>, vector<16x96xf32>
      %c0_12 = arith.constant 0 : index
      %c0_13 = arith.constant 0 : index
      %13 = vector.load %arg5[%c0_12, %c0_13] : memref<1x96xf32, #tpu.memory_space<vmem>>, vector<1x96xf32>
      %14 = vector.broadcast %13 : vector<1x96xf32> to vector<16x96xf32>
      %15 = arith.addf %12, %14 : vector<16x96xf32>
      %16 = arith.truncf %15 : vector<16x96xf32> to vector<16x96xbf16>
      %c0_14 = arith.constant 0 : index
      %c0_15 = arith.constant 0 : index
      %17 = vector.load %arg6[%c0_14, %c0_15] : memref<16x96xbf16, #tpu.memory_space<vmem>>, vector<16x96xbf16>
      tpu.vector_store %arg6[%c0_14, %c0_15], %16 {strides = array<i32>} : memref<16x96xbf16, #tpu.memory_space<vmem>>, vector<16x96xbf16>,
    } else {
    }
    return
  }
  func.func @transform_0(%arg0: i32, %arg1: i32, %arg2: i32) -> (i32, i32) {
    %c0_i32 = arith.constant 0 : i32
    return %arg0, %arg2 : i32, i32
  }
  func.func @transform_1(%arg0: i32, %arg1: i32, %arg2: i32) -> (i32, i32) {
    %c0_i32 = arith.constant 0 : i32
    return %arg2, %arg1 : i32, i32
  }
  func.func @transform_2(%arg0: i32, %arg1: i32, %arg2: i32) -> (i32, i32) {
    %c0_i32 = arith.constant 0 : i32
    %c0_i32_0 = arith.constant 0 : i32
    return %c0_i32, %arg1 : i32, i32
  }
  func.func @transform_3(%arg0: i32, %arg1: i32, %arg2: i32) -> (i32, i32) {
    %c0_i32 = arith.constant 0 : i32
    return %arg0, %arg1 : i32, i32
  }
}

module attributes {stable_mosaic.version = 11 : i64} {
  func.func @_flash_attn_kernel(%arg0: i32, %arg1: i32, %arg2: i32, %arg3: i32, %arg4: memref<1x1x8x8xbf16, #tpu.memory_space<vmem>>, %arg5: memref<1x1x8x8xbf16, #tpu.memory_space<vmem>>, %arg6: memref<1x1x8x8xbf16, #tpu.memory_space<vmem>>, %arg7: memref<1x1x8x8xbf16, #tpu.memory_space<vmem>>, %arg8: memref<8x1xf32, #tpu.memory_space<vmem>>, %arg9: memref<8x1xf32, #tpu.memory_space<vmem>>, %arg10: memref<8x8xf32, #tpu.memory_space<vmem>>) attributes {dimension_semantics = [#tpu.dimension_semantics<parallel>, #tpu.dimension_semantics<parallel>, #tpu.dimension_semantics<parallel>, #tpu.dimension_semantics<arbitrary>], iteration_bounds = array<i64: 2, 4, 1, 1>, scalar_prefetch = 0 : i64, scratch_operands = 3 : i64, tpu.core_type = #tpu.core_type<tc>, window_params = [{transform_indices = @transform_0, window_bounds = array<i64: 1, 1, 8, 8>}, {transform_indices = @transform_1, window_bounds = array<i64: 1, 1, 8, 8>}, {transform_indices = @transform_2, window_bounds = array<i64: 1, 1, 8, 8>}, {transform_indices = @transform_3, window_bounds = array<i64: 1, 1, 8, 8>}]} {
    %c8_i32 = arith.constant 8 : i32
    %0 = arith.muli %arg2, %c8_i32 : i32
    %c8_i32_0 = arith.constant 8 : i32
    %1 = arith.muli %arg3, %c8_i32_0 : i32
    %c0_i32 = arith.constant 0 : i32
    %2 = arith.cmpi eq, %arg3, %c0_i32 : i32
    %3 = arith.extui %2 : i1 to i32
    %c0_i32_1 = arith.constant 0 : i32
    %4 = arith.cmpi ne, %3, %c0_i32_1 : i32
    scf.if %4 {
      %cst = arith.constant -1.000000e+30 : f32
      %13 = vector.broadcast %cst : f32 to vector<8x1xf32>
      %c0 = arith.constant 0 : index
      %c0_6 = arith.constant 0 : index
      %14 = vector.load %arg8[%c0, %c0_6] : memref<8x1xf32, #tpu.memory_space<vmem>>, vector<8x1xf32>
      tpu.vector_store %arg8[%c0, %c0_6], %13 {strides = array<i32>} : memref<8x1xf32, #tpu.memory_space<vmem>>, vector<8x1xf32>,
      %cst_7 = arith.constant 0.000000e+00 : f32
      %15 = vector.broadcast %cst_7 : f32 to vector<8x1xf32>
      %c0_8 = arith.constant 0 : index
      %c0_9 = arith.constant 0 : index
      %16 = vector.load %arg9[%c0_8, %c0_9] : memref<8x1xf32, #tpu.memory_space<vmem>>, vector<8x1xf32>
      tpu.vector_store %arg9[%c0_8, %c0_9], %15 {strides = array<i32>} : memref<8x1xf32, #tpu.memory_space<vmem>>, vector<8x1xf32>,
      %cst_10 = arith.constant 0.000000e+00 : f32
      %17 = vector.broadcast %cst_10 : f32 to vector<8x8xf32>
      %c0_11 = arith.constant 0 : index
      %c0_12 = arith.constant 0 : index
      %18 = vector.load %arg10[%c0_11, %c0_12] : memref<8x8xf32, #tpu.memory_space<vmem>>, vector<8x8xf32>
      tpu.vector_store %arg10[%c0_11, %c0_12], %17 {strides = array<i32>} : memref<8x8xf32, #tpu.memory_space<vmem>>, vector<8x8xf32>,
    } else {
    }
    %c8_i32_2 = arith.constant 8 : i32
    %5 = arith.addi %0, %c8_i32_2 : i32
    %c1_i32 = arith.constant 1 : i32
    %6 = arith.subi %5, %c1_i32 : i32
    %7 = arith.cmpi sle, %1, %6 : i32
    %8 = arith.extui %7 : i1 to i32
    %c0_i32_3 = arith.constant 0 : i32
    %9 = arith.cmpi ne, %8, %c0_i32_3 : i32
    scf.if %9 {
      %c0 = arith.constant 0 : index
      %c0_6 = arith.constant 0 : index
      %c0_7 = arith.constant 0 : index
      %c0_8 = arith.constant 0 : index
      %13 = vector.load %arg4[%c0, %c0_6, %c0_7, %c0_8] : memref<1x1x8x8xbf16, #tpu.memory_space<vmem>>, vector<1x1x8x8xbf16>
      %14 = vector.shape_cast %13 : vector<1x1x8x8xbf16> to vector<8x8xbf16>
      %cst = arith.constant 3.535160e-01 : bf16
      %15 = vector.broadcast %cst : bf16 to vector<8x8xbf16>
      %16 = arith.mulf %14, %15 : vector<8x8xbf16>
      %c0_9 = arith.constant 0 : index
      %c0_10 = arith.constant 0 : index
      %c0_11 = arith.constant 0 : index
      %c0_12 = arith.constant 0 : index
      %17 = vector.load %arg5[%c0_9, %c0_10, %c0_11, %c0_12] : memref<1x1x8x8xbf16, #tpu.memory_space<vmem>>, vector<1x1x8x8xbf16>
      %18 = vector.shape_cast %17 : vector<1x1x8x8xbf16> to vector<8x8xbf16>
      %c0_13 = arith.constant 0 : index
      %c0_14 = arith.constant 0 : index
      %c0_15 = arith.constant 0 : index
      %c0_16 = arith.constant 0 : index
      %19 = vector.load %arg6[%c0_13, %c0_14, %c0_15, %c0_16] : memref<1x1x8x8xbf16, #tpu.memory_space<vmem>>, vector<1x1x8x8xbf16>
      %20 = vector.shape_cast %19 : vector<1x1x8x8xbf16> to vector<8x8xbf16>
      %cst_17 = arith.constant dense<0.000000e+00> : vector<8x8xf32>
      %21 = tpu.matmul %16, %18, %cst_17 {dimension_numbers = #tpu.dot_dimension_numbers<[1], [1], [0], [0], [0, 0, 1, 0], [], []>} : vector<8x8xbf16>, vector<8x8xbf16>, vector<8x8xf32> -> vector<8x8xf32>
      %22 = tpu.iota {dimensions = array<i32: 0>} : vector<8x8xi32>
      %23 = vector.broadcast %0 : i32 to vector<8x8xi32>
      %24 = arith.addi %23, %22 : vector<8x8xi32>
      %25 = tpu.iota {dimensions = array<i32: 1>} : vector<8x8xi32>
      %26 = vector.broadcast %1 : i32 to vector<8x8xi32>
      %27 = arith.addi %26, %25 : vector<8x8xi32>
      %28 = arith.cmpi sle, %27, %24 : vector<8x8xi32>
      %cst_18 = arith.constant -1.000000e+09 : f32
      %29 = vector.broadcast %cst_18 : f32 to vector<8x8xf32>
      %30 = arith.select %28, %21, %29 : vector<8x8xi1>, vector<8x8xf32>
      %c0_19 = arith.constant 0 : index
      %c0_20 = arith.constant 0 : index
      %31 = vector.load %arg8[%c0_19, %c0_20] : memref<8x1xf32, #tpu.memory_space<vmem>>, vector<8x1xf32>
      %cst_21 = arith.constant dense<0xFF800000> : vector<8xf32>
      %32 = vector.multi_reduction <maximumf>, %30, %cst_21 [1] : vector<8x8xf32> to vector<8xf32>
      %33 = vector.shape_cast %32 : vector<8xf32> to vector<8x1xf32>
      %34 = arith.maximumf %31, %33 : vector<8x1xf32>
      %35 = arith.subf %31, %34 : vector<8x1xf32>
      %36 = math.exp %35 : vector<8x1xf32>
      %37 = vector.broadcast %34 : vector<8x1xf32> to vector<8x8xf32>
      %38 = arith.subf %30, %37 : vector<8x8xf32>
      %39 = math.exp %38 : vector<8x8xf32>
      %c0_22 = arith.constant 0 : index
      %c0_23 = arith.constant 0 : index
      %40 = vector.load %arg9[%c0_22, %c0_23] : memref<8x1xf32, #tpu.memory_space<vmem>>, vector<8x1xf32>
      %41 = arith.mulf %36, %40 : vector<8x1xf32>
      %cst_24 = arith.constant dense<0.000000e+00> : vector<8xf32>
      %42 = vector.multi_reduction <add>, %39, %cst_24 [1] : vector<8x8xf32> to vector<8xf32>
      %43 = vector.shape_cast %42 : vector<8xf32> to vector<8x1xf32>
      %44 = arith.addf %41, %43 : vector<8x1xf32>
      %c0_25 = arith.constant 0 : index
      %c0_26 = arith.constant 0 : index
      %45 = vector.load %arg9[%c0_25, %c0_26] : memref<8x1xf32, #tpu.memory_space<vmem>>, vector<8x1xf32>
      tpu.vector_store %arg9[%c0_25, %c0_26], %44 {strides = array<i32>} : memref<8x1xf32, #tpu.memory_space<vmem>>, vector<8x1xf32>,
      %c0_27 = arith.constant 0 : index
      %c0_28 = arith.constant 0 : index
      %46 = vector.load %arg10[%c0_27, %c0_28] : memref<8x8xf32, #tpu.memory_space<vmem>>, vector<8x8xf32>
      %47 = vector.broadcast %36 : vector<8x1xf32> to vector<8x8xf32>
      %48 = arith.mulf %47, %46 : vector<8x8xf32>
      %49 = arith.truncf %39 : vector<8x8xf32> to vector<8x8xbf16>
      %cst_29 = arith.constant dense<0.000000e+00> : vector<8x8xf32>
      %50 = tpu.matmul %49, %20, %cst_29 {dimension_numbers = #tpu.dot_dimension_numbers<[1], [0], [0], [1], [0, 0, 1, 1], [], []>} : vector<8x8xbf16>, vector<8x8xbf16>, vector<8x8xf32> -> vector<8x8xf32>
      %51 = arith.addf %48, %50 : vector<8x8xf32>
      %c0_30 = arith.constant 0 : index
      %c0_31 = arith.constant 0 : index
      %52 = vector.load %arg10[%c0_30, %c0_31] : memref<8x8xf32, #tpu.memory_space<vmem>>, vector<8x8xf32>
      tpu.vector_store %arg10[%c0_30, %c0_31], %51 {strides = array<i32>} : memref<8x8xf32, #tpu.memory_space<vmem>>, vector<8x8xf32>,
      %c0_32 = arith.constant 0 : index
      %c0_33 = arith.constant 0 : index
      %53 = vector.load %arg8[%c0_32, %c0_33] : memref<8x1xf32, #tpu.memory_space<vmem>>, vector<8x1xf32>
      tpu.vector_store %arg8[%c0_32, %c0_33], %34 {strides = array<i32>} : memref<8x1xf32, #tpu.memory_space<vmem>>, vector<8x1xf32>,
    } else {
    }
    %c0_i32_4 = arith.constant 0 : i32
    %10 = arith.cmpi eq, %arg3, %c0_i32_4 : i32
    %11 = arith.extui %10 : i1 to i32
    %c0_i32_5 = arith.constant 0 : i32
    %12 = arith.cmpi ne, %11, %c0_i32_5 : i32
    scf.if %12 {
      %c0 = arith.constant 0 : index
      %c0_6 = arith.constant 0 : index
      %13 = vector.load %arg10[%c0, %c0_6] : memref<8x8xf32, #tpu.memory_space<vmem>>, vector<8x8xf32>
      %c0_7 = arith.constant 0 : index
      %c0_8 = arith.constant 0 : index
      %14 = vector.load %arg9[%c0_7, %c0_8] : memref<8x1xf32, #tpu.memory_space<vmem>>, vector<8x1xf32>
      %15 = tpu.reciprocal %14 {approx = true} : vector<8x1xf32> -> vector<8x1xf32>
      %16 = vector.broadcast %15 : vector<8x1xf32> to vector<8x8xf32>
      %17 = arith.mulf %13, %16 : vector<8x8xf32>
      %18 = arith.truncf %17 : vector<8x8xf32> to vector<8x8xbf16>
      %c0_9 = arith.constant 0 : index
      %c0_10 = arith.constant 0 : index
      %c0_11 = arith.constant 0 : index
      %c0_12 = arith.constant 0 : index
      %19 = vector.load %arg7[%c0_9, %c0_10, %c0_11, %c0_12] : memref<1x1x8x8xbf16, #tpu.memory_space<vmem>>, vector<1x1x8x8xbf16>
      %20 = vector.shape_cast %19 : vector<1x1x8x8xbf16> to vector<8x8xbf16>
      %21 = vector.shape_cast %18 : vector<8x8xbf16> to vector<1x1x8x8xbf16>
      tpu.vector_store %arg7[%c0_9, %c0_10, %c0_11, %c0_12], %21 {strides = array<i32>} : memref<1x1x8x8xbf16, #tpu.memory_space<vmem>>, vector<1x1x8x8xbf16>,
    } else {
    }
    return
  }
  func.func @transform_0(%arg0: i32, %arg1: i32, %arg2: i32, %arg3: i32) -> (i32, i32, i32, i32) {
    %c0_i32 = arith.constant 0 : i32
    %c0_i32_0 = arith.constant 0 : i32
    return %arg0, %arg1, %arg2, %c0_i32 : i32, i32, i32, i32
  }
  func.func @transform_1(%arg0: i32, %arg1: i32, %arg2: i32, %arg3: i32) -> (i32, i32, i32, i32) {
    %c0_i32 = arith.constant 0 : i32
    %c0_i32_0 = arith.constant 0 : i32
    return %arg0, %arg1, %arg3, %c0_i32 : i32, i32, i32, i32
  }
  func.func @transform_2(%arg0: i32, %arg1: i32, %arg2: i32, %arg3: i32) -> (i32, i32, i32, i32) {
    %c0_i32 = arith.constant 0 : i32
    %c0_i32_0 = arith.constant 0 : i32
    return %arg0, %arg1, %arg3, %c0_i32 : i32, i32, i32, i32
  }
  func.func @transform_3(%arg0: i32, %arg1: i32, %arg2: i32, %arg3: i32) -> (i32, i32, i32, i32) {
    %c0_i32 = arith.constant 0 : i32
    %c0_i32_0 = arith.constant 0 : i32
    return %arg0, %arg1, %arg2, %c0_i32 : i32, i32, i32, i32
  }
}

module attributes {stable_mosaic.version = 11 : i64} {
  func.func @_linear_add_ln_kernel(%arg0: i32, %arg1: memref<16x32xbf16, #tpu.memory_space<vmem>>, %arg2: memref<32x32xbf16, #tpu.memory_space<vmem>>, %arg3: memref<1x32xf32, #tpu.memory_space<vmem>>, %arg4: memref<16x32xbf16, #tpu.memory_space<vmem>>, %arg5: memref<1x32xf32, #tpu.memory_space<vmem>>, %arg6: memref<1x32xf32, #tpu.memory_space<vmem>>, %arg7: memref<16x32xbf16, #tpu.memory_space<vmem>>) attributes {dimension_semantics = [#tpu.dimension_semantics<parallel>], iteration_bounds = array<i64: 1>, scalar_prefetch = 0 : i64, scratch_operands = 0 : i64, tpu.core_type = #tpu.core_type<tc>, window_params = [{transform_indices = @transform_0, window_bounds = array<i64: 16, 32>}, {pipeline_mode = #tpu.pipeline_mode<synchronous>, transform_indices = @transform_1, window_bounds = array<i64: 32, 32>}, {pipeline_mode = #tpu.pipeline_mode<synchronous>, transform_indices = @transform_2, window_bounds = array<i64: 1, 32>}, {transform_indices = @transform_3, window_bounds = array<i64: 16, 32>}, {pipeline_mode = #tpu.pipeline_mode<synchronous>, transform_indices = @transform_4, window_bounds = array<i64: 1, 32>}, {pipeline_mode = #tpu.pipeline_mode<synchronous>, transform_indices = @transform_5, window_bounds = array<i64: 1, 32>}, {transform_indices = @transform_6, window_bounds = array<i64: 16, 32>}]} {
    %c0 = arith.constant 0 : index
    %c0_0 = arith.constant 0 : index
    %0 = vector.load %arg1[%c0, %c0_0] : memref<16x32xbf16, #tpu.memory_space<vmem>>, vector<16x32xbf16>
    %c0_1 = arith.constant 0 : index
    %c0_2 = arith.constant 0 : index
    %1 = vector.load %arg2[%c0_1, %c0_2] : memref<32x32xbf16, #tpu.memory_space<vmem>>, vector<32x32xbf16>
    %cst = arith.constant dense<0.000000e+00> : vector<16x32xf32>
    %2 = tpu.matmul %0, %1, %cst {dimension_numbers = #tpu.dot_dimension_numbers<[1], [0], [0], [1], [0, 0, 1, 1], [], []>} : vector<16x32xbf16>, vector<32x32xbf16>, vector<16x32xf32> -> vector<16x32xf32>
    %c0_3 = arith.constant 0 : index
    %c0_4 = arith.constant 0 : index
    %3 = vector.load %arg3[%c0_3, %c0_4] : memref<1x32xf32, #tpu.memory_space<vmem>>, vector<1x32xf32>
    %4 = vector.broadcast %3 : vector<1x32xf32> to vector<16x32xf32>
    %5 = arith.addf %2, %4 : vector<16x32xf32>
    %c0_5 = arith.constant 0 : index
    %c0_6 = arith.constant 0 : index
    %6 = vector.load %arg4[%c0_5, %c0_6] : memref<16x32xbf16, #tpu.memory_space<vmem>>, vector<16x32xbf16>
    %7 = arith.extf %6 : vector<16x32xbf16> to vector<16x32xf32>
    %8 = arith.addf %5, %7 : vector<16x32xf32>
    %cst_7 = arith.constant dense<0.000000e+00> : vector<16xf32>
    %9 = vector.multi_reduction <add>, %8, %cst_7 [1] : vector<16x32xf32> to vector<16xf32>
    %10 = vector.shape_cast %9 : vector<16xf32> to vector<16x1xf32>
    %cst_8 = arith.constant 3.200000e+01 : f32
    %11 = vector.broadcast %cst_8 : f32 to vector<16x1xf32>
    %12 = arith.divf %10, %11 : vector<16x1xf32>
    %13 = vector.broadcast %12 : vector<16x1xf32> to vector<16x32xf32>
    %14 = arith.subf %8, %13 : vector<16x32xf32>
    %15 = arith.mulf %14, %14 : vector<16x32xf32>
    %cst_9 = arith.constant dense<0.000000e+00> : vector<16xf32>
    %16 = vector.multi_reduction <add>, %15, %cst_9 [1] : vector<16x32xf32> to vector<16xf32>
    %17 = vector.shape_cast %16 : vector<16xf32> to vector<16x1xf32>
    %cst_10 = arith.constant 3.200000e+01 : f32
    %18 = vector.broadcast %cst_10 : f32 to vector<16x1xf32>
    %19 = arith.divf %17, %18 : vector<16x1xf32>
    %20 = vector.broadcast %12 : vector<16x1xf32> to vector<16x32xf32>
    %21 = arith.subf %8, %20 : vector<16x32xf32>
    %cst_11 = arith.constant 9.99999974E-6 : f32
    %22 = vector.broadcast %cst_11 : f32 to vector<16x1xf32>
    %23 = arith.addf %19, %22 : vector<16x1xf32>
    %24 = math.rsqrt %23 : vector<16x1xf32>
    %25 = vector.broadcast %24 : vector<16x1xf32> to vector<16x32xf32>
    %26 = arith.mulf %21, %25 : vector<16x32xf32>
    %c0_12 = arith.constant 0 : index
    %c0_13 = arith.constant 0 : index
    %27 = vector.load %arg5[%c0_12, %c0_13] : memref<1x32xf32, #tpu.memory_space<vmem>>, vector<1x32xf32>
    %28 = vector.broadcast %27 : vector<1x32xf32> to vector<16x32xf32>
    %29 = arith.mulf %26, %28 : vector<16x32xf32>
    %c0_14 = arith.constant 0 : index
    %c0_15 = arith.constant 0 : index
    %30 = vector.load %arg6[%c0_14, %c0_15] : memref<1x32xf32, #tpu.memory_space<vmem>>, vector<1x32xf32>
    %31 = vector.broadcast %30 : vector<1x32xf32> to vector<16x32xf32>
    %32 = arith.addf %29, %31 : vector<16x32xf32>
    %33 = arith.truncf %32 : vector<16x32xf32> to vector<16x32xbf16>
    %c0_16 = arith.constant 0 : index
    %c0_17 = arith.constant 0 : index
    %34 = vector.load %arg7[%c0_16, %c0_17] : memref<16x32xbf16, #tpu.memory_space<vmem>>, vector<16x32xbf16>
    tpu.vector_store %arg7[%c0_16, %c0_17], %33 {strides = array<i32>} : memref<16x32xbf16, #tpu.memory_space<vmem>>, vector<16x32xbf16>,
    return
  }
  func.func @transform_0(%arg0: i32) -> (i32, i32) {
    %c0_i32 = arith.constant 0 : i32
    %c0_i32_0 = arith.constant 0 : i32
    return %arg0, %c0_i32 : i32, i32
  }
  func.func @transform_1(%arg0: i32) -> (i32, i32) {
    %c0_i32 = arith.constant 0 : i32
    %c0_i32_0 = arith.constant 0 : i32
    %c0_i32_1 = arith.constant 0 : i32
    return %c0_i32, %c0_i32_0 : i32, i32
  }
  func.func @transform_2(%arg0: i32) -> (i32, i32) {
    %c0_i32 = arith.constant 0 : i32
    %c0_i32_0 = arith.constant 0 : i32
    %c0_i32_1 = arith.constant 0 : i32
    return %c0_i32, %c0_i32_0 : i32, i32
  }
  func.func @transform_3(%arg0: i32) -> (i32, i32) {
    %c0_i32 = arith.constant 0 : i32
    %c0_i32_0 = arith.constant 0 : i32
    return %arg0, %c0_i32 : i32, i32
  }
  func.func @transform_4(%arg0: i32) -> (i32, i32) {
    %c0_i32 = arith.constant 0 : i32
    %c0_i32_0 = arith.constant 0 : i32
    %c0_i32_1 = arith.constant 0 : i32
    return %c0_i32, %c0_i32_0 : i32, i32
  }
  func.func @transform_5(%arg0: i32) -> (i32, i32) {
    %c0_i32 = arith.constant 0 : i32
    %c0_i32_0 = arith.constant 0 : i32
    %c0_i32_1 = arith.constant 0 : i32
    return %c0_i32, %c0_i32_0 : i32, i32
  }
  func.func @transform_6(%arg0: i32) -> (i32, i32) {
    %c0_i32 = arith.constant 0 : i32
    %c0_i32_0 = arith.constant 0 : i32
    return %arg0, %c0_i32 : i32, i32
  }
}

module attributes {stable_mosaic.version = 11 : i64} {
  func.func @_linear_kernel(%arg0: i32, %arg1: i32, %arg2: i32, %arg3: memref<16x32xbf16, #tpu.memory_space<vmem>>, %arg4: memref<32x32xbf16, #tpu.memory_space<vmem>>, %arg5: memref<1x32xf32, #tpu.memory_space<vmem>>, %arg6: memref<16x32xbf16, #tpu.memory_space<vmem>>, %arg7: memref<16x32xf32, #tpu.memory_space<vmem>>) attributes {dimension_semantics = [#tpu.dimension_semantics<parallel>, #tpu.dimension_semantics<parallel>, #tpu.dimension_semantics<arbitrary>], iteration_bounds = array<i64: 1, 1, 1>, scalar_prefetch = 0 : i64, scratch_operands = 1 : i64, tpu.core_type = #tpu.core_type<tc>, window_params = [{transform_indices = @transform_0, window_bounds = array<i64: 16, 32>}, {transform_indices = @transform_1, window_bounds = array<i64: 32, 32>}, {transform_indices = @transform_2, window_bounds = array<i64: 1, 32>}, {transform_indices = @transform_3, window_bounds = array<i64: 16, 32>}]} {
    %c0_i32 = arith.constant 0 : i32
    %0 = arith.cmpi eq, %arg2, %c0_i32 : i32
    %1 = arith.extui %0 : i1 to i32
    %c0_i32_0 = arith.constant 0 : i32
    %2 = arith.cmpi ne, %1, %c0_i32_0 : i32
    scf.if %2 {
      %cst_10 = arith.constant 0.000000e+00 : f32
      %12 = vector.broadcast %cst_10 : f32 to vector<16x32xf32>
      %c0_11 = arith.constant 0 : index
      %c0_12 = arith.constant 0 : index
      %13 = vector.load %arg7[%c0_11, %c0_12] : memref<16x32xf32, #tpu.memory_space<vmem>>, vector<16x32xf32>
      tpu.vector_store %arg7[%c0_11, %c0_12], %12 {strides = array<i32>} : memref<16x32xf32, #tpu.memory_space<vmem>>, vector<16x32xf32>,
    } else {
    }
    %c0 = arith.constant 0 : index
    %c0_1 = arith.constant 0 : index
    %3 = vector.load %arg7[%c0, %c0_1] : memref<16x32xf32, #tpu.memory_space<vmem>>, vector<16x32xf32>
    %c0_2 = arith.constant 0 : index
    %c0_3 = arith.constant 0 : index
    %4 = vector.load %arg3[%c0_2, %c0_3] : memref<16x32xbf16, #tpu.memory_space<vmem>>, vector<16x32xbf16>
    %c0_4 = arith.constant 0 : index
    %c0_5 = arith.constant 0 : index
    %5 = vector.load %arg4[%c0_4, %c0_5] : memref<32x32xbf16, #tpu.memory_space<vmem>>, vector<32x32xbf16>
    %cst = arith.constant dense<0.000000e+00> : vector<16x32xf32>
    %6 = tpu.matmul %4, %5, %cst {dimension_numbers = #tpu.dot_dimension_numbers<[1], [0], [0], [1], [0, 0, 1, 1], [], []>} : vector<16x32xbf16>, vector<32x32xbf16>, vector<16x32xf32> -> vector<16x32xf32>
    %7 = arith.addf %3, %6 : vector<16x32xf32>
    %c0_6 = arith.constant 0 : index
    %c0_7 = arith.constant 0 : index
    %8 = vector.load %arg7[%c0_6, %c0_7] : memref<16x32xf32, #tpu.memory_space<vmem>>, vector<16x32xf32>
    tpu.vector_store %arg7[%c0_6, %c0_7], %7 {strides = array<i32>} : memref<16x32xf32, #tpu.memory_space<vmem>>, vector<16x32xf32>,
    %c0_i32_8 = arith.constant 0 : i32
    %9 = arith.cmpi eq, %arg2, %c0_i32_8 : i32
    %10 = arith.extui %9 : i1 to i32
    %c0_i32_9 = arith.constant 0 : i32
    %11 = arith.cmpi ne, %10, %c0_i32_9 : i32
    scf.if %11 {
      %c0_10 = arith.constant 0 : index
      %c0_11 = arith.constant 0 : index
      %12 = vector.load %arg7[%c0_10, %c0_11] : memref<16x32xf32, #tpu.memory_space<vmem>>, vector<16x32xf32>
      %c0_12 = arith.constant 0 : index
      %c0_13 = arith.constant 0 : index
      %13 = vector.load %arg5[%c0_12, %c0_13] : memref<1x32xf32, #tpu.memory_space<vmem>>, vector<1x32xf32>
      %14 = vector.broadcast %13 : vector<1x32xf32> to vector<16x32xf32>
      %15 = arith.addf %12, %14 : vector<16x32xf32>
      %16 = arith.truncf %15 : vector<16x32xf32> to vector<16x32xbf16>
      %c0_14 = arith.constant 0 : index
      %c0_15 = arith.constant 0 : index
      %17 = vector.load %arg6[%c0_14, %c0_15] : memref<16x32xbf16, #tpu.memory_space<vmem>>, vector<16x32xbf16>
      tpu.vector_store %arg6[%c0_14, %c0_15], %16 {strides = array<i32>} : memref<16x32xbf16, #tpu.memory_space<vmem>>, vector<16x32xbf16>,
    } else {
    }
    return
  }
  func.func @transform_0(%arg0: i32, %arg1: i32, %arg2: i32) -> (i32, i32) {
    %c0_i32 = arith.constant 0 : i32
    return %arg0, %arg2 : i32, i32
  }
  func.func @transform_1(%arg0: i32, %arg1: i32, %arg2: i32) -> (i32, i32) {
    %c0_i32 = arith.constant 0 : i32
    return %arg2, %arg1 : i32, i32
  }
  func.func @transform_2(%arg0: i32, %arg1: i32, %arg2: i32) -> (i32, i32) {
    %c0_i32 = arith.constant 0 : i32
    %c0_i32_0 = arith.constant 0 : i32
    return %c0_i32, %arg1 : i32, i32
  }
  func.func @transform_3(%arg0: i32, %arg1: i32, %arg2: i32) -> (i32, i32) {
    %c0_i32 = arith.constant 0 : i32
    return %arg0, %arg1 : i32, i32
  }
}

module attributes {stable_mosaic.version = 11 : i64} {
  func.func @_ffn_add_ln_kernel(%arg0: i32, %arg1: memref<16x32xbf16, #tpu.memory_space<vmem>>, %arg2: memref<32x64xbf16, #tpu.memory_space<vmem>>, %arg3: memref<1x64xf32, #tpu.memory_space<vmem>>, %arg4: memref<64x32xbf16, #tpu.memory_space<vmem>>, %arg5: memref<1x32xf32, #tpu.memory_space<vmem>>, %arg6: memref<1x32xf32, #tpu.memory_space<vmem>>, %arg7: memref<1x32xf32, #tpu.memory_space<vmem>>, %arg8: memref<16x32xbf16, #tpu.memory_space<vmem>>) attributes {dimension_semantics = [#tpu.dimension_semantics<parallel>], iteration_bounds = array<i64: 1>, scalar_prefetch = 0 : i64, scratch_operands = 0 : i64, tpu.core_type = #tpu.core_type<tc>, window_params = [{transform_indices = @transform_0, window_bounds = array<i64: 16, 32>}, {pipeline_mode = #tpu.pipeline_mode<synchronous>, transform_indices = @transform_1, window_bounds = array<i64: 32, 64>}, {pipeline_mode = #tpu.pipeline_mode<synchronous>, transform_indices = @transform_2, window_bounds = array<i64: 1, 64>}, {pipeline_mode = #tpu.pipeline_mode<synchronous>, transform_indices = @transform_3, window_bounds = array<i64: 64, 32>}, {pipeline_mode = #tpu.pipeline_mode<synchronous>, transform_indices = @transform_4, window_bounds = array<i64: 1, 32>}, {pipeline_mode = #tpu.pipeline_mode<synchronous>, transform_indices = @transform_5, window_bounds = array<i64: 1, 32>}, {pipeline_mode = #tpu.pipeline_mode<synchronous>, transform_indices = @transform_6, window_bounds = array<i64: 1, 32>}, {transform_indices = @transform_7, window_bounds = array<i64: 16, 32>}]} {
    %c0 = arith.constant 0 : index
    %c0_0 = arith.constant 0 : index
    %0 = vector.load %arg1[%c0, %c0_0] : memref<16x32xbf16, #tpu.memory_space<vmem>>, vector<16x32xbf16>
    %c0_1 = arith.constant 0 : index
    %c0_2 = arith.constant 0 : index
    %1 = vector.load %arg2[%c0_1, %c0_2] : memref<32x64xbf16, #tpu.memory_space<vmem>>, vector<32x64xbf16>
    %cst = arith.constant dense<0.000000e+00> : vector<16x64xf32>
    %2 = tpu.matmul %0, %1, %cst {dimension_numbers = #tpu.dot_dimension_numbers<[1], [0], [0], [1], [0, 0, 1, 1], [], []>} : vector<16x32xbf16>, vector<32x64xbf16>, vector<16x64xf32> -> vector<16x64xf32>
    %c0_3 = arith.constant 0 : index
    %c0_4 = arith.constant 0 : index
    %3 = vector.load %arg3[%c0_3, %c0_4] : memref<1x64xf32, #tpu.memory_space<vmem>>, vector<1x64xf32>
    %4 = vector.broadcast %3 : vector<1x64xf32> to vector<16x64xf32>
    %5 = arith.addf %2, %4 : vector<16x64xf32>
    %cst_5 = arith.constant 0.000000e+00 : f32
    %6 = vector.broadcast %cst_5 : f32 to vector<16x64xf32>
    %7 = arith.maximumf %5, %6 : vector<16x64xf32>
    %8 = arith.truncf %7 : vector<16x64xf32> to vector<16x64xbf16>
    %c0_6 = arith.constant 0 : index
    %c0_7 = arith.constant 0 : index
    %9 = vector.load %arg4[%c0_6, %c0_7] : memref<64x32xbf16, #tpu.memory_space<vmem>>, vector<64x32xbf16>
    %cst_8 = arith.constant dense<0.000000e+00> : vector<16x32xf32>
    %10 = tpu.matmul %8, %9, %cst_8 {dimension_numbers = #tpu.dot_dimension_numbers<[1], [0], [0], [1], [0, 0, 1, 1], [], []>} : vector<16x64xbf16>, vector<64x32xbf16>, vector<16x32xf32> -> vector<16x32xf32>
    %c0_9 = arith.constant 0 : index
    %c0_10 = arith.constant 0 : index
    %11 = vector.load %arg5[%c0_9, %c0_10] : memref<1x32xf32, #tpu.memory_space<vmem>>, vector<1x32xf32>
    %12 = vector.broadcast %11 : vector<1x32xf32> to vector<16x32xf32>
    %13 = arith.addf %10, %12 : vector<16x32xf32>
    %14 = arith.extf %0 : vector<16x32xbf16> to vector<16x32xf32>
    %15 = arith.addf %13, %14 : vector<16x32xf32>
    %cst_11 = arith.constant dense<0.000000e+00> : vector<16xf32>
    %16 = vector.multi_reduction <add>, %15, %cst_11 [1] : vector<16x32xf32> to vector<16xf32>
    %17 = vector.shape_cast %16 : vector<16xf32> to vector<16x1xf32>
    %cst_12 = arith.constant 3.200000e+01 : f32
    %18 = vector.broadcast %cst_12 : f32 to vector<16x1xf32>
    %19 = arith.divf %17, %18 : vector<16x1xf32>
    %20 = vector.broadcast %19 : vector<16x1xf32> to vector<16x32xf32>
    %21 = arith.subf %15, %20 : vector<16x32xf32>
    %22 = arith.mulf %21, %21 : vector<16x32xf32>
    %cst_13 = arith.constant dense<0.000000e+00> : vector<16xf32>
    %23 = vector.multi_reduction <add>, %22, %cst_13 [1] : vector<16x32xf32> to vector<16xf32>
    %24 = vector.shape_cast %23 : vector<16xf32> to vector<16x1xf32>
    %cst_14 = arith.constant 3.200000e+01 : f32
    %25 = vector.broadcast %cst_14 : f32 to vector<16x1xf32>
    %26 = arith.divf %24, %25 : vector<16x1xf32>
    %27 = vector.broadcast %19 : vector<16x1xf32> to vector<16x32xf32>
    %28 = arith.subf %15, %27 : vector<16x32xf32>
    %cst_15 = arith.constant 9.99999974E-6 : f32
    %29 = vector.broadcast %cst_15 : f32 to vector<16x1xf32>
    %30 = arith.addf %26, %29 : vector<16x1xf32>
    %31 = math.rsqrt %30 : vector<16x1xf32>
    %32 = vector.broadcast %31 : vector<16x1xf32> to vector<16x32xf32>
    %33 = arith.mulf %28, %32 : vector<16x32xf32>
    %c0_16 = arith.constant 0 : index
    %c0_17 = arith.constant 0 : index
    %34 = vector.load %arg6[%c0_16, %c0_17] : memref<1x32xf32, #tpu.memory_space<vmem>>, vector<1x32xf32>
    %35 = vector.broadcast %34 : vector<1x32xf32> to vector<16x32xf32>
    %36 = arith.mulf %33, %35 : vector<16x32xf32>
    %c0_18 = arith.constant 0 : index
    %c0_19 = arith.constant 0 : index
    %37 = vector.load %arg7[%c0_18, %c0_19] : memref<1x32xf32, #tpu.memory_space<vmem>>, vector<1x32xf32>
    %38 = vector.broadcast %37 : vector<1x32xf32> to vector<16x32xf32>
    %39 = arith.addf %36, %38 : vector<16x32xf32>
    %40 = arith.truncf %39 : vector<16x32xf32> to vector<16x32xbf16>
    %c0_20 = arith.constant 0 : index
    %c0_21 = arith.constant 0 : index
    %41 = vector.load %arg8[%c0_20, %c0_21] : memref<16x32xbf16, #tpu.memory_space<vmem>>, vector<16x32xbf16>
    tpu.vector_store %arg8[%c0_20, %c0_21], %40 {strides = array<i32>} : memref<16x32xbf16, #tpu.memory_space<vmem>>, vector<16x32xbf16>,
    return
  }
  func.func @transform_0(%arg0: i32) -> (i32, i32) {
    %c0_i32 = arith.constant 0 : i32
    %c0_i32_0 = arith.constant 0 : i32
    return %arg0, %c0_i32 : i32, i32
  }
  func.func @transform_1(%arg0: i32) -> (i32, i32) {
    %c0_i32 = arith.constant 0 : i32
    %c0_i32_0 = arith.constant 0 : i32
    %c0_i32_1 = arith.constant 0 : i32
    return %c0_i32, %c0_i32_0 : i32, i32
  }
  func.func @transform_2(%arg0: i32) -> (i32, i32) {
    %c0_i32 = arith.constant 0 : i32
    %c0_i32_0 = arith.constant 0 : i32
    %c0_i32_1 = arith.constant 0 : i32
    return %c0_i32, %c0_i32_0 : i32, i32
  }
  func.func @transform_3(%arg0: i32) -> (i32, i32) {
    %c0_i32 = arith.constant 0 : i32
    %c0_i32_0 = arith.constant 0 : i32
    %c0_i32_1 = arith.constant 0 : i32
    return %c0_i32, %c0_i32_0 : i32, i32
  }
  func.func @transform_4(%arg0: i32) -> (i32, i32) {
    %c0_i32 = arith.constant 0 : i32
    %c0_i32_0 = arith.constant 0 : i32
    %c0_i32_1 = arith.constant 0 : i32
    return %c0_i32, %c0_i32_0 : i32, i32
  }
  func.func @transform_5(%arg0: i32) -> (i32, i32) {
    %c0_i32 = arith.constant 0 : i32
    %c0_i32_0 = arith.constant 0 : i32
    %c0_i32_1 = arith.constant 0 : i32
    return %c0_i32, %c0_i32_0 : i32, i32
  }
  func.func @transform_6(%arg0: i32) -> (i32, i32) {
    %c0_i32 = arith.constant 0 : i32
    %c0_i32_0 = arith.constant 0 : i32
    %c0_i32_1 = arith.constant 0 : i32
    return %c0_i32, %c0_i32_0 : i32, i32
  }
  func.func @transform_7(%arg0: i32) -> (i32, i32) {
    %c0_i32 = arith.constant 0 : i32
    %c0_i32_0 = arith.constant 0 : i32
    return %arg0, %c0_i32 : i32, i32
  }
}

module attributes {stable_mosaic.version = 11 : i64} {
  func.func @_flash_attn_kernel(%arg0: i32, %arg1: i32, %arg2: i32, %arg3: i32, %arg4: memref<1x1x8x8xbf16, #tpu.memory_space<vmem>>, %arg5: memref<1x1x8x8xbf16, #tpu.memory_space<vmem>>, %arg6: memref<1x1x8x8xbf16, #tpu.memory_space<vmem>>, %arg7: memref<1x1x8x8xbf16, #tpu.memory_space<vmem>>, %arg8: memref<8x1xf32, #tpu.memory_space<vmem>>, %arg9: memref<8x1xf32, #tpu.memory_space<vmem>>, %arg10: memref<8x8xf32, #tpu.memory_space<vmem>>) attributes {dimension_semantics = [#tpu.dimension_semantics<parallel>, #tpu.dimension_semantics<parallel>, #tpu.dimension_semantics<parallel>, #tpu.dimension_semantics<arbitrary>], iteration_bounds = array<i64: 2, 4, 1, 1>, scalar_prefetch = 0 : i64, scratch_operands = 3 : i64, tpu.core_type = #tpu.core_type<tc>, window_params = [{transform_indices = @transform_0, window_bounds = array<i64: 1, 1, 8, 8>}, {transform_indices = @transform_1, window_bounds = array<i64: 1, 1, 8, 8>}, {transform_indices = @transform_2, window_bounds = array<i64: 1, 1, 8, 8>}, {transform_indices = @transform_3, window_bounds = array<i64: 1, 1, 8, 8>}]} {
    %c0_i32 = arith.constant 0 : i32
    %0 = arith.cmpi eq, %arg3, %c0_i32 : i32
    %1 = arith.extui %0 : i1 to i32
    %c0_i32_0 = arith.constant 0 : i32
    %2 = arith.cmpi ne, %1, %c0_i32_0 : i32
    scf.if %2 {
      %cst_30 = arith.constant -1.000000e+30 : f32
      %38 = vector.broadcast %cst_30 : f32 to vector<8x1xf32>
      %c0_31 = arith.constant 0 : index
      %c0_32 = arith.constant 0 : index
      %39 = vector.load %arg8[%c0_31, %c0_32] : memref<8x1xf32, #tpu.memory_space<vmem>>, vector<8x1xf32>
      tpu.vector_store %arg8[%c0_31, %c0_32], %38 {strides = array<i32>} : memref<8x1xf32, #tpu.memory_space<vmem>>, vector<8x1xf32>,
      %cst_33 = arith.constant 0.000000e+00 : f32
      %40 = vector.broadcast %cst_33 : f32 to vector<8x1xf32>
      %c0_34 = arith.constant 0 : index
      %c0_35 = arith.constant 0 : index
      %41 = vector.load %arg9[%c0_34, %c0_35] : memref<8x1xf32, #tpu.memory_space<vmem>>, vector<8x1xf32>
      tpu.vector_store %arg9[%c0_34, %c0_35], %40 {strides = array<i32>} : memref<8x1xf32, #tpu.memory_space<vmem>>, vector<8x1xf32>,
      %cst_36 = arith.constant 0.000000e+00 : f32
      %42 = vector.broadcast %cst_36 : f32 to vector<8x8xf32>
      %c0_37 = arith.constant 0 : index
      %c0_38 = arith.constant 0 : index
      %43 = vector.load %arg10[%c0_37, %c0_38] : memref<8x8xf32, #tpu.memory_space<vmem>>, vector<8x8xf32>
      tpu.vector_store %arg10[%c0_37, %c0_38], %42 {strides = array<i32>} : memref<8x8xf32, #tpu.memory_space<vmem>>, vector<8x8xf32>,
    } else {
    }
    %c0 = arith.constant 0 : index
    %c0_1 = arith.constant 0 : index
    %c0_2 = arith.constant 0 : index
    %c0_3 = arith.constant 0 : index
    %3 = vector.load %arg4[%c0, %c0_1, %c0_2, %c0_3] : memref<1x1x8x8xbf16, #tpu.memory_space<vmem>>, vector<1x1x8x8xbf16>
    %4 = vector.shape_cast %3 : vector<1x1x8x8xbf16> to vector<8x8xbf16>
    %cst = arith.constant 3.535160e-01 : bf16
    %5 = vector.broadcast %cst : bf16 to vector<8x8xbf16>
    %6 = arith.mulf %4, %5 : vector<8x8xbf16>
    %c0_4 = arith.constant 0 : index
    %c0_5 = arith.constant 0 : index
    %c0_6 = arith.constant 0 : index
    %c0_7 = arith.constant 0 : index
    %7 = vector.load %arg5[%c0_4, %c0_5, %c0_6, %c0_7] : memref<1x1x8x8xbf16, #tpu.memory_space<vmem>>, vector<1x1x8x8xbf16>
    %8 = vector.shape_cast %7 : vector<1x1x8x8xbf16> to vector<8x8xbf16>
    %c0_8 = arith.constant 0 : index
    %c0_9 = arith.constant 0 : index
    %c0_10 = arith.constant 0 : index
    %c0_11 = arith.constant 0 : index
    %9 = vector.load %arg6[%c0_8, %c0_9, %c0_10, %c0_11] : memref<1x1x8x8xbf16, #tpu.memory_space<vmem>>, vector<1x1x8x8xbf16>
    %10 = vector.shape_cast %9 : vector<1x1x8x8xbf16> to vector<8x8xbf16>
    %cst_12 = arith.constant dense<0.000000e+00> : vector<8x8xf32>
    %11 = tpu.matmul %6, %8, %cst_12 {dimension_numbers = #tpu.dot_dimension_numbers<[1], [1], [0], [0], [0, 0, 1, 0], [], []>} : vector<8x8xbf16>, vector<8x8xbf16>, vector<8x8xf32> -> vector<8x8xf32>
    %c0_13 = arith.constant 0 : index
    %c0_14 = arith.constant 0 : index
    %12 = vector.load %arg8[%c0_13, %c0_14] : memref<8x1xf32, #tpu.memory_space<vmem>>, vector<8x1xf32>
    %cst_15 = arith.constant dense<0xFF800000> : vector<8xf32>
    %13 = vector.multi_reduction <maximumf>, %11, %cst_15 [1] : vector<8x8xf32> to vector<8xf32>
    %14 = vector.shape_cast %13 : vector<8xf32> to vector<8x1xf32>
    %15 = arith.maximumf %12, %14 : vector<8x1xf32>
    %16 = arith.subf %12, %15 : vector<8x1xf32>
    %17 = math.exp %16 : vector<8x1xf32>
    %18 = vector.broadcast %15 : vector<8x1xf32> to vector<8x8xf32>
    %19 = arith.subf %11, %18 : vector<8x8xf32>
    %20 = math.exp %19 : vector<8x8xf32>
    %c0_16 = arith.constant 0 : index
    %c0_17 = arith.constant 0 : index
    %21 = vector.load %arg9[%c0_16, %c0_17] : memref<8x1xf32, #tpu.memory_space<vmem>>, vector<8x1xf32>
    %22 = arith.mulf %17, %21 : vector<8x1xf32>
    %cst_18 = arith.constant dense<0.000000e+00> : vector<8xf32>
    %23 = vector.multi_reduction <add>, %20, %cst_18 [1] : vector<8x8xf32> to vector<8xf32>
    %24 = vector.shape_cast %23 : vector<8xf32> to vector<8x1xf32>
    %25 = arith.addf %22, %24 : vector<8x1xf32>
    %c0_19 = arith.constant 0 : index
    %c0_20 = arith.constant 0 : index
    %26 = vector.load %arg9[%c0_19, %c0_20] : memref<8x1xf32, #tpu.memory_space<vmem>>, vector<8x1xf32>
    tpu.vector_store %arg9[%c0_19, %c0_20], %25 {strides = array<i32>} : memref<8x1xf32, #tpu.memory_space<vmem>>, vector<8x1xf32>,
    %c0_21 = arith.constant 0 : index
    %c0_22 = arith.constant 0 : index
    %27 = vector.load %arg10[%c0_21, %c0_22] : memref<8x8xf32, #tpu.memory_space<vmem>>, vector<8x8xf32>
    %28 = vector.broadcast %17 : vector<8x1xf32> to vector<8x8xf32>
    %29 = arith.mulf %28, %27 : vector<8x8xf32>
    %30 = arith.truncf %20 : vector<8x8xf32> to vector<8x8xbf16>
    %cst_23 = arith.constant dense<0.000000e+00> : vector<8x8xf32>
    %31 = tpu.matmul %30, %10, %cst_23 {dimension_numbers = #tpu.dot_dimension_numbers<[1], [0], [0], [1], [0, 0, 1, 1], [], []>} : vector<8x8xbf16>, vector<8x8xbf16>, vector<8x8xf32> -> vector<8x8xf32>
    %32 = arith.addf %29, %31 : vector<8x8xf32>
    %c0_24 = arith.constant 0 : index
    %c0_25 = arith.constant 0 : index
    %33 = vector.load %arg10[%c0_24, %c0_25] : memref<8x8xf32, #tpu.memory_space<vmem>>, vector<8x8xf32>
    tpu.vector_store %arg10[%c0_24, %c0_25], %32 {strides = array<i32>} : memref<8x8xf32, #tpu.memory_space<vmem>>, vector<8x8xf32>,
    %c0_26 = arith.constant 0 : index
    %c0_27 = arith.constant 0 : index
    %34 = vector.load %arg8[%c0_26, %c0_27] : memref<8x1xf32, #tpu.memory_space<vmem>>, vector<8x1xf32>
    tpu.vector_store %arg8[%c0_26, %c0_27], %15 {strides = array<i32>} : memref<8x1xf32, #tpu.memory_space<vmem>>, vector<8x1xf32>,
    %c0_i32_28 = arith.constant 0 : i32
    %35 = arith.cmpi eq, %arg3, %c0_i32_28 : i32
    %36 = arith.extui %35 : i1 to i32
    %c0_i32_29 = arith.constant 0 : i32
    %37 = arith.cmpi ne, %36, %c0_i32_29 : i32
    scf.if %37 {
      %c0_30 = arith.constant 0 : index
      %c0_31 = arith.constant 0 : index
      %38 = vector.load %arg10[%c0_30, %c0_31] : memref<8x8xf32, #tpu.memory_space<vmem>>, vector<8x8xf32>
      %c0_32 = arith.constant 0 : index
      %c0_33 = arith.constant 0 : index
      %39 = vector.load %arg9[%c0_32, %c0_33] : memref<8x1xf32, #tpu.memory_space<vmem>>, vector<8x1xf32>
      %40 = tpu.reciprocal %39 {approx = true} : vector<8x1xf32> -> vector<8x1xf32>
      %41 = vector.broadcast %40 : vector<8x1xf32> to vector<8x8xf32>
      %42 = arith.mulf %38, %41 : vector<8x8xf32>
      %43 = arith.truncf %42 : vector<8x8xf32> to vector<8x8xbf16>
      %c0_34 = arith.constant 0 : index
      %c0_35 = arith.constant 0 : index
      %c0_36 = arith.constant 0 : index
      %c0_37 = arith.constant 0 : index
      %44 = vector.load %arg7[%c0_34, %c0_35, %c0_36, %c0_37] : memref<1x1x8x8xbf16, #tpu.memory_space<vmem>>, vector<1x1x8x8xbf16>
      %45 = vector.shape_cast %44 : vector<1x1x8x8xbf16> to vector<8x8xbf16>
      %46 = vector.shape_cast %43 : vector<8x8xbf16> to vector<1x1x8x8xbf16>
      tpu.vector_store %arg7[%c0_34, %c0_35, %c0_36, %c0_37], %46 {strides = array<i32>} : memref<1x1x8x8xbf16, #tpu.memory_space<vmem>>, vector<1x1x8x8xbf16>,
    } else {
    }
    return
  }
  func.func @transform_0(%arg0: i32, %arg1: i32, %arg2: i32, %arg3: i32) -> (i32, i32, i32, i32) {
    %c0_i32 = arith.constant 0 : i32
    %c0_i32_0 = arith.constant 0 : i32
    return %arg0, %arg1, %arg2, %c0_i32 : i32, i32, i32, i32
  }
  func.func @transform_1(%arg0: i32, %arg1: i32, %arg2: i32, %arg3: i32) -> (i32, i32, i32, i32) {
    %c0_i32 = arith.constant 0 : i32
    %c0_i32_0 = arith.constant 0 : i32
    return %arg0, %arg1, %arg3, %c0_i32 : i32, i32, i32, i32
  }
  func.func @transform_2(%arg0: i32, %arg1: i32, %arg2: i32, %arg3: i32) -> (i32, i32, i32, i32) {
    %c0_i32 = arith.constant 0 : i32
    %c0_i32_0 = arith.constant 0 : i32
    return %arg0, %arg1, %arg3, %c0_i32 : i32, i32, i32, i32
  }
  func.func @transform_3(%arg0: i32, %arg1: i32, %arg2: i32, %arg3: i32) -> (i32, i32, i32, i32) {
    %c0_i32 = arith.constant 0 : i32
    %c0_i32_0 = arith.constant 0 : i32
    return %arg0, %arg1, %arg2, %c0_i32 : i32, i32, i32, i32
  }
}

module attributes {stable_mosaic.version = 11 : i64} {
  func.func @_linear_kernel(%arg0: i32, %arg1: i32, %arg2: i32, %arg3: memref<16x32xbf16, #tpu.memory_space<vmem>>, %arg4: memref<32x64xbf16, #tpu.memory_space<vmem>>, %arg5: memref<1x64xf32, #tpu.memory_space<vmem>>, %arg6: memref<16x64xbf16, #tpu.memory_space<vmem>>, %arg7: memref<16x64xf32, #tpu.memory_space<vmem>>) attributes {dimension_semantics = [#tpu.dimension_semantics<parallel>, #tpu.dimension_semantics<parallel>, #tpu.dimension_semantics<arbitrary>], iteration_bounds = array<i64: 1, 1, 1>, scalar_prefetch = 0 : i64, scratch_operands = 1 : i64, tpu.core_type = #tpu.core_type<tc>, window_params = [{transform_indices = @transform_0, window_bounds = array<i64: 16, 32>}, {transform_indices = @transform_1, window_bounds = array<i64: 32, 64>}, {transform_indices = @transform_2, window_bounds = array<i64: 1, 64>}, {transform_indices = @transform_3, window_bounds = array<i64: 16, 64>}]} {
    %c0_i32 = arith.constant 0 : i32
    %0 = arith.cmpi eq, %arg2, %c0_i32 : i32
    %1 = arith.extui %0 : i1 to i32
    %c0_i32_0 = arith.constant 0 : i32
    %2 = arith.cmpi ne, %1, %c0_i32_0 : i32
    scf.if %2 {
      %cst_10 = arith.constant 0.000000e+00 : f32
      %12 = vector.broadcast %cst_10 : f32 to vector<16x64xf32>
      %c0_11 = arith.constant 0 : index
      %c0_12 = arith.constant 0 : index
      %13 = vector.load %arg7[%c0_11, %c0_12] : memref<16x64xf32, #tpu.memory_space<vmem>>, vector<16x64xf32>
      tpu.vector_store %arg7[%c0_11, %c0_12], %12 {strides = array<i32>} : memref<16x64xf32, #tpu.memory_space<vmem>>, vector<16x64xf32>,
    } else {
    }
    %c0 = arith.constant 0 : index
    %c0_1 = arith.constant 0 : index
    %3 = vector.load %arg7[%c0, %c0_1] : memref<16x64xf32, #tpu.memory_space<vmem>>, vector<16x64xf32>
    %c0_2 = arith.constant 0 : index
    %c0_3 = arith.constant 0 : index
    %4 = vector.load %arg3[%c0_2, %c0_3] : memref<16x32xbf16, #tpu.memory_space<vmem>>, vector<16x32xbf16>
    %c0_4 = arith.constant 0 : index
    %c0_5 = arith.constant 0 : index
    %5 = vector.load %arg4[%c0_4, %c0_5] : memref<32x64xbf16, #tpu.memory_space<vmem>>, vector<32x64xbf16>
    %cst = arith.constant dense<0.000000e+00> : vector<16x64xf32>
    %6 = tpu.matmul %4, %5, %cst {dimension_numbers = #tpu.dot_dimension_numbers<[1], [0], [0], [1], [0, 0, 1, 1], [], []>} : vector<16x32xbf16>, vector<32x64xbf16>, vector<16x64xf32> -> vector<16x64xf32>
    %7 = arith.addf %3, %6 : vector<16x64xf32>
    %c0_6 = arith.constant 0 : index
    %c0_7 = arith.constant 0 : index
    %8 = vector.load %arg7[%c0_6, %c0_7] : memref<16x64xf32, #tpu.memory_space<vmem>>, vector<16x64xf32>
    tpu.vector_store %arg7[%c0_6, %c0_7], %7 {strides = array<i32>} : memref<16x64xf32, #tpu.memory_space<vmem>>, vector<16x64xf32>,
    %c0_i32_8 = arith.constant 0 : i32
    %9 = arith.cmpi eq, %arg2, %c0_i32_8 : i32
    %10 = arith.extui %9 : i1 to i32
    %c0_i32_9 = arith.constant 0 : i32
    %11 = arith.cmpi ne, %10, %c0_i32_9 : i32
    scf.if %11 {
      %c0_10 = arith.constant 0 : index
      %c0_11 = arith.constant 0 : index
      %12 = vector.load %arg7[%c0_10, %c0_11] : memref<16x64xf32, #tpu.memory_space<vmem>>, vector<16x64xf32>
      %c0_12 = arith.constant 0 : index
      %c0_13 = arith.constant 0 : index
      %13 = vector.load %arg5[%c0_12, %c0_13] : memref<1x64xf32, #tpu.memory_space<vmem>>, vector<1x64xf32>
      %14 = vector.broadcast %13 : vector<1x64xf32> to vector<16x64xf32>
      %15 = arith.addf %12, %14 : vector<16x64xf32>
      %16 = arith.truncf %15 : vector<16x64xf32> to vector<16x64xbf16>
      %c0_14 = arith.constant 0 : index
      %c0_15 = arith.constant 0 : index
      %17 = vector.load %arg6[%c0_14, %c0_15] : memref<16x64xbf16, #tpu.memory_space<vmem>>, vector<16x64xbf16>
      tpu.vector_store %arg6[%c0_14, %c0_15], %16 {strides = array<i32>} : memref<16x64xbf16, #tpu.memory_space<vmem>>, vector<16x64xbf16>,
    } else {
    }
    return
  }
  func.func @transform_0(%arg0: i32, %arg1: i32, %arg2: i32) -> (i32, i32) {
    %c0_i32 = arith.constant 0 : i32
    return %arg0, %arg2 : i32, i32
  }
  func.func @transform_1(%arg0: i32, %arg1: i32, %arg2: i32) -> (i32, i32) {
    %c0_i32 = arith.constant 0 : i32
    return %arg2, %arg1 : i32, i32
  }
  func.func @transform_2(%arg0: i32, %arg1: i32, %arg2: i32) -> (i32, i32) {
    %c0_i32 = arith.constant 0 : i32
    %c0_i32_0 = arith.constant 0 : i32
    return %c0_i32, %arg1 : i32, i32
  }
  func.func @transform_3(%arg0: i32, %arg1: i32, %arg2: i32) -> (i32, i32) {
    %c0_i32 = arith.constant 0 : i32
    return %arg0, %arg1 : i32, i32
  }
}

module attributes {stable_mosaic.version = 11 : i64} {
  func.func @_flash_attn_kernel(%arg0: i32, %arg1: i32, %arg2: i32, %arg3: i32, %arg4: memref<1x1x8x8xbf16, #tpu.memory_space<vmem>>, %arg5: memref<1x1x8x8xbf16, #tpu.memory_space<vmem>>, %arg6: memref<1x1x8x8xbf16, #tpu.memory_space<vmem>>, %arg7: memref<1x1x8xf32, #tpu.memory_space<vmem>>, %arg8: memref<1x1x8x8xbf16, #tpu.memory_space<vmem>>, %arg9: memref<8x1xf32, #tpu.memory_space<vmem>>, %arg10: memref<8x1xf32, #tpu.memory_space<vmem>>, %arg11: memref<8x8xf32, #tpu.memory_space<vmem>>) attributes {dimension_semantics = [#tpu.dimension_semantics<parallel>, #tpu.dimension_semantics<parallel>, #tpu.dimension_semantics<parallel>, #tpu.dimension_semantics<arbitrary>], iteration_bounds = array<i64: 2, 4, 1, 1>, scalar_prefetch = 0 : i64, scratch_operands = 3 : i64, tpu.core_type = #tpu.core_type<tc>, window_params = [{transform_indices = @transform_0, window_bounds = array<i64: 1, 1, 8, 8>}, {transform_indices = @transform_1, window_bounds = array<i64: 1, 1, 8, 8>}, {transform_indices = @transform_2, window_bounds = array<i64: 1, 1, 8, 8>}, {transform_indices = @transform_3, window_bounds = array<i64: 1, 1, 8>}, {transform_indices = @transform_4, window_bounds = array<i64: 1, 1, 8, 8>}]} {
    %c0_i32 = arith.constant 0 : i32
    %0 = arith.cmpi eq, %arg3, %c0_i32 : i32
    %1 = arith.extui %0 : i1 to i32
    %c0_i32_0 = arith.constant 0 : i32
    %2 = arith.cmpi ne, %1, %c0_i32_0 : i32
    scf.if %2 {
      %cst_33 = arith.constant -1.000000e+30 : f32
      %42 = vector.broadcast %cst_33 : f32 to vector<8x1xf32>
      %c0_34 = arith.constant 0 : index
      %c0_35 = arith.constant 0 : index
      %43 = vector.load %arg9[%c0_34, %c0_35] : memref<8x1xf32, #tpu.memory_space<vmem>>, vector<8x1xf32>
      tpu.vector_store %arg9[%c0_34, %c0_35], %42 {strides = array<i32>} : memref<8x1xf32, #tpu.memory_space<vmem>>, vector<8x1xf32>,
      %cst_36 = arith.constant 0.000000e+00 : f32
      %44 = vector.broadcast %cst_36 : f32 to vector<8x1xf32>
      %c0_37 = arith.constant 0 : index
      %c0_38 = arith.constant 0 : index
      %45 = vector.load %arg10[%c0_37, %c0_38] : memref<8x1xf32, #tpu.memory_space<vmem>>, vector<8x1xf32>
      tpu.vector_store %arg10[%c0_37, %c0_38], %44 {strides = array<i32>} : memref<8x1xf32, #tpu.memory_space<vmem>>, vector<8x1xf32>,
      %cst_39 = arith.constant 0.000000e+00 : f32
      %46 = vector.broadcast %cst_39 : f32 to vector<8x8xf32>
      %c0_40 = arith.constant 0 : index
      %c0_41 = arith.constant 0 : index
      %47 = vector.load %arg11[%c0_40, %c0_41] : memref<8x8xf32, #tpu.memory_space<vmem>>, vector<8x8xf32>
      tpu.vector_store %arg11[%c0_40, %c0_41], %46 {strides = array<i32>} : memref<8x8xf32, #tpu.memory_space<vmem>>, vector<8x8xf32>,
    } else {
    }
    %c0 = arith.constant 0 : index
    %c0_1 = arith.constant 0 : index
    %c0_2 = arith.constant 0 : index
    %c0_3 = arith.constant 0 : index
    %3 = vector.load %arg4[%c0, %c0_1, %c0_2, %c0_3] : memref<1x1x8x8xbf16, #tpu.memory_space<vmem>>, vector<1x1x8x8xbf16>
    %4 = vector.shape_cast %3 : vector<1x1x8x8xbf16> to vector<8x8xbf16>
    %cst = arith.constant 3.535160e-01 : bf16
    %5 = vector.broadcast %cst : bf16 to vector<8x8xbf16>
    %6 = arith.mulf %4, %5 : vector<8x8xbf16>
    %c0_4 = arith.constant 0 : index
    %c0_5 = arith.constant 0 : index
    %c0_6 = arith.constant 0 : index
    %c0_7 = arith.constant 0 : index
    %7 = vector.load %arg5[%c0_4, %c0_5, %c0_6, %c0_7] : memref<1x1x8x8xbf16, #tpu.memory_space<vmem>>, vector<1x1x8x8xbf16>
    %8 = vector.shape_cast %7 : vector<1x1x8x8xbf16> to vector<8x8xbf16>
    %c0_8 = arith.constant 0 : index
    %c0_9 = arith.constant 0 : index
    %c0_10 = arith.constant 0 : index
    %c0_11 = arith.constant 0 : index
    %9 = vector.load %arg6[%c0_8, %c0_9, %c0_10, %c0_11] : memref<1x1x8x8xbf16, #tpu.memory_space<vmem>>, vector<1x1x8x8xbf16>
    %10 = vector.shape_cast %9 : vector<1x1x8x8xbf16> to vector<8x8xbf16>
    %cst_12 = arith.constant dense<0.000000e+00> : vector<8x8xf32>
    %11 = tpu.matmul %6, %8, %cst_12 {dimension_numbers = #tpu.dot_dimension_numbers<[1], [1], [0], [0], [0, 0, 1, 0], [], []>} : vector<8x8xbf16>, vector<8x8xbf16>, vector<8x8xf32> -> vector<8x8xf32>
    %c0_13 = arith.constant 0 : index
    %c0_14 = arith.constant 0 : index
    %c0_15 = arith.constant 0 : index
    %12 = vector.load %arg7[%c0_13, %c0_14, %c0_15] : memref<1x1x8xf32, #tpu.memory_space<vmem>>, vector<1x1x8xf32>
    %13 = vector.shape_cast %12 : vector<1x1x8xf32> to vector<1x8xf32>
    %14 = vector.broadcast %13 : vector<1x8xf32> to vector<8x8xf32>
    %15 = arith.addf %11, %14 : vector<8x8xf32>
    %c0_16 = arith.constant 0 : index
    %c0_17 = arith.constant 0 : index
    %16 = vector.load %arg9[%c0_16, %c0_17] : memref<8x1xf32, #tpu.memory_space<vmem>>, vector<8x1xf32>
    %cst_18 = arith.constant dense<0xFF800000> : vector<8xf32>
    %17 = vector.multi_reduction <maximumf>, %15, %cst_18 [1] : vector<8x8xf32> to vector<8xf32>
    %18 = vector.shape_cast %17 : vector<8xf32> to vector<8x1xf32>
    %19 = arith.maximumf %16, %18 : vector<8x1xf32>
    %20 = arith.subf %16, %19 : vector<8x1xf32>
    %21 = math.exp %20 : vector<8x1xf32>
    %22 = vector.broadcast %19 : vector<8x1xf32> to vector<8x8xf32>
    %23 = arith.subf %15, %22 : vector<8x8xf32>
    %24 = math.exp %23 : vector<8x8xf32>
    %c0_19 = arith.constant 0 : index
    %c0_20 = arith.constant 0 : index
    %25 = vector.load %arg10[%c0_19, %c0_20] : memref<8x1xf32, #tpu.memory_space<vmem>>, vector<8x1xf32>
    %26 = arith.mulf %21, %25 : vector<8x1xf32>
    %cst_21 = arith.constant dense<0.000000e+00> : vector<8xf32>
    %27 = vector.multi_reduction <add>, %24, %cst_21 [1] : vector<8x8xf32> to vector<8xf32>
    %28 = vector.shape_cast %27 : vector<8xf32> to vector<8x1xf32>
    %29 = arith.addf %26, %28 : vector<8x1xf32>
    %c0_22 = arith.constant 0 : index
    %c0_23 = arith.constant 0 : index
    %30 = vector.load %arg10[%c0_22, %c0_23] : memref<8x1xf32, #tpu.memory_space<vmem>>, vector<8x1xf32>
    tpu.vector_store %arg10[%c0_22, %c0_23], %29 {strides = array<i32>} : memref<8x1xf32, #tpu.memory_space<vmem>>, vector<8x1xf32>,
    %c0_24 = arith.constant 0 : index
    %c0_25 = arith.constant 0 : index
    %31 = vector.load %arg11[%c0_24, %c0_25] : memref<8x8xf32, #tpu.memory_space<vmem>>, vector<8x8xf32>
    %32 = vector.broadcast %21 : vector<8x1xf32> to vector<8x8xf32>
    %33 = arith.mulf %32, %31 : vector<8x8xf32>
    %34 = arith.truncf %24 : vector<8x8xf32> to vector<8x8xbf16>
    %cst_26 = arith.constant dense<0.000000e+00> : vector<8x8xf32>
    %35 = tpu.matmul %34, %10, %cst_26 {dimension_numbers = #tpu.dot_dimension_numbers<[1], [0], [0], [1], [0, 0, 1, 1], [], []>} : vector<8x8xbf16>, vector<8x8xbf16>, vector<8x8xf32> -> vector<8x8xf32>
    %36 = arith.addf %33, %35 : vector<8x8xf32>
    %c0_27 = arith.constant 0 : index
    %c0_28 = arith.constant 0 : index
    %37 = vector.load %arg11[%c0_27, %c0_28] : memref<8x8xf32, #tpu.memory_space<vmem>>, vector<8x8xf32>
    tpu.vector_store %arg11[%c0_27, %c0_28], %36 {strides = array<i32>} : memref<8x8xf32, #tpu.memory_space<vmem>>, vector<8x8xf32>,
    %c0_29 = arith.constant 0 : index
    %c0_30 = arith.constant 0 : index
    %38 = vector.load %arg9[%c0_29, %c0_30] : memref<8x1xf32, #tpu.memory_space<vmem>>, vector<8x1xf32>
    tpu.vector_store %arg9[%c0_29, %c0_30], %19 {strides = array<i32>} : memref<8x1xf32, #tpu.memory_space<vmem>>, vector<8x1xf32>,
    %c0_i32_31 = arith.constant 0 : i32
    %39 = arith.cmpi eq, %arg3, %c0_i32_31 : i32
    %40 = arith.extui %39 : i1 to i32
    %c0_i32_32 = arith.constant 0 : i32
    %41 = arith.cmpi ne, %40, %c0_i32_32 : i32
    scf.if %41 {
      %c0_33 = arith.constant 0 : index
      %c0_34 = arith.constant 0 : index
      %42 = vector.load %arg11[%c0_33, %c0_34] : memref<8x8xf32, #tpu.memory_space<vmem>>, vector<8x8xf32>
      %c0_35 = arith.constant 0 : index
      %c0_36 = arith.constant 0 : index
      %43 = vector.load %arg10[%c0_35, %c0_36] : memref<8x1xf32, #tpu.memory_space<vmem>>, vector<8x1xf32>
      %44 = tpu.reciprocal %43 {approx = true} : vector<8x1xf32> -> vector<8x1xf32>
      %45 = vector.broadcast %44 : vector<8x1xf32> to vector<8x8xf32>
      %46 = arith.mulf %42, %45 : vector<8x8xf32>
      %47 = arith.truncf %46 : vector<8x8xf32> to vector<8x8xbf16>
      %c0_37 = arith.constant 0 : index
      %c0_38 = arith.constant 0 : index
      %c0_39 = arith.constant 0 : index
      %c0_40 = arith.constant 0 : index
      %48 = vector.load %arg8[%c0_37, %c0_38, %c0_39, %c0_40] : memref<1x1x8x8xbf16, #tpu.memory_space<vmem>>, vector<1x1x8x8xbf16>
      %49 = vector.shape_cast %48 : vector<1x1x8x8xbf16> to vector<8x8xbf16>
      %50 = vector.shape_cast %47 : vector<8x8xbf16> to vector<1x1x8x8xbf16>
      tpu.vector_store %arg8[%c0_37, %c0_38, %c0_39, %c0_40], %50 {strides = array<i32>} : memref<1x1x8x8xbf16, #tpu.memory_space<vmem>>, vector<1x1x8x8xbf16>,
    } else {
    }
    return
  }
  func.func @transform_0(%arg0: i32, %arg1: i32, %arg2: i32, %arg3: i32) -> (i32, i32, i32, i32) {
    %c0_i32 = arith.constant 0 : i32
    %c0_i32_0 = arith.constant 0 : i32
    return %arg0, %arg1, %arg2, %c0_i32 : i32, i32, i32, i32
  }
  func.func @transform_1(%arg0: i32, %arg1: i32, %arg2: i32, %arg3: i32) -> (i32, i32, i32, i32) {
    %c0_i32 = arith.constant 0 : i32
    %c0_i32_0 = arith.constant 0 : i32
    return %arg0, %arg1, %arg3, %c0_i32 : i32, i32, i32, i32
  }
  func.func @transform_2(%arg0: i32, %arg1: i32, %arg2: i32, %arg3: i32) -> (i32, i32, i32, i32) {
    %c0_i32 = arith.constant 0 : i32
    %c0_i32_0 = arith.constant 0 : i32
    return %arg0, %arg1, %arg3, %c0_i32 : i32, i32, i32, i32
  }
  func.func @transform_3(%arg0: i32, %arg1: i32, %arg2: i32, %arg3: i32) -> (i32, i32, i32) {
    %c0_i32 = arith.constant 0 : i32
    %c0_i32_0 = arith.constant 0 : i32
    return %arg0, %c0_i32, %arg3 : i32, i32, i32
  }
  func.func @transform_4(%arg0: i32, %arg1: i32, %arg2: i32, %arg3: i32) -> (i32, i32, i32, i32) {
    %c0_i32 = arith.constant 0 : i32
    %c0_i32_0 = arith.constant 0 : i32
    return %arg0, %arg1, %arg2, %c0_i32 : i32, i32, i32, i32
  }
}

module attributes {stable_mosaic.version = 11 : i64} {
  func.func @_linear_kernel(%arg0: i32, %arg1: i32, %arg2: i32, %arg3: memref<16x32xbf16, #tpu.memory_space<vmem>>, %arg4: memref<32x96xbf16, #tpu.memory_space<vmem>>, %arg5: memref<1x96xf32, #tpu.memory_space<vmem>>, %arg6: memref<16x96xf32, #tpu.memory_space<vmem>>, %arg7: memref<16x96xf32, #tpu.memory_space<vmem>>) attributes {dimension_semantics = [#tpu.dimension_semantics<parallel>, #tpu.dimension_semantics<parallel>, #tpu.dimension_semantics<arbitrary>], iteration_bounds = array<i64: 1, 1, 1>, scalar_prefetch = 0 : i64, scratch_operands = 1 : i64, tpu.core_type = #tpu.core_type<tc>, window_params = [{transform_indices = @transform_0, window_bounds = array<i64: 16, 32>}, {transform_indices = @transform_1, window_bounds = array<i64: 32, 96>}, {transform_indices = @transform_2, window_bounds = array<i64: 1, 96>}, {transform_indices = @transform_3, window_bounds = array<i64: 16, 96>}]} {
    %c0_i32 = arith.constant 0 : i32
    %0 = arith.cmpi eq, %arg2, %c0_i32 : i32
    %1 = arith.extui %0 : i1 to i32
    %c0_i32_0 = arith.constant 0 : i32
    %2 = arith.cmpi ne, %1, %c0_i32_0 : i32
    scf.if %2 {
      %cst_10 = arith.constant 0.000000e+00 : f32
      %12 = vector.broadcast %cst_10 : f32 to vector<16x96xf32>
      %c0_11 = arith.constant 0 : index
      %c0_12 = arith.constant 0 : index
      %13 = vector.load %arg7[%c0_11, %c0_12] : memref<16x96xf32, #tpu.memory_space<vmem>>, vector<16x96xf32>
      tpu.vector_store %arg7[%c0_11, %c0_12], %12 {strides = array<i32>} : memref<16x96xf32, #tpu.memory_space<vmem>>, vector<16x96xf32>,
    } else {
    }
    %c0 = arith.constant 0 : index
    %c0_1 = arith.constant 0 : index
    %3 = vector.load %arg7[%c0, %c0_1] : memref<16x96xf32, #tpu.memory_space<vmem>>, vector<16x96xf32>
    %c0_2 = arith.constant 0 : index
    %c0_3 = arith.constant 0 : index
    %4 = vector.load %arg3[%c0_2, %c0_3] : memref<16x32xbf16, #tpu.memory_space<vmem>>, vector<16x32xbf16>
    %c0_4 = arith.constant 0 : index
    %c0_5 = arith.constant 0 : index
    %5 = vector.load %arg4[%c0_4, %c0_5] : memref<32x96xbf16, #tpu.memory_space<vmem>>, vector<32x96xbf16>
    %cst = arith.constant dense<0.000000e+00> : vector<16x96xf32>
    %6 = tpu.matmul %4, %5, %cst {dimension_numbers = #tpu.dot_dimension_numbers<[1], [0], [0], [1], [0, 0, 1, 1], [], []>} : vector<16x32xbf16>, vector<32x96xbf16>, vector<16x96xf32> -> vector<16x96xf32>
    %7 = arith.addf %3, %6 : vector<16x96xf32>
    %c0_6 = arith.constant 0 : index
    %c0_7 = arith.constant 0 : index
    %8 = vector.load %arg7[%c0_6, %c0_7] : memref<16x96xf32, #tpu.memory_space<vmem>>, vector<16x96xf32>
    tpu.vector_store %arg7[%c0_6, %c0_7], %7 {strides = array<i32>} : memref<16x96xf32, #tpu.memory_space<vmem>>, vector<16x96xf32>,
    %c0_i32_8 = arith.constant 0 : i32
    %9 = arith.cmpi eq, %arg2, %c0_i32_8 : i32
    %10 = arith.extui %9 : i1 to i32
    %c0_i32_9 = arith.constant 0 : i32
    %11 = arith.cmpi ne, %10, %c0_i32_9 : i32
    scf.if %11 {
      %c0_10 = arith.constant 0 : index
      %c0_11 = arith.constant 0 : index
      %12 = vector.load %arg7[%c0_10, %c0_11] : memref<16x96xf32, #tpu.memory_space<vmem>>, vector<16x96xf32>
      %c0_12 = arith.constant 0 : index
      %c0_13 = arith.constant 0 : index
      %13 = vector.load %arg5[%c0_12, %c0_13] : memref<1x96xf32, #tpu.memory_space<vmem>>, vector<1x96xf32>
      %14 = vector.broadcast %13 : vector<1x96xf32> to vector<16x96xf32>
      %15 = arith.addf %12, %14 : vector<16x96xf32>
      %c0_14 = arith.constant 0 : index
      %c0_15 = arith.constant 0 : index
      %16 = vector.load %arg6[%c0_14, %c0_15] : memref<16x96xf32, #tpu.memory_space<vmem>>, vector<16x96xf32>
      tpu.vector_store %arg6[%c0_14, %c0_15], %15 {strides = array<i32>} : memref<16x96xf32, #tpu.memory_space<vmem>>, vector<16x96xf32>,
    } else {
    }
    return
  }
  func.func @transform_0(%arg0: i32, %arg1: i32, %arg2: i32) -> (i32, i32) {
    %c0_i32 = arith.constant 0 : i32
    return %arg0, %arg2 : i32, i32
  }
  func.func @transform_1(%arg0: i32, %arg1: i32, %arg2: i32) -> (i32, i32) {
    %c0_i32 = arith.constant 0 : i32
    return %arg2, %arg1 : i32, i32
  }
  func.func @transform_2(%arg0: i32, %arg1: i32, %arg2: i32) -> (i32, i32) {
    %c0_i32 = arith.constant 0 : i32
    %c0_i32_0 = arith.constant 0 : i32
    return %c0_i32, %arg1 : i32, i32
  }
  func.func @transform_3(%arg0: i32, %arg1: i32, %arg2: i32) -> (i32, i32) {
    %c0_i32 = arith.constant 0 : i32
    return %arg0, %arg1 : i32, i32
  }
}

</mosaic_0001>

<llo_original>
// kernel: transformer_forward.33
$region0: #{transformer_forward.33}
  #allocation0 [shape = 'u32[]', space=smem, size = 0x4, offset = 0x4, fixed_abs, tag = 'smem constant byte address 0x4 - core index']
  #allocation1 [shape = 'u32[144,128]{1,0:T(1,128)}', space=vmem, size = 0x12000, scoped, tag = 'internal scratch']
  #allocation2 [shape = 'f32[16,96]{1,0:T(8,128)}', space=vmem, size = 0x2000, scoped, tag = 'scratch operand']
  %s0 = inlined_call_operand.vmem [shape: bf16[16,32], index: 0, kind: input, shape index: {}]
  %s1 = inlined_call_operand.vmem [shape: bf16[32,96], index: 1, kind: input, shape index: {}]
  %s2 = inlined_call_operand.vmem [shape: f32[1,96], index: 2, kind: input, shape index: {}]
  %s3 = inlined_call_operand.vmem [shape: bf16[16,96], index: 3, kind: output, shape index: {}]
  %s4 = sld [smem:[#allocation0]]
  $region30: #{transformer_forward.33} parent=0
    _
  %s6 = ssub.s32 1, %s4
  %s7 = scalar_select 0, %s6, %s4
  // Predicated region
  $region2: #{transformer_forward.33} parent=0 // pred_check
    _
  $region3: #{transformer_forward.33} parent=0 // pred_check_branch
    %9 = sbr.rel (0) target = $region5
  $region4: #{transformer_forward.33} parent=0 // pred_region
    _
  $region5: #{transformer_forward.33} parent=0 // pred_fallthru
    _
  // Predicated region
  $region6: #{transformer_forward.33} parent=0 // pred_check
    _
  $region7: #{transformer_forward.33} parent=0 // pred_check_branch
    %11 = sbr.rel (0) target = $region9
  $region8: #{transformer_forward.33} parent=0 // pred_region
    _
  $region9: #{transformer_forward.33} parent=0 // pred_fallthru
    _
  // Predicated region
  $region10: #{transformer_forward.33} parent=0 // pred_check
    _
  $region11: #{transformer_forward.33} parent=0 // pred_check_branch
    %13 = sbr.rel (0) target = $region13
  $region12: #{transformer_forward.33} parent=0 // pred_region
    _
  $region13: #{transformer_forward.33} parent=0 // pred_fallthru
    _
  %p15 = scmp.eq.s32.totalorder 0, 0
  // Predicated region
  $region14: #{transformer_forward.33} parent=0 // pred_check
    %p16 = pneg %p15
  $region15: #{transformer_forward.33} parent=0 // pred_check_branch
    %18 = sbr.rel (%p16) target = $region17
  $region16: #{transformer_forward.33} parent=0 // pred_region
    %vm19 = vcmask 785408
    %20 = vst.msk [vmem:[#allocation2] sm:$0xff] %vm19, 0.0
    %21 = vst.msk [vmem:[#allocation2 + $0x8] sm:$0xff] %vm19, 0.0
  $region17: #{transformer_forward.33} parent=0 // pred_fallthru
    _
  %v22 = vld [vmem:[#allocation2] sm:$0xff]
  %v23 = vld [vmem:[#allocation2 + $0x8] sm:$0xff]
  %v24 = vld [vmem:[%s0] sm:$0xf]
  %v25 = vld [vmem:[%s0 + $0x4] sm:$0xf]
  %v26 = vld [vmem:[%s1] sm:$0xf]
  %v27 = vld [vmem:[%s1 + $0x4] sm:$0xf]
  %v28 = vld [vmem:[%s1 + $0x8] sm:$0xf]
  %v29 = vld [vmem:[%s1 + $0xc] sm:$0xf]
  %v32 = vunpack.c.l.b16 %v24
  %v33 = vunpack.c.l.b16 %v25
  %v34 = vpack.c.b16 %v33, %v32
  %v39 = vunpack.c.l.b16 %v26
  %v40 = vunpack.c.l.b16 %v27
  %v41 = vunpack.c.l.b16 %v28
  %v42 = vunpack.c.l.b16 %v29
  %v43 = vpack.c.b16 %v40, %v39
  %v44 = vpack.c.b16 %v42, %v41
  %vm47 = vcmask 261120
  %v49 = vsel %vm47, %v34, 0
  %51 = vmatprep.subr.bf16.mxu0 0
  %52 = vmatpush1.bf16.msra.mxu0 %v43
  %53 = vmatprep.subr.bf16.mxu0 0
  %54 = vmatpush1.bf16.msra.mxu0 %v44
  %55 = vmatprep.subr.bf16.mxu0 0
  %56 = vmatpush1.bf16.msra.mxu0 0
  %57 = vmatprep.subr.bf16.mxu0 0
  %58 = vmatpush1.bf16.msra.mxu0 0
  %59 = vmatprep.subr.bf16.mxu0 0
  %60 = vmatpush1.bf16.msra.mxu0 0
  %61 = vmatprep.subr.bf16.mxu0 0
  %62 = vmatpush1.bf16.msra.mxu0 0
  %63 = vmatprep.subr.bf16.mxu0 0
  %64 = vmatpush1.bf16.msra.mxu0 0
  %65 = vmatprep.subr.bf16.mxu0 0
  %66 = vmatpush1.bf16.msra.mxu0 0
  %67 = vmatprep.subr.bf16.mxu0 0
  %68 = vmatpush1.bf16.msra.mxu0 0
  %69 = vmatprep.subr.bf16.mxu0 0
  %70 = vmatpush1.bf16.msra.mxu0 0
  %71 = vmatprep.subr.bf16.mxu0 0
  %72 = vmatpush1.bf16.msra.mxu0 0
  %73 = vmatprep.subr.bf16.mxu0 0
  %74 = vmatpush1.bf16.msra.mxu0 0
  %75 = vmatprep.subr.bf16.mxu0 0
  %76 = vmatpush1.bf16.msra.mxu0 0
  %77 = vmatprep.subr.bf16.mxu0 0
  %78 = vmatpush1.bf16.msra.mxu0 0
  %79 = vmatprep.subr.bf16.mxu0 0
  %80 = vmatpush1.bf16.msra.mxu0 0
  %81 = vmatprep.subr.bf16.mxu0 0
  %82 = vmatpush1.bf16.msra.mxu0 0
  %83 = vmatprep.mubr.bf16.mxu0 0
  %84 = vmatmul.mubr.bf16.gmra.mrb[0].mxu0 %v49
  %v85 = vpop.f32.mrb[0].mxu0
  %v86 = vadd.f32 0.0, %v85
  %v87 = vpop.f32.mrb[0].mxu0
  %v88 = vpop.f32.mrb[0].mxu0
  %v89 = vadd.f32 0.0, %v88
  %v90 = vpop.f32.mrb[0].mxu0
  %91 = vdwg.mxu0
  %v92 = vadd.f32 %v22, %v86
  %v93 = vadd.f32 %v23, %v89
  %vm94 = vcmask 785408
  %95 = vst.msk [vmem:[#allocation2] sm:$0xff] %vm94, %v92
  %96 = vst.msk [vmem:[#allocation2 + $0x8] sm:$0xff] %vm94, %v93
  // Predicated region
  $region18: #{transformer_forward.33} parent=0 // pred_check
    %p97 = pneg %p15
  $region19: #{transformer_forward.33} parent=0 // pred_check_branch
    %99 = sbr.rel (%p97) target = $region21
  $region20: #{transformer_forward.33} parent=0 // pred_region
    %v100 = vld [vmem:[#allocation2] sm:$0xff]
    %v101 = vld [vmem:[#allocation2 + $0x8] sm:$0xff]
    %v102 = vld [vmem:[%s2] sm:$0x1]
    %v104 = vlaneseq
    %v105 = vshrl.u32 %v104, 7
    %v106 = vsub.s32 0, %v105
    %v107 = vrot.slane %v102, %v106
    %v109 = vadd.f32 %v100, %v107
    %v110 = vadd.f32 %v101, %v107
    %v111 = vpack.c.bf16 %v110, %v109
    %v113 = vunpack.c.l.b16 %v111
    %v114 = vunpack.c.h.b16 %v111
    %v115 = vpack.c.b16 %v113, %v113
    %v116 = vpack.c.b16 %v114, %v114
    %vm119 = vcmask 781312
    %120 = vst.msk [vmem:[%s3] sm:$0xf] %vm119, %v115
    %121 = vst.msk [vmem:[%s3 + $0x4] sm:$0xf] %vm119, %v116
  $region21: #{transformer_forward.33} parent=0 // pred_fallthru
    _
  // Predicated region
  $region22: #{transformer_forward.33} parent=0 // pred_check
    _
  $region23: #{transformer_forward.33} parent=0 // pred_check_branch
    %123 = sbr.rel (0) target = $region25
  $region24: #{transformer_forward.33} parent=0 // pred_region
    _
  $region25: #{transformer_forward.33} parent=0 // pred_fallthru
    _
  // Predicated region
  $region26: #{transformer_forward.33} parent=0 // pred_check
    _
  $region27: #{transformer_forward.33} parent=0 // pred_check_branch
    %125 = sbr.rel (0) target = $region29
  $region28: #{transformer_forward.33} parent=0 // pred_region
    _
  $region29: #{transformer_forward.33} parent=0 // pred_fallthru
    _

// kernel: transformer_forward.35
$region0: #{transformer_forward.35}
  #allocation0 [shape = 'u32[]', space=smem, size = 0x4, offset = 0x4, fixed_abs, tag = 'smem constant byte address 0x4 - core index']
  #allocation1 [shape = 'u32[144,128]{1,0:T(1,128)}', space=vmem, size = 0x12000, scoped, tag = 'internal scratch']
  %s0 = inlined_call_operand.vmem [shape: bf16[16,32], index: 0, kind: input, shape index: {}]
  %s1 = inlined_call_operand.vmem [shape: bf16[32,32], index: 1, kind: input, shape index: {}]
  %s2 = inlined_call_operand.vmem [shape: f32[1,32], index: 2, kind: input, shape index: {}]
  %s3 = inlined_call_operand.vmem [shape: bf16[16,32], index: 3, kind: input, shape index: {}]
  %s4 = inlined_call_operand.vmem [shape: f32[1,32], index: 4, kind: input, shape index: {}]
  %s5 = inlined_call_operand.vmem [shape: f32[1,32], index: 5, kind: input, shape index: {}]
  %s6 = inlined_call_operand.vmem [shape: bf16[16,32], index: 6, kind: output, shape index: {}]
  %s7 = sld [smem:[#allocation0]]
  $region34: #{transformer_forward.35} parent=0
    _
  %s9 = ssub.s32 1, %s7
  %s10 = scalar_select 0, %s9, %s7
  // Predicated region
  $region2: #{transformer_forward.35} parent=0 // pred_check
    _
  $region3: #{transformer_forward.35} parent=0 // pred_check_branch
    %12 = sbr.rel (0) target = $region5
  $region4: #{transformer_forward.35} parent=0 // pred_region
    _
  $region5: #{transformer_forward.35} parent=0 // pred_fallthru
    _
  // Predicated region
  $region6: #{transformer_forward.35} parent=0 // pred_check
    _
  $region7: #{transformer_forward.35} parent=0 // pred_check_branch
    %14 = sbr.rel (0) target = $region9
  $region8: #{transformer_forward.35} parent=0 // pred_region
    _
  $region9: #{transformer_forward.35} parent=0 // pred_fallthru
    _
  // Predicated region
  $region10: #{transformer_forward.35} parent=0 // pred_check
    _
  $region11: #{transformer_forward.35} parent=0 // pred_check_branch
    %16 = sbr.rel (0) target = $region13
  $region12: #{transformer_forward.35} parent=0 // pred_region
    _
  $region13: #{transformer_forward.35} parent=0 // pred_fallthru
    _
  // Predicated region
  $region14: #{transformer_forward.35} parent=0 // pred_check
    _
  $region15: #{transformer_forward.35} parent=0 // pred_check_branch
    %18 = sbr.rel (0) target = $region17
  $region16: #{transformer_forward.35} parent=0 // pred_region
    _
  $region17: #{transformer_forward.35} parent=0 // pred_fallthru
    _
  // Predicated region
  $region18: #{transformer_forward.35} parent=0 // pred_check
    _
  $region19: #{transformer_forward.35} parent=0 // pred_check_branch
    %20 = sbr.rel (0) target = $region21
  $region20: #{transformer_forward.35} parent=0 // pred_region
    _
  $region21: #{transformer_forward.35} parent=0 // pred_fallthru
    _
  // Predicated region
  $region22: #{transformer_forward.35} parent=0 // pred_check
    _
  $region23: #{transformer_forward.35} parent=0 // pred_check_branch
    %22 = sbr.rel (0) target = $region25
  $region24: #{transformer_forward.35} parent=0 // pred_region
    _
  $region25: #{transformer_forward.35} parent=0 // pred_fallthru
    _
  %v24 = vld [vmem:[%s0] sm:$0xf]
  %v25 = vld [vmem:[%s0 + $0x4] sm:$0xf]
  %v26 = vld [vmem:[%s1] sm:$0xf]
  %v27 = vld [vmem:[%s1 + $0x4] sm:$0xf]
  %v28 = vld [vmem:[%s1 + $0x8] sm:$0xf]
  %v29 = vld [vmem:[%s1 + $0xc] sm:$0xf]
  %v30 = vld [vmem:[%s2] sm:$0x1]
  %v32 = vlaneseq
  %v33 = vshrl.u32 %v32, 7
  %v34 = vsub.s32 0, %v33
  %v35 = vrot.slane %v30, %v34
  %v39 = vunpack.c.l.b16 %v24
  %v40 = vunpack.c.l.b16 %v25
  %v41 = vpack.c.b16 %v40, %v39
  %v46 = vunpack.c.l.b16 %v26
  %v47 = vunpack.c.l.b16 %v27
  %v48 = vunpack.c.l.b16 %v28
  %v49 = vunpack.c.l.b16 %v29
  %v50 = vpack.c.b16 %v47, %v46
  %v51 = vpack.c.b16 %v49, %v48
  %vm54 = vcmask 261120
  %v56 = vsel %vm54, %v41, 0
  %58 = vmatprep.subr.bf16.mxu0 0
  %59 = vmatpush1.bf16.msra.mxu0 %v50
  %60 = vmatprep.subr.bf16.mxu0 0
  %61 = vmatpush1.bf16.msra.mxu0 %v51
  %62 = vmatprep.subr.bf16.mxu0 0
  %63 = vmatpush1.bf16.msra.mxu0 0
  %64 = vmatprep.subr.bf16.mxu0 0
  %65 = vmatpush1.bf16.msra.mxu0 0
  %66 = vmatprep.subr.bf16.mxu0 0
  %67 = vmatpush1.bf16.msra.mxu0 0
  %68 = vmatprep.subr.bf16.mxu0 0
  %69 = vmatpush1.bf16.msra.mxu0 0
  %70 = vmatprep.subr.bf16.mxu0 0
  %71 = vmatpush1.bf16.msra.mxu0 0
  %72 = vmatprep.subr.bf16.mxu0 0
  %73 = vmatpush1.bf16.msra.mxu0 0
  %74 = vmatprep.subr.bf16.mxu0 0
  %75 = vmatpush1.bf16.msra.mxu0 0
  %76 = vmatprep.subr.bf16.mxu0 0
  %77 = vmatpush1.bf16.msra.mxu0 0
  %78 = vmatprep.subr.bf16.mxu0 0
  %79 = vmatpush1.bf16.msra.mxu0 0
  %80 = vmatprep.subr.bf16.mxu0 0
  %81 = vmatpush1.bf16.msra.mxu0 0
  %82 = vmatprep.subr.bf16.mxu0 0
  %83 = vmatpush1.bf16.msra.mxu0 0
  %84 = vmatprep.subr.bf16.mxu0 0
  %85 = vmatpush1.bf16.msra.mxu0 0
  %86 = vmatprep.subr.bf16.mxu0 0
  %87 = vmatpush1.bf16.msra.mxu0 0
  %88 = vmatprep.subr.bf16.mxu0 0
  %89 = vmatpush1.bf16.msra.mxu0 0
  %90 = vmatprep.mubr.bf16.mxu0 0
  %91 = vmatmul.mubr.bf16.gmra.mrb[0].mxu0 %v56
  %v92 = vpop.f32.mrb[0].mxu0
  %v93 = vadd.f32 %v35, %v92
  %v94 = vpop.f32.mrb[0].mxu0
  %v95 = vpop.f32.mrb[0].mxu0
  %v96 = vadd.f32 %v35, %v95
  %v97 = vpop.f32.mrb[0].mxu0
  %98 = vdwg.mxu0
  %v99 = vld [vmem:[%s3] sm:$0xf]
  %v100 = vld [vmem:[%s3 + $0x4] sm:$0xf]
  %v101 = vunpack.c.l.bf16 %v99
  %v102 = vunpack.c.l.bf16 %v100
  %v103 = vadd.f32 %v93, %v101
  %v104 = vadd.f32 %v96, %v102
  %v105 = vsel %vm54, %v103, 0.0
  %106 = vadd.xlane.f32.xlu0 %v105
  %v107 = vpop.xlane.xlu0 %106
  %v108 = vsel %vm54, %v104, 0.0
  %109 = vadd.xlane.f32.xlu0 %v108
  %v110 = vpop.xlane.xlu0 %109
  %v111 = vrcp.pop 32.0
  %v112 = vmul.f32 %v107, %v111
  %v113 = vmul.f32 %v110, %v111
  %v114 = vsub.f32 %v103, %v112
  %v115 = vsub.f32 %v104, %v113
  %v116 = vmul.f32 %v114, %v114
  %v117 = vmul.f32 %v115, %v115
  %v118 = vsel %vm54, %v116, 0.0
  %119 = vadd.xlane.f32.xlu0 %v118
  %v120 = vpop.xlane.xlu0 %119
  %v121 = vsel %vm54, %v117, 0.0
  %122 = vadd.xlane.f32.xlu0 %v121
  %v123 = vpop.xlane.xlu0 %122
  %v124 = vmul.f32 %v120, %v111
  %v125 = vmul.f32 %v123, %v111
  %v126 = vadd.f32 %v124, 1e-05
  %v127 = vadd.f32 %v125, 1e-05
  %v128 = vrsqrt.pop %v126
  %v129 = vrsqrt.pop %v127
  %v130 = vmul.f32 %v114, %v128
  %v131 = vmul.f32 %v115, %v129
  %v132 = vld [vmem:[%s4] sm:$0x1]
  %v134 = vlaneseq
  %v135 = vshrl.u32 %v134, 7
  %v136 = vsub.s32 0, %v135
  %v137 = vrot.slane %v132, %v136
  %v139 = vmul.f32 %v130, %v137
  %v140 = vmul.f32 %v131, %v137
  %v141 = vld [vmem:[%s5] sm:$0x1]
  %v143 = vlaneseq
  %v144 = vshrl.u32 %v143, 7
  %v145 = vsub.s32 0, %v144
  %v146 = vrot.slane %v141, %v145
  %v148 = vadd.f32 %v139, %v146
  %v149 = vadd.f32 %v140, %v146
  %v150 = vpack.c.bf16 %v149, %v148
  %v152 = vunpack.c.l.b16 %v150
  %v153 = vunpack.c.h.b16 %v150
  %v154 = vpack.c.b16 %v152, %v152
  %v155 = vpack.c.b16 %v153, %v153
  %vm158 = vcmask 257024
  %159 = vst.msk [vmem:[%s6] sm:$0xf] %vm158, %v154
  %160 = vst.msk [vmem:[%s6 + $0x4] sm:$0xf] %vm158, %v155
  // Predicated region
  $region26: #{transformer_forward.35} parent=0 // pred_check
    _
  $region27: #{transformer_forward.35} parent=0 // pred_check_branch
    %162 = sbr.rel (0) target = $region29
  $region28: #{transformer_forward.35} parent=0 // pred_region
    _
  $region29: #{transformer_forward.35} parent=0 // pred_fallthru
    _
  // Predicated region
  $region30: #{transformer_forward.35} parent=0 // pred_check
    _
  $region31: #{transformer_forward.35} parent=0 // pred_check_branch
    %164 = sbr.rel (0) target = $region33
  $region32: #{transformer_forward.35} parent=0 // pred_region
    _
  $region33: #{transformer_forward.35} parent=0 // pred_fallthru
    _

// kernel: transformer_forward.34
$region0: #{transformer_forward.34}
  #allocation0 [shape = 'u32[]', space=smem, size = 0x4, offset = 0x4, fixed_abs, tag = 'smem constant byte address 0x4 - core index']
  #allocation1 [shape = 'u32[144,128]{1,0:T(1,128)}', space=vmem, size = 0x12000, scoped, tag = 'internal scratch']
  #allocation2 [shape = 'f32[8,1]{1,0:T(8,128)}', space=vmem, size = 0x1000, scoped, tag = 'scratch operand']
  #allocation3 [shape = 'f32[8,1]{1,0:T(8,128)}', space=vmem, size = 0x1000, scoped, tag = 'scratch operand']
  #allocation4 [shape = 'f32[8,8]{1,0:T(8,128)}', space=vmem, size = 0x1000, scoped, tag = 'scratch operand']
  %s0 = inlined_call_operand.vmem [shape: bf16[2,4,8,8], index: 0, kind: input, shape index: {}]
  %s1 = inlined_call_operand.vmem [shape: bf16[2,4,8,8], index: 1, kind: input, shape index: {}]
  %s2 = inlined_call_operand.vmem [shape: bf16[2,4,8,8], index: 2, kind: input, shape index: {}]
  %s3 = inlined_call_operand.vmem [shape: bf16[2,4,8,8], index: 3, kind: output, shape index: {}]
  %s4 = sld [smem:[#allocation0]]
  $region57: #{transformer_forward.34} parent=0
    _
  %s6 = ssub.s32 1, %s4
  %s7 = scalar_select 0, %s6, %s4
  loop: start=0, step=1, limit=10
  $region2: #{transformer_forward.34} parent=0 // loop_pre_header
    _
  $region3: #{transformer_forward.34} parent=0 // loop_header
    %s9 = sphi 0, %s13
    %p10 = scmp.ge.s32.totalorder %s9, 10
    %s16 = sphi 0, %s42
    %s17 = sphi 0, %s38
    %s18 = sphi 0, %s34
    %s19 = sphi 0, %s30
    %s20 = sphi 0, %s16
    %s21 = sphi 0, %s17
    %s22 = sphi 0, %s18
    %s23 = sphi 0, %s19
    %s24 = sphi 0, %s20
    %s25 = sphi 0, %s21
    %s26 = sphi 0, %s22
    %s27 = sphi 0, %s23
    %s49 = sphi 0, %s51
    %s52 = sphi 0, %s49
    %s53 = sphi 0, %s52
    %s69 = sphi 0, %s53
    %s79 = sphi 0, %s81
    %s82 = sphi 0, %s79
    %s83 = sphi 0, %s82
    %s99 = sphi 0, %s83
    %s109 = sphi 0, %s111
    %s112 = sphi 0, %s109
    %s113 = sphi 0, %s112
    %s129 = sphi 0, %s113
    %s139 = sphi 0, %s141
    %s142 = sphi 0, %s139
    %s143 = sphi 0, %s142
    %s159 = sphi 0, %s143
  $region4: #{transformer_forward.34} parent=0 // loop_header_branch
    %12 = sbr.rel (%p10) target = $region8
  $region5: #{transformer_forward.34} parent=0 // loop_body
    %s14 = ssub.s32 %s9, 1
    %s15 = ssub.s32 %s9, 2
    %s28 = sadd.s32 1, %s19
    %p29 = scmp.ge.s32.totalorder %s28, 1
    %s30 = scalar_select %p29, 0, %s28
    %s31 = sadd.s32 1, %s18
    %s32 = scalar_select %p29, %s31, %s18
    %p33 = scmp.ge.s32.totalorder %s32, 1
    %s34 = scalar_select %p33, 0, %s32
    %s35 = sadd.s32 1, %s17
    %s36 = scalar_select %p33, %s35, %s17
    %p37 = scmp.ge.s32.totalorder %s36, 4
    %s38 = scalar_select %p37, 0, %s36
    %s39 = sadd.s32 1, %s16
    %s40 = scalar_select %p37, %s39, %s16
    %p41 = scmp.ge.s32.totalorder %s40, 2
    %s42 = scalar_select %p41, 0, %s40
    %s43 = ssub.s32 %s16, %s42
    %s44 = ssub.s32 %s17, %s38
    %s45 = sor.u32 %s43, %s44
    %s46 = ssub.s32 %s18, %s34
    %s47 = sor.u32 %s45, %s46
    %p48 = scmp.eq.s32.totalorder %s47, 0
    %s50 = sadd.s32 %s49, 1
    %s51 = scalar_select %p48, %s49, %s50
    %p54 = pneg %p48
    %p55 = scmp.eq.s32.totalorder %s9, 7
    %p56 = por %p54, %p55
    %p57 = scmp.ne.s32.totalorder %s49, %s52
    %p58 = scmp.eq.s32.totalorder %s9, 0
    %p59 = por %p57, %p58
    %p60 = scmp.ne.s32.totalorder %s49, %s52
    %p61 = scmp.eq.s32.totalorder %s14, 7
    %p62 = por %p60, %p61
    %p63 = scmp.ne.s32.totalorder %s52, %s53
    %p64 = scmp.eq.s32.totalorder %s14, 0
    %p65 = por %p63, %p64
    %p66 = scmp.ne.s32.totalorder %s52, %s53
    %p67 = scmp.eq.s32.totalorder %s15, 7
    %p68 = por %p66, %p67
    %p70 = scmp.ne.s32.totalorder %s53, %s69
    %p71 = scmp.eq.s32.totalorder %s15, 0
    %p72 = por %p70, %p71
    %s73 = ssub.s32 %s16, %s42
    %s74 = ssub.s32 %s17, %s38
    %s75 = sor.u32 %s73, %s74
    %s76 = ssub.s32 %s19, %s30
    %s77 = sor.u32 %s75, %s76
    %p78 = scmp.eq.s32.totalorder %s77, 0
    %s80 = sadd.s32 %s79, 1
    %s81 = scalar_select %p78, %s79, %s80
    %p84 = pneg %p78
    %p85 = scmp.eq.s32.totalorder %s9, 7
    %p86 = por %p84, %p85
    %p87 = scmp.ne.s32.totalorder %s79, %s82
    %p88 = scmp.eq.s32.totalorder %s9, 0
    %p89 = por %p87, %p88
    %p90 = scmp.ne.s32.totalorder %s79, %s82
    %p91 = scmp.eq.s32.totalorder %s14, 7
    %p92 = por %p90, %p91
    %p93 = scmp.ne.s32.totalorder %s82, %s83
    %p94 = scmp.eq.s32.totalorder %s14, 0
    %p95 = por %p93, %p94
    %p96 = scmp.ne.s32.totalorder %s82, %s83
    %p97 = scmp.eq.s32.totalorder %s15, 7
    %p98 = por %p96, %p97
    %p100 = scmp.ne.s32.totalorder %s83, %s99
    %p101 = scmp.eq.s32.totalorder %s15, 0
    %p102 = por %p100, %p101
    %s103 = ssub.s32 %s16, %s42
    %s104 = ssub.s32 %s17, %s38
    %s105 = sor.u32 %s103, %s104
    %s106 = ssub.s32 %s19, %s30
    %s107 = sor.u32 %s105, %s106
    %p108 = scmp.eq.s32.totalorder %s107, 0
    %s110 = sadd.s32 %s109, 1
    %s111 = scalar_select %p108, %s109, %s110
    %p114 = pneg %p108
    %p115 = scmp.eq.s32.totalorder %s9, 7
    %p116 = por %p114, %p115
    %p117 = scmp.ne.s32.totalorder %s109, %s112
    %p118 = scmp.eq.s32.totalorder %s9, 0
    %p119 = por %p117, %p118
    %p120 = scmp.ne.s32.totalorder %s109, %s112
    %p121 = scmp.eq.s32.totalorder %s14, 7
    %p122 = por %p120, %p121
    %p123 = scmp.ne.s32.totalorder %s112, %s113
    %p124 = scmp.eq.s32.totalorder %s14, 0
    %p125 = por %p123, %p124
    %p126 = scmp.ne.s32.totalorder %s112, %s113
    %p127 = scmp.eq.s32.totalorder %s15, 7
    %p128 = por %p126, %p127
    %p130 = scmp.ne.s32.totalorder %s113, %s129
    %p131 = scmp.eq.s32.totalorder %s15, 0
    %p132 = por %p130, %p131
    %s133 = ssub.s32 %s16, %s42
    %s134 = ssub.s32 %s17, %s38
    %s135 = sor.u32 %s133, %s134
    %s136 = ssub.s32 %s18, %s34
    %s137 = sor.u32 %s135, %s136
    %p138 = scmp.eq.s32.totalorder %s137, 0
    %s140 = sadd.s32 %s139, 1
    %s141 = scalar_select %p138, %s139, %s140
    %p144 = pneg %p138
    %p145 = scmp.eq.s32.totalorder %s9, 7
    %p146 = por %p144, %p145
    %p147 = scmp.ne.s32.totalorder %s139, %s142
    %p148 = scmp.eq.s32.totalorder %s9, 0
    %p149 = por %p147, %p148
    %p150 = scmp.ne.s32.totalorder %s139, %s142
    %p151 = scmp.eq.s32.totalorder %s14, 7
    %p152 = por %p150, %p151
    %p153 = scmp.ne.s32.totalorder %s142, %s143
    %p154 = scmp.eq.s32.totalorder %s14, 0
    %p155 = por %p153, %p154
    %p156 = scmp.ne.s32.totalorder %s142, %s143
    %p157 = scmp.eq.s32.totalorder %s15, 7
    %p158 = por %p156, %p157
    %p160 = scmp.ne.s32.totalorder %s143, %s159
    %p161 = scmp.eq.s32.totalorder %s15, 0
    %p162 = por %p160, %p161
    %p163 = scmp.le.s32.totalorder 1, %s9
    %p164 = scmp.lt.s32.totalorder %s9, 9
    %p165 = pnand %p163, %p164
    %p166 = pneg %p165
    // Predicated region
    $region9: #{transformer_forward.34} parent=5 // pred_check
      _
    $region10: #{transformer_forward.34} parent=5 // pred_check_branch
      %168 = sbr.rel (%p165) target = $region12
    $region11: #{transformer_forward.34} parent=5 // pred_region
      %s169 = ssub.s32 %s9, 1
    $region12: #{transformer_forward.34} parent=5 // pred_fallthru
      _
    %p170 = scmp.lt.s32.totalorder %s9, 8
    // Predicated region
    $region13: #{transformer_forward.34} parent=5 // pred_check
      %p171 = pneg %p170
    $region14: #{transformer_forward.34} parent=5 // pred_check_branch
      %173 = sbr.rel (%p171) target = $region16
    $region15: #{transformer_forward.34} parent=5 // pred_region
      // Predicated region
      $region17: #{transformer_forward.34} parent=15 // pred_check
        %p174 = pneg %p59
      $region18: #{transformer_forward.34} parent=15 // pred_check_branch
        %176 = sbr.rel (%p174) target = $region20
      $region19: #{transformer_forward.34} parent=15 // pred_region
        %p177 = scmp.lt.s32.totalorder %s16, 1
        %s178 = scalar_select %p177, %s16, 1
        %p179 = scmp.lt.s32.totalorder %s17, 3
        %s180 = scalar_select %p179, %s17, 3
        %p181 = scmp.lt.s32.totalorder %s18, 0
        %s182 = scalar_select %p181, %s18, 0
        %s183 = sadd.s32 %s182, %s180
        %s184 = smul.addr %s178, 4
        %s185 = sadd.s32 %s183, %s184
        %s186 = smul.addr %s185, 4
        %s187 = scalar_lea.vmem %s0, %s186
      $region20: #{transformer_forward.34} parent=15 // pred_fallthru
        _
      // Predicated region
      $region21: #{transformer_forward.34} parent=15 // pred_check
        %p188 = pneg %p89
      $region22: #{transformer_forward.34} parent=15 // pred_check_branch
        %190 = sbr.rel (%p188) target = $region24
      $region23: #{transformer_forward.34} parent=15 // pred_region
        %p191 = scmp.lt.s32.totalorder %s16, 1
        %s192 = scalar_select %p191, %s16, 1
        %p193 = scmp.lt.s32.totalorder %s17, 3
        %s194 = scalar_select %p193, %s17, 3
        %p195 = scmp.lt.s32.totalorder %s19, 0
        %s196 = scalar_select %p195, %s19, 0
        %s197 = sadd.s32 %s196, %s194
        %s198 = smul.addr %s192, 4
        %s199 = sadd.s32 %s197, %s198
        %s200 = smul.addr %s199, 4
        %s201 = scalar_lea.vmem %s1, %s200
      $region24: #{transformer_forward.34} parent=15 // pred_fallthru
        _
      // Predicated region
      $region25: #{transformer_forward.34} parent=15 // pred_check
        %p202 = pneg %p119
      $region26: #{transformer_forward.34} parent=15 // pred_check_branch
        %204 = sbr.rel (%p202) target = $region28
      $region27: #{transformer_forward.34} parent=15 // pred_region
        %p205 = scmp.lt.s32.totalorder %s16, 1
        %s206 = scalar_select %p205, %s16, 1
        %p207 = scmp.lt.s32.totalorder %s17, 3
        %s208 = scalar_select %p207, %s17, 3
        %p209 = scmp.lt.s32.totalorder %s19, 0
        %s210 = scalar_select %p209, %s19, 0
        %s211 = sadd.s32 %s210, %s208
        %s212 = smul.addr %s206, 4
        %s213 = sadd.s32 %s211, %s212
        %s214 = smul.addr %s213, 4
        %s215 = scalar_lea.vmem %s2, %s214
      $region28: #{transformer_forward.34} parent=15 // pred_fallthru
        _
    $region16: #{transformer_forward.34} parent=5 // pred_fallthru
      _
    %p216 = scmp.le.s32.totalorder 1, %s9
    %p217 = scmp.lt.s32.totalorder %s9, 9
    %p218 = pnand %p216, %p217
    %p219 = pneg %p218
    // Predicated region
    $region29: #{transformer_forward.34} parent=5 // pred_check
      _
    $region30: #{transformer_forward.34} parent=5 // pred_check_branch
      %221 = sbr.rel (%p218) target = $region32
    $region31: #{transformer_forward.34} parent=5 // pred_region
      %s222 = ssub.s32 %s9, 1
      %p223 = scmp.lt.s32.totalorder %s20, 1
      %s224 = scalar_select %p223, %s20, 1
      %p225 = scmp.lt.s32.totalorder %s21, 3
      %s226 = scalar_select %p225, %s21, 3
      %p227 = scmp.lt.s32.totalorder %s22, 0
      %s228 = scalar_select %p227, %s22, 0
      %s229 = sadd.s32 %s228, %s226
      %s230 = smul.addr %s224, 4
      %s231 = sadd.s32 %s229, %s230
      %s232 = smul.addr %s231, 4
      %s233 = scalar_lea.vmem %s0, %s232
      %p234 = pneg %p65
      %p235 = pneg %p62
      %p236 = scmp.lt.s32.totalorder %s20, 1
      %s237 = scalar_select %p236, %s20, 1
      %p238 = scmp.lt.s32.totalorder %s21, 3
      %s239 = scalar_select %p238, %s21, 3
      %p240 = scmp.lt.s32.totalorder %s23, 0
      %s241 = scalar_select %p240, %s23, 0
      %s242 = sadd.s32 %s241, %s239
      %s243 = smul.addr %s237, 4
      %s244 = sadd.s32 %s242, %s243
      %s245 = smul.addr %s244, 4
      %s246 = scalar_lea.vmem %s1, %s245
      %p247 = pneg %p95
      %p248 = pneg %p92
      %p249 = scmp.lt.s32.totalorder %s20, 1
      %s250 = scalar_select %p249, %s20, 1
      %p251 = scmp.lt.s32.totalorder %s21, 3
      %s252 = scalar_select %p251, %s21, 3
      %p253 = scmp.lt.s32.totalorder %s23, 0
      %s254 = scalar_select %p253, %s23, 0
      %s255 = sadd.s32 %s254, %s252
      %s256 = smul.addr %s250, 4
      %s257 = sadd.s32 %s255, %s256
      %s258 = smul.addr %s257, 4
      %s259 = scalar_lea.vmem %s2, %s258
      %p260 = pneg %p125
      %p261 = pneg %p122
      %p262 = pneg %p155
      %p263 = pneg %p152
      %p264 = scmp.lt.s32.totalorder %s20, 1
      %s265 = scalar_select %p264, %s20, 1
      %p266 = scmp.lt.s32.totalorder %s21, 3
      %s267 = scalar_select %p266, %s21, 3
      %p268 = scmp.lt.s32.totalorder %s22, 0
      %s269 = scalar_select %p268, %s22, 0
      %s270 = sadd.s32 %s269, %s267
      %s271 = smul.addr %s265, 4
      %s272 = sadd.s32 %s270, %s271
      %s273 = smul.addr %s272, 4
      %s274 = scalar_lea.vmem %s3, %s273
      %p275 = scmp.lt.s32.totalorder %s20, 1
      %s276 = scalar_select %p275, %s20, 1
      %p277 = scmp.lt.s32.totalorder %s21, 3
      %s278 = scalar_select %p277, %s21, 3
      %p279 = scmp.lt.s32.totalorder %s22, 0
      %s280 = scalar_select %p279, %s22, 0
      %s281 = sadd.s32 %s280, %s278
      %s282 = smul.addr %s276, 4
      %s283 = sadd.s32 %s281, %s282
      %s284 = smul.addr %s283, 4
      %s285 = scalar_lea.vmem %s0, %s284
      %p286 = scmp.lt.s32.totalorder %s20, 1
      %s287 = scalar_select %p286, %s20, 1
      %p288 = scmp.lt.s32.totalorder %s21, 3
      %s289 = scalar_select %p288, %s21, 3
      %p290 = scmp.lt.s32.totalorder %s23, 0
      %s291 = scalar_select %p290, %s23, 0
      %s292 = sadd.s32 %s291, %s289
      %s293 = smul.addr %s287, 4
      %s294 = sadd.s32 %s292, %s293
      %s295 = smul.addr %s294, 4
      %s296 = scalar_lea.vmem %s1, %s295
      %p297 = scmp.lt.s32.totalorder %s20, 1
      %s298 = scalar_select %p297, %s20, 1
      %p299 = scmp.lt.s32.totalorder %s21, 3
      %s300 = scalar_select %p299, %s21, 3
      %p301 = scmp.lt.s32.totalorder %s23, 0
      %s302 = scalar_select %p301, %s23, 0
      %s303 = sadd.s32 %s302, %s300
      %s304 = smul.addr %s298, 4
      %s305 = sadd.s32 %s303, %s304
      %s306 = smul.addr %s305, 4
      %s307 = scalar_lea.vmem %s2, %s306
      %p308 = scmp.lt.s32.totalorder %s20, 1
      %s309 = scalar_select %p308, %s20, 1
      %p310 = scmp.lt.s32.totalorder %s21, 3
      %s311 = scalar_select %p310, %s21, 3
      %p312 = scmp.lt.s32.totalorder %s22, 0
      %s313 = scalar_select %p312, %s22, 0
      %s314 = sadd.s32 %s313, %s311
      %s315 = smul.addr %s309, 4
      %s316 = sadd.s32 %s314, %s315
      %s317 = smul.addr %s316, 4
      %s318 = scalar_lea.vmem %s3, %s317
      %s321 = smul.u32 %s22, 8
      %s322 = smul.u32 %s23, 8
      %p323 = scmp.eq.s32.totalorder %s23, 0
      // Predicated region
      $region33: #{transformer_forward.34} parent=31 // pred_check
        %p324 = pneg %p323
      $region34: #{transformer_forward.34} parent=31 // pred_check_branch
        %326 = sbr.rel (%p324) target = $region36
      $region35: #{transformer_forward.34} parent=31 // pred_region
        %vm327 = vcmask 7168
        %328 = vst.msk [vmem:[#allocation2] sm:$0xff] %vm327, -1e+30
        %329 = vst.msk [vmem:[#allocation3] sm:$0xff] %vm327, 0.0
        %vm330 = vcmask 64512
        %331 = vst.msk [vmem:[#allocation4] sm:$0xff] %vm330, 0.0
      $region36: #{transformer_forward.34} parent=31 // pred_fallthru
        _
      %s332 = sadd.s32 %s321, 7
      %p333 = scmp.le.s32.totalorder %s322, %s332
      // Predicated region
      $region37: #{transformer_forward.34} parent=31 // pred_check
        %p334 = pneg %p333
      $region38: #{transformer_forward.34} parent=31 // pred_check_branch
        %336 = sbr.rel (%p334) target = $region40
      $region39: #{transformer_forward.34} parent=31 // pred_region
        %v337 = vld [vmem:[%s285] sm:$0xf]
        %v338 = vmul.bf16 %v337, 1052065461
        %v339 = vld [vmem:[%s296] sm:$0xf]
        %v340 = vld [vmem:[%s307] sm:$0xf]
        %vm341 = vcmask 64512
        %v343 = vsel %vm341, %v338, 0
        %v346 = vsel %vm341, %v339, 0
        %348 = vmatprep.subr.bf16.mxu0 0
        %349 = vmatpush1.bf16.xpose.msra.mxu0 %v346
        %350 = vmatprep.subr.bf16.mxu0 0
        %351 = vmatpush1.bf16.xpose.msra.mxu0 0
        %352 = vmatprep.subr.bf16.mxu0 0
        %353 = vmatpush1.bf16.xpose.msra.mxu0 0
        %354 = vmatprep.subr.bf16.mxu0 0
        %355 = vmatpush1.bf16.xpose.msra.mxu0 0
        %356 = vmatprep.subr.bf16.mxu0 0
        %357 = vmatpush1.bf16.xpose.msra.mxu0 0
        %358 = vmatprep.subr.bf16.mxu0 0
        %359 = vmatpush1.bf16.xpose.msra.mxu0 0
        %360 = vmatprep.subr.bf16.mxu0 0
        %361 = vmatpush1.bf16.xpose.msra.mxu0 0
        %362 = vmatprep.subr.bf16.mxu0 0
        %363 = vmatpush1.bf16.xpose.msra.mxu0 0
        %364 = vmatprep.subr.bf16.mxu0 0
        %365 = vmatpush1.bf16.xpose.msra.mxu0 0
        %366 = vmatprep.subr.bf16.mxu0 0
        %367 = vmatpush1.bf16.xpose.msra.mxu0 0
        %368 = vmatprep.subr.bf16.mxu0 0
        %369 = vmatpush1.bf16.xpose.msra.mxu0 0
        %370 = vmatprep.subr.bf16.mxu0 0
        %371 = vmatpush1.bf16.xpose.msra.mxu0 0
        %372 = vmatprep.subr.bf16.mxu0 0
        %373 = vmatpush1.bf16.xpose.msra.mxu0 0
        %374 = vmatprep.subr.bf16.mxu0 0
        %375 = vmatpush1.bf16.xpose.msra.mxu0 0
        %376 = vmatprep.subr.bf16.mxu0 0
        %377 = vmatpush1.bf16.xpose.msra.mxu0 0
        %378 = vmatprep.subr.bf16.mxu0 0
        %379 = vmatpush1.bf16.xpose.msra.mxu0 0
        %380 = vmatprep.mubr.bf16.mxu0 0
        %381 = vmatmul.mubr.bf16.gmra.mrb[0].mxu0 %v343
        %v382 = vpop.f32.mrb[0].mxu0
        %v383 = vadd.f32 0.0, %v382
        %v384 = vpop.f32.mrb[0].mxu0
        %v385 = vpop.f32.mrb[0].mxu0
        %v386 = vpop.f32.mrb[0].mxu0
        %387 = vdwg.mxu0
        %v388 = vlaneseq
        %v389 = vshrl.u32 %v388, 7
        %v390 = vstv %s321
        %v391 = vadd.s32 %v390, %v389
        %v392 = vlaneseq
        %v393 = vand.u32 %v392, 127
        %v394 = vstv %s322
        %v395 = vadd.s32 %v394, %v393
        %vm396 = vcmp.le.s32.totalorder %v395, %v391
        %v397 = vsel %vm396, %v383, -1e+09
        %v398 = vld [vmem:[#allocation2] sm:$0xff]
        %v399 = vsel %vm341, %v397, -inf
        %400 = vmax.xlane.f32.xlu0 %v399
        %v401 = vpop.xlane.xlu0 %400
        %v402 = vmax.f32 %v398, %v401
        %v403 = vsub.f32 %v398, %v402
        %v404 = vmul.f32 %v403, 1.442695
        %v405 = vpow.pop %v404
        %407 = vset.pattern.permute.xlu0 0
        %408 = vperm.xlu0 %407, %v402
        %v409 = vpop.permute.xlu0 %408
        %v411 = vsub.f32 %v397, %v409
        %v412 = vmul.f32 %v411, 1.442695
        %v413 = vpow.pop %v412
        %v414 = vld [vmem:[#allocation3] sm:$0xff]
        %v415 = vmul.f32 %v405, %v414
        %v416 = vsel %vm341, %v413, 0.0
        %417 = vadd.xlane.f32.xlu0 %v416
        %v418 = vpop.xlane.xlu0 %417
        %v419 = vadd.f32 %v415, %v418
        %vm420 = vcmask 7168
        %421 = vst.msk [vmem:[#allocation3] sm:$0xff] %vm420, %v419
        %v422 = vld [vmem:[#allocation4] sm:$0xff]
        %424 = vset.pattern.permute.xlu0 0
        %425 = vperm.xlu0 %424, %v405
        %v426 = vpop.permute.xlu0 %425
        %v428 = vmul.f32 %v426, %v422
        %v429 = vpack.c.bf16 %v413, %v413
        %v431 = vsel %vm341, %v429, 0
        %vm433 = vcmask 1043456
        %v435 = vsel %vm433, %v340, 0
        %437 = vmatprep.subr.bf16.mxu0 0
        %438 = vmatpush1.bf16.msra.mxu0 %v435
        %439 = vmatprep.subr.bf16.mxu0 0
        %440 = vmatpush1.bf16.msra.mxu0 0
        %441 = vmatprep.subr.bf16.mxu0 0
        %442 = vmatpush1.bf16.msra.mxu0 0
        %443 = vmatprep.subr.bf16.mxu0 0
        %444 = vmatpush1.bf16.msra.mxu0 0
        %445 = vmatprep.subr.bf16.mxu0 0
        %446 = vmatpush1.bf16.msra.mxu0 0
        %447 = vmatprep.subr.bf16.mxu0 0
        %448 = vmatpush1.bf16.msra.mxu0 0
        %449 = vmatprep.subr.bf16.mxu0 0
        %450 = vmatpush1.bf16.msra.mxu0 0
        %451 = vmatprep.subr.bf16.mxu0 0
        %452 = vmatpush1.bf16.msra.mxu0 0
        %453 = vmatprep.subr.bf16.mxu0 0
        %454 = vmatpush1.bf16.msra.mxu0 0
        %455 = vmatprep.subr.bf16.mxu0 0
        %456 = vmatpush1.bf16.msra.mxu0 0
        %457 = vmatprep.subr.bf16.mxu0 0
        %458 = vmatpush1.bf16.msra.mxu0 0
        %459 = vmatprep.subr.bf16.mxu0 0
        %460 = vmatpush1.bf16.msra.mxu0 0
        %461 = vmatprep.subr.bf16.mxu0 0
        %462 = vmatpush1.bf16.msra.mxu0 0
        %463 = vmatprep.subr.bf16.mxu0 0
        %464 = vmatpush1.bf16.msra.mxu0 0
        %465 = vmatprep.subr.bf16.mxu0 0
        %466 = vmatpush1.bf16.msra.mxu0 0
        %467 = vmatprep.subr.bf16.mxu0 0
        %468 = vmatpush1.bf16.msra.mxu0 0
        %469 = vmatprep.mubr.bf16.mxu0 0
        %470 = vmatmul.mubr.bf16.gmra.mrb[0].mxu0 %v431
        %v471 = vpop.f32.mrb[0].mxu0
        %v472 = vadd.f32 0.0, %v471
        %v473 = vpop.f32.mrb[0].mxu0
        %v474 = vpop.f32.mrb[0].mxu0
        %v475 = vpop.f32.mrb[0].mxu0
        %476 = vdwg.mxu0
        %v477 = vadd.f32 %v428, %v472
        %478 = vst.msk [vmem:[#allocation4] sm:$0xff] %vm341, %v477
        %479 = vst.msk [vmem:[#allocation2] sm:$0xff] %vm420, %v402
      $region40: #{transformer_forward.34} parent=31 // pred_fallthru
        _
      // Predicated region
      $region41: #{transformer_forward.34} parent=31 // pred_check
        %p480 = pneg %p323
      $region42: #{transformer_forward.34} parent=31 // pred_check_branch
        %482 = sbr.rel (%p480) target = $region44
      $region43: #{transformer_forward.34} parent=31 // pred_region
        %v483 = vld [vmem:[#allocation4] sm:$0xff]
        %v484 = vld [vmem:[#allocation3] sm:$0xff]
        %v485 = vrcp.pop %v484
        %487 = vset.pattern.permute.xlu0 0
        %488 = vperm.xlu0 %487, %v485
        %v489 = vpop.permute.xlu0 %488
        %v491 = vmul.f32 %v483, %v489
        %v492 = vpack.c.bf16 %v491, %v491
        %vm493 = vcmask 60416
        %494 = vst.msk [vmem:[%s318] sm:$0xf] %vm493, %v492
      $region44: #{transformer_forward.34} parent=31 // pred_fallthru
        _
      %p495 = scmp.lt.s32.totalorder %s20, 1
      %s496 = scalar_select %p495, %s20, 1
      %p497 = scmp.lt.s32.totalorder %s21, 3
      %s498 = scalar_select %p497, %s21, 3
      %p499 = scmp.lt.s32.totalorder %s22, 0
      %s500 = scalar_select %p499, %s22, 0
      %s501 = sadd.s32 %s500, %s498
      %s502 = smul.addr %s496, 4
      %s503 = sadd.s32 %s501, %s502
      %s504 = smul.addr %s503, 4
      %s505 = scalar_lea.vmem %s3, %s504
      // Predicated region
      $region45: #{transformer_forward.34} parent=31 // pred_check
        %p506 = pneg %p152
      $region46: #{transformer_forward.34} parent=31 // pred_check_branch
        %508 = sbr.rel (%p506) target = $region48
      $region47: #{transformer_forward.34} parent=31 // pred_region
        _
      $region48: #{transformer_forward.34} parent=31 // pred_fallthru
        _
    $region32: #{transformer_forward.34} parent=5 // pred_fallthru
      _
    %p509 = scmp.le.s32.totalorder 2, %s9
    // Predicated region
    $region49: #{transformer_forward.34} parent=5 // pred_check
      %p510 = pneg %p509
    $region50: #{transformer_forward.34} parent=5 // pred_check_branch
      %512 = sbr.rel (%p510) target = $region52
    $region51: #{transformer_forward.34} parent=5 // pred_region
      %s513 = ssub.s32 %s9, 2
      // Predicated region
      $region53: #{transformer_forward.34} parent=51 // pred_check
        %p514 = pneg %p158
      $region54: #{transformer_forward.34} parent=51 // pred_check_branch
        %516 = sbr.rel (%p514) target = $region56
      $region55: #{transformer_forward.34} parent=51 // pred_region
        %p517 = scmp.lt.s32.totalorder %s24, 1
        %s518 = scalar_select %p517, %s24, 1
        %p519 = scmp.lt.s32.totalorder %s25, 3
        %s520 = scalar_select %p519, %s25, 3
        %p521 = scmp.lt.s32.totalorder %s26, 0
        %s522 = scalar_select %p521, %s26, 0
        %s523 = sadd.s32 %s522, %s520
        %s524 = smul.addr %s518, 4
        %s525 = sadd.s32 %s523, %s524
        %s526 = smul.addr %s525, 4
        %s527 = scalar_lea.vmem %s3, %s526
      $region56: #{transformer_forward.34} parent=51 // pred_fallthru
        _
    $region52: #{transformer_forward.34} parent=5 // pred_fallthru
      _
  $region6: #{transformer_forward.34} parent=0 // loop_footer
    %s13 = sadd.s32 1, %s9
  $region7: #{transformer_forward.34} parent=0 // loop_footer_branch
    %8 = sbr.rel target = $region3
  $region8: #{transformer_forward.34} parent=0 // loop_exit
    _

// kernel: transformer_forward.36
$region0: #{transformer_forward.36}
  #allocation0 [shape = 'u32[]', space=smem, size = 0x4, offset = 0x4, fixed_abs, tag = 'smem constant byte address 0x4 - core index']
  #allocation1 [shape = 'u32[144,128]{1,0:T(1,128)}', space=vmem, size = 0x12000, scoped, tag = 'internal scratch']
  #allocation2 [shape = 'f32[16,32]{1,0:T(8,128)}', space=vmem, size = 0x2000, scoped, tag = 'scratch operand']
  %s0 = inlined_call_operand.vmem [shape: bf16[16,32], index: 0, kind: input, shape index: {}]
  %s1 = inlined_call_operand.vmem [shape: bf16[32,32], index: 1, kind: input, shape index: {}]
  %s2 = inlined_call_operand.vmem [shape: f32[1,32], index: 2, kind: input, shape index: {}]
  %s3 = inlined_call_operand.vmem [shape: bf16[16,32], index: 3, kind: output, shape index: {}]
  %s4 = sld [smem:[#allocation0]]
  $region30: #{transformer_forward.36} parent=0
    _
  %s6 = ssub.s32 1, %s4
  %s7 = scalar_select 0, %s6, %s4
  // Predicated region
  $region2: #{transformer_forward.36} parent=0 // pred_check
    _
  $region3: #{transformer_forward.36} parent=0 // pred_check_branch
    %9 = sbr.rel (0) target = $region5
  $region4: #{transformer_forward.36} parent=0 // pred_region
    _
  $region5: #{transformer_forward.36} parent=0 // pred_fallthru
    _
  // Predicated region
  $region6: #{transformer_forward.36} parent=0 // pred_check
    _
  $region7: #{transformer_forward.36} parent=0 // pred_check_branch
    %11 = sbr.rel (0) target = $region9
  $region8: #{transformer_forward.36} parent=0 // pred_region
    _
  $region9: #{transformer_forward.36} parent=0 // pred_fallthru
    _
  // Predicated region
  $region10: #{transformer_forward.36} parent=0 // pred_check
    _
  $region11: #{transformer_forward.36} parent=0 // pred_check_branch
    %13 = sbr.rel (0) target = $region13
  $region12: #{transformer_forward.36} parent=0 // pred_region
    _
  $region13: #{transformer_forward.36} parent=0 // pred_fallthru
    _
  %p15 = scmp.eq.s32.totalorder 0, 0
  // Predicated region
  $region14: #{transformer_forward.36} parent=0 // pred_check
    %p16 = pneg %p15
  $region15: #{transformer_forward.36} parent=0 // pred_check_branch
    %18 = sbr.rel (%p16) target = $region17
  $region16: #{transformer_forward.36} parent=0 // pred_region
    %vm19 = vcmask 261120
    %20 = vst.msk [vmem:[#allocation2] sm:$0xff] %vm19, 0.0
    %21 = vst.msk [vmem:[#allocation2 + $0x8] sm:$0xff] %vm19, 0.0
  $region17: #{transformer_forward.36} parent=0 // pred_fallthru
    _
  %v22 = vld [vmem:[#allocation2] sm:$0xff]
  %v23 = vld [vmem:[#allocation2 + $0x8] sm:$0xff]
  %v24 = vld [vmem:[%s0] sm:$0xf]
  %v25 = vld [vmem:[%s0 + $0x4] sm:$0xf]
  %v26 = vld [vmem:[%s1] sm:$0xf]
  %v27 = vld [vmem:[%s1 + $0x4] sm:$0xf]
  %v28 = vld [vmem:[%s1 + $0x8] sm:$0xf]
  %v29 = vld [vmem:[%s1 + $0xc] sm:$0xf]
  %v32 = vunpack.c.l.b16 %v24
  %v33 = vunpack.c.l.b16 %v25
  %v34 = vpack.c.b16 %v33, %v32
  %v39 = vunpack.c.l.b16 %v26
  %v40 = vunpack.c.l.b16 %v27
  %v41 = vunpack.c.l.b16 %v28
  %v42 = vunpack.c.l.b16 %v29
  %v43 = vpack.c.b16 %v40, %v39
  %v44 = vpack.c.b16 %v42, %v41
  %vm47 = vcmask 261120
  %v49 = vsel %vm47, %v34, 0
  %51 = vmatprep.subr.bf16.mxu0 0
  %52 = vmatpush1.bf16.msra.mxu0 %v43
  %53 = vmatprep.subr.bf16.mxu0 0
  %54 = vmatpush1.bf16.msra.mxu0 %v44
  %55 = vmatprep.subr.bf16.mxu0 0
  %56 = vmatpush1.bf16.msra.mxu0 0
  %57 = vmatprep.subr.bf16.mxu0 0
  %58 = vmatpush1.bf16.msra.mxu0 0
  %59 = vmatprep.subr.bf16.mxu0 0
  %60 = vmatpush1.bf16.msra.mxu0 0
  %61 = vmatprep.subr.bf16.mxu0 0
  %62 = vmatpush1.bf16.msra.mxu0 0
  %63 = vmatprep.subr.bf16.mxu0 0
  %64 = vmatpush1.bf16.msra.mxu0 0
  %65 = vmatprep.subr.bf16.mxu0 0
  %66 = vmatpush1.bf16.msra.mxu0 0
  %67 = vmatprep.subr.bf16.mxu0 0
  %68 = vmatpush1.bf16.msra.mxu0 0
  %69 = vmatprep.subr.bf16.mxu0 0
  %70 = vmatpush1.bf16.msra.mxu0 0
  %71 = vmatprep.subr.bf16.mxu0 0
  %72 = vmatpush1.bf16.msra.mxu0 0
  %73 = vmatprep.subr.bf16.mxu0 0
  %74 = vmatpush1.bf16.msra.mxu0 0
  %75 = vmatprep.subr.bf16.mxu0 0
  %76 = vmatpush1.bf16.msra.mxu0 0
  %77 = vmatprep.subr.bf16.mxu0 0
  %78 = vmatpush1.bf16.msra.mxu0 0
  %79 = vmatprep.subr.bf16.mxu0 0
  %80 = vmatpush1.bf16.msra.mxu0 0
  %81 = vmatprep.subr.bf16.mxu0 0
  %82 = vmatpush1.bf16.msra.mxu0 0
  %83 = vmatprep.mubr.bf16.mxu0 0
  %84 = vmatmul.mubr.bf16.gmra.mrb[0].mxu0 %v49
  %v85 = vpop.f32.mrb[0].mxu0
  %v86 = vadd.f32 0.0, %v85
  %v87 = vpop.f32.mrb[0].mxu0
  %v88 = vpop.f32.mrb[0].mxu0
  %v89 = vadd.f32 0.0, %v88
  %v90 = vpop.f32.mrb[0].mxu0
  %91 = vdwg.mxu0
  %v92 = vadd.f32 %v22, %v86
  %v93 = vadd.f32 %v23, %v89
  %94 = vst.msk [vmem:[#allocation2] sm:$0xff] %vm47, %v92
  %95 = vst.msk [vmem:[#allocation2 + $0x8] sm:$0xff] %vm47, %v93
  // Predicated region
  $region18: #{transformer_forward.36} parent=0 // pred_check
    %p96 = pneg %p15
  $region19: #{transformer_forward.36} parent=0 // pred_check_branch
    %98 = sbr.rel (%p96) target = $region21
  $region20: #{transformer_forward.36} parent=0 // pred_region
    %v99 = vld [vmem:[#allocation2] sm:$0xff]
    %v100 = vld [vmem:[#allocation2 + $0x8] sm:$0xff]
    %v101 = vld [vmem:[%s2] sm:$0x1]
    %v103 = vlaneseq
    %v104 = vshrl.u32 %v103, 7
    %v105 = vsub.s32 0, %v104
    %v106 = vrot.slane %v101, %v105
    %v108 = vadd.f32 %v99, %v106
    %v109 = vadd.f32 %v100, %v106
    %v110 = vpack.c.bf16 %v109, %v108
    %v112 = vunpack.c.l.b16 %v110
    %v113 = vunpack.c.h.b16 %v110
    %v114 = vpack.c.b16 %v112, %v112
    %v115 = vpack.c.b16 %v113, %v113
    %vm118 = vcmask 257024
    %119 = vst.msk [vmem:[%s3] sm:$0xf] %vm118, %v114
    %120 = vst.msk [vmem:[%s3 + $0x4] sm:$0xf] %vm118, %v115
  $region21: #{transformer_forward.36} parent=0 // pred_fallthru
    _
  // Predicated region
  $region22: #{transformer_forward.36} parent=0 // pred_check
    _
  $region23: #{transformer_forward.36} parent=0 // pred_check_branch
    %122 = sbr.rel (0) target = $region25
  $region24: #{transformer_forward.36} parent=0 // pred_region
    _
  $region25: #{transformer_forward.36} parent=0 // pred_fallthru
    _
  // Predicated region
  $region26: #{transformer_forward.36} parent=0 // pred_check
    _
  $region27: #{transformer_forward.36} parent=0 // pred_check_branch
    %124 = sbr.rel (0) target = $region29
  $region28: #{transformer_forward.36} parent=0 // pred_region
    _
  $region29: #{transformer_forward.36} parent=0 // pred_fallthru
    _

// kernel: transformer_forward.37
$region0: #{transformer_forward.37}
  #allocation0 [shape = 'u32[]', space=smem, size = 0x4, offset = 0x4, fixed_abs, tag = 'smem constant byte address 0x4 - core index']
  #allocation1 [shape = 'u32[144,128]{1,0:T(1,128)}', space=vmem, size = 0x12000, scoped, tag = 'internal scratch']
  #allocation2 [shape = 'f32[16,64]{1,0:T(8,128)}', space=vmem, size = 0x2000, scoped, tag = 'scratch operand']
  %s0 = inlined_call_operand.vmem [shape: bf16[16,32], index: 0, kind: input, shape index: {}]
  %s1 = inlined_call_operand.vmem [shape: bf16[32,64], index: 1, kind: input, shape index: {}]
  %s2 = inlined_call_operand.vmem [shape: f32[1,64], index: 2, kind: input, shape index: {}]
  %s3 = inlined_call_operand.vmem [shape: bf16[16,64], index: 3, kind: output, shape index: {}]
  %s4 = sld [smem:[#allocation0]]
  $region30: #{transformer_forward.37} parent=0
    _
  %s6 = ssub.s32 1, %s4
  %s7 = scalar_select 0, %s6, %s4
  // Predicated region
  $region2: #{transformer_forward.37} parent=0 // pred_check
    _
  $region3: #{transformer_forward.37} parent=0 // pred_check_branch
    %9 = sbr.rel (0) target = $region5
  $region4: #{transformer_forward.37} parent=0 // pred_region
    _
  $region5: #{transformer_forward.37} parent=0 // pred_fallthru
    _
  // Predicated region
  $region6: #{transformer_forward.37} parent=0 // pred_check
    _
  $region7: #{transformer_forward.37} parent=0 // pred_check_branch
    %11 = sbr.rel (0) target = $region9
  $region8: #{transformer_forward.37} parent=0 // pred_region
    _
  $region9: #{transformer_forward.37} parent=0 // pred_fallthru
    _
  // Predicated region
  $region10: #{transformer_forward.37} parent=0 // pred_check
    _
  $region11: #{transformer_forward.37} parent=0 // pred_check_branch
    %13 = sbr.rel (0) target = $region13
  $region12: #{transformer_forward.37} parent=0 // pred_region
    _
  $region13: #{transformer_forward.37} parent=0 // pred_fallthru
    _
  %p15 = scmp.eq.s32.totalorder 0, 0
  // Predicated region
  $region14: #{transformer_forward.37} parent=0 // pred_check
    %p16 = pneg %p15
  $region15: #{transformer_forward.37} parent=0 // pred_check_branch
    %18 = sbr.rel (%p16) target = $region17
  $region16: #{transformer_forward.37} parent=0 // pred_region
    %vm19 = vcmask 523264
    %20 = vst.msk [vmem:[#allocation2] sm:$0xff] %vm19, 0.0
    %21 = vst.msk [vmem:[#allocation2 + $0x8] sm:$0xff] %vm19, 0.0
  $region17: #{transformer_forward.37} parent=0 // pred_fallthru
    _
  %v22 = vld [vmem:[#allocation2] sm:$0xff]
  %v23 = vld [vmem:[#allocation2 + $0x8] sm:$0xff]
  %v24 = vld [vmem:[%s0] sm:$0xf]
  %v25 = vld [vmem:[%s0 + $0x4] sm:$0xf]
  %v26 = vld [vmem:[%s1] sm:$0xf]
  %v27 = vld [vmem:[%s1 + $0x4] sm:$0xf]
  %v28 = vld [vmem:[%s1 + $0x8] sm:$0xf]
  %v29 = vld [vmem:[%s1 + $0xc] sm:$0xf]
  %v32 = vunpack.c.l.b16 %v24
  %v33 = vunpack.c.l.b16 %v25
  %v34 = vpack.c.b16 %v33, %v32
  %v39 = vunpack.c.l.b16 %v26
  %v40 = vunpack.c.l.b16 %v27
  %v41 = vunpack.c.l.b16 %v28
  %v42 = vunpack.c.l.b16 %v29
  %v43 = vpack.c.b16 %v40, %v39
  %v44 = vpack.c.b16 %v42, %v41
  %vm47 = vcmask 261120
  %v49 = vsel %vm47, %v34, 0
  %51 = vmatprep.subr.bf16.mxu0 0
  %52 = vmatpush1.bf16.msra.mxu0 %v43
  %53 = vmatprep.subr.bf16.mxu0 0
  %54 = vmatpush1.bf16.msra.mxu0 %v44
  %55 = vmatprep.subr.bf16.mxu0 0
  %56 = vmatpush1.bf16.msra.mxu0 0
  %57 = vmatprep.subr.bf16.mxu0 0
  %58 = vmatpush1.bf16.msra.mxu0 0
  %59 = vmatprep.subr.bf16.mxu0 0
  %60 = vmatpush1.bf16.msra.mxu0 0
  %61 = vmatprep.subr.bf16.mxu0 0
  %62 = vmatpush1.bf16.msra.mxu0 0
  %63 = vmatprep.subr.bf16.mxu0 0
  %64 = vmatpush1.bf16.msra.mxu0 0
  %65 = vmatprep.subr.bf16.mxu0 0
  %66 = vmatpush1.bf16.msra.mxu0 0
  %67 = vmatprep.subr.bf16.mxu0 0
  %68 = vmatpush1.bf16.msra.mxu0 0
  %69 = vmatprep.subr.bf16.mxu0 0
  %70 = vmatpush1.bf16.msra.mxu0 0
  %71 = vmatprep.subr.bf16.mxu0 0
  %72 = vmatpush1.bf16.msra.mxu0 0
  %73 = vmatprep.subr.bf16.mxu0 0
  %74 = vmatpush1.bf16.msra.mxu0 0
  %75 = vmatprep.subr.bf16.mxu0 0
  %76 = vmatpush1.bf16.msra.mxu0 0
  %77 = vmatprep.subr.bf16.mxu0 0
  %78 = vmatpush1.bf16.msra.mxu0 0
  %79 = vmatprep.subr.bf16.mxu0 0
  %80 = vmatpush1.bf16.msra.mxu0 0
  %81 = vmatprep.subr.bf16.mxu0 0
  %82 = vmatpush1.bf16.msra.mxu0 0
  %83 = vmatprep.mubr.bf16.mxu0 0
  %84 = vmatmul.mubr.bf16.gmra.mrb[0].mxu0 %v49
  %v85 = vpop.f32.mrb[0].mxu0
  %v86 = vadd.f32 0.0, %v85
  %v87 = vpop.f32.mrb[0].mxu0
  %v88 = vpop.f32.mrb[0].mxu0
  %v89 = vadd.f32 0.0, %v88
  %v90 = vpop.f32.mrb[0].mxu0
  %91 = vdwg.mxu0
  %v92 = vadd.f32 %v22, %v86
  %v93 = vadd.f32 %v23, %v89
  %vm94 = vcmask 523264
  %95 = vst.msk [vmem:[#allocation2] sm:$0xff] %vm94, %v92
  %96 = vst.msk [vmem:[#allocation2 + $0x8] sm:$0xff] %vm94, %v93
  // Predicated region
  $region18: #{transformer_forward.37} parent=0 // pred_check
    %p97 = pneg %p15
  $region19: #{transformer_forward.37} parent=0 // pred_check_branch
    %99 = sbr.rel (%p97) target = $region21
  $region20: #{transformer_forward.37} parent=0 // pred_region
    %v100 = vld [vmem:[#allocation2] sm:$0xff]
    %v101 = vld [vmem:[#allocation2 + $0x8] sm:$0xff]
    %v102 = vld [vmem:[%s2] sm:$0x1]
    %v104 = vlaneseq
    %v105 = vshrl.u32 %v104, 7
    %v106 = vsub.s32 0, %v105
    %v107 = vrot.slane %v102, %v106
    %v109 = vadd.f32 %v100, %v107
    %v110 = vadd.f32 %v101, %v107
    %v111 = vpack.c.bf16 %v110, %v109
    %v113 = vunpack.c.l.b16 %v111
    %v114 = vunpack.c.h.b16 %v111
    %v115 = vpack.c.b16 %v113, %v113
    %v116 = vpack.c.b16 %v114, %v114
    %vm119 = vcmask 519168
    %120 = vst.msk [vmem:[%s3] sm:$0xf] %vm119, %v115
    %121 = vst.msk [vmem:[%s3 + $0x4] sm:$0xf] %vm119, %v116
  $region21: #{transformer_forward.37} parent=0 // pred_fallthru
    _
  // Predicated region
  $region22: #{transformer_forward.37} parent=0 // pred_check
    _
  $region23: #{transformer_forward.37} parent=0 // pred_check_branch
    %123 = sbr.rel (0) target = $region25
  $region24: #{transformer_forward.37} parent=0 // pred_region
    _
  $region25: #{transformer_forward.37} parent=0 // pred_fallthru
    _
  // Predicated region
  $region26: #{transformer_forward.37} parent=0 // pred_check
    _
  $region27: #{transformer_forward.37} parent=0 // pred_check_branch
    %125 = sbr.rel (0) target = $region29
  $region28: #{transformer_forward.37} parent=0 // pred_region
    _
  $region29: #{transformer_forward.37} parent=0 // pred_fallthru
    _

// kernel: transformer_forward.28
$region0: #{transformer_forward.28}
  #allocation0 [shape = 'u32[]', space=smem, size = 0x4, offset = 0x4, fixed_abs, tag = 'smem constant byte address 0x4 - core index']
  #allocation1 [shape = 'u32[144,128]{1,0:T(1,128)}', space=vmem, size = 0x12000, scoped, tag = 'internal scratch']
  %s0 = inlined_call_operand.vmem [shape: bf16[16,32], index: 0, kind: input, shape index: {}]
  %s1 = inlined_call_operand.vmem [shape: bf16[32,64], index: 1, kind: input, shape index: {}]
  %s2 = inlined_call_operand.vmem [shape: f32[1,64], index: 2, kind: input, shape index: {}]
  %s3 = inlined_call_operand.vmem [shape: bf16[64,32], index: 3, kind: input, shape index: {}]
  %s4 = inlined_call_operand.vmem [shape: f32[1,32], index: 4, kind: input, shape index: {}]
  %s5 = inlined_call_operand.vmem [shape: f32[1,32], index: 5, kind: input, shape index: {}]
  %s6 = inlined_call_operand.vmem [shape: f32[1,32], index: 6, kind: input, shape index: {}]
  %s7 = inlined_call_operand.vmem [shape: bf16[16,32], index: 7, kind: output, shape index: {}]
  %s8 = sld [smem:[#allocation0]]
  $region38: #{transformer_forward.28} parent=0
    _
  %s10 = ssub.s32 1, %s8
  %s11 = scalar_select 0, %s10, %s8
  // Predicated region
  $region2: #{transformer_forward.28} parent=0 // pred_check
    _
  $region3: #{transformer_forward.28} parent=0 // pred_check_branch
    %13 = sbr.rel (0) target = $region5
  $region4: #{transformer_forward.28} parent=0 // pred_region
    _
  $region5: #{transformer_forward.28} parent=0 // pred_fallthru
    _
  // Predicated region
  $region6: #{transformer_forward.28} parent=0 // pred_check
    _
  $region7: #{transformer_forward.28} parent=0 // pred_check_branch
    %15 = sbr.rel (0) target = $region9
  $region8: #{transformer_forward.28} parent=0 // pred_region
    _
  $region9: #{transformer_forward.28} parent=0 // pred_fallthru
    _
  // Predicated region
  $region10: #{transformer_forward.28} parent=0 // pred_check
    _
  $region11: #{transformer_forward.28} parent=0 // pred_check_branch
    %17 = sbr.rel (0) target = $region13
  $region12: #{transformer_forward.28} parent=0 // pred_region
    _
  $region13: #{transformer_forward.28} parent=0 // pred_fallthru
    _
  // Predicated region
  $region14: #{transformer_forward.28} parent=0 // pred_check
    _
  $region15: #{transformer_forward.28} parent=0 // pred_check_branch
    %19 = sbr.rel (0) target = $region17
  $region16: #{transformer_forward.28} parent=0 // pred_region
    _
  $region17: #{transformer_forward.28} parent=0 // pred_fallthru
    _
  // Predicated region
  $region18: #{transformer_forward.28} parent=0 // pred_check
    _
  $region19: #{transformer_forward.28} parent=0 // pred_check_branch
    %21 = sbr.rel (0) target = $region21
  $region20: #{transformer_forward.28} parent=0 // pred_region
    _
  $region21: #{transformer_forward.28} parent=0 // pred_fallthru
    _
  // Predicated region
  $region22: #{transformer_forward.28} parent=0 // pred_check
    _
  $region23: #{transformer_forward.28} parent=0 // pred_check_branch
    %23 = sbr.rel (0) target = $region25
  $region24: #{transformer_forward.28} parent=0 // pred_region
    _
  $region25: #{transformer_forward.28} parent=0 // pred_fallthru
    _
  // Predicated region
  $region26: #{transformer_forward.28} parent=0 // pred_check
    _
  $region27: #{transformer_forward.28} parent=0 // pred_check_branch
    %25 = sbr.rel (0) target = $region29
  $region28: #{transformer_forward.28} parent=0 // pred_region
    _
  $region29: #{transformer_forward.28} parent=0 // pred_fallthru
    _
  %v27 = vld [vmem:[%s0] sm:$0xf]
  %v28 = vld [vmem:[%s0 + $0x4] sm:$0xf]
  %v29 = vld [vmem:[%s1] sm:$0xf]
  %v30 = vld [vmem:[%s1 + $0x4] sm:$0xf]
  %v31 = vld [vmem:[%s1 + $0x8] sm:$0xf]
  %v32 = vld [vmem:[%s1 + $0xc] sm:$0xf]
  %v33 = vld [vmem:[%s2] sm:$0x1]
  %v35 = vlaneseq
  %v36 = vshrl.u32 %v35, 7
  %v37 = vsub.s32 0, %v36
  %v38 = vrot.slane %v33, %v37
  %v42 = vunpack.c.l.b16 %v27
  %v43 = vunpack.c.l.b16 %v28
  %v44 = vpack.c.b16 %v43, %v42
  %v49 = vunpack.c.l.b16 %v29
  %v50 = vunpack.c.l.b16 %v30
  %v51 = vunpack.c.l.b16 %v31
  %v52 = vunpack.c.l.b16 %v32
  %v53 = vpack.c.b16 %v50, %v49
  %v54 = vpack.c.b16 %v52, %v51
  %vm57 = vcmask 261120
  %v59 = vsel %vm57, %v44, 0
  %61 = vmatprep.subr.bf16.mxu0 0
  %62 = vmatpush1.bf16.msra.mxu0 %v53
  %63 = vmatprep.subr.bf16.mxu0 0
  %64 = vmatpush1.bf16.msra.mxu0 %v54
  %65 = vmatprep.subr.bf16.mxu0 0
  %66 = vmatpush1.bf16.msra.mxu0 0
  %67 = vmatprep.subr.bf16.mxu0 0
  %68 = vmatpush1.bf16.msra.mxu0 0
  %69 = vmatprep.subr.bf16.mxu0 0
  %70 = vmatpush1.bf16.msra.mxu0 0
  %71 = vmatprep.subr.bf16.mxu0 0
  %72 = vmatpush1.bf16.msra.mxu0 0
  %73 = vmatprep.subr.bf16.mxu0 0
  %74 = vmatpush1.bf16.msra.mxu0 0
  %75 = vmatprep.subr.bf16.mxu0 0
  %76 = vmatpush1.bf16.msra.mxu0 0
  %77 = vmatprep.subr.bf16.mxu0 0
  %78 = vmatpush1.bf16.msra.mxu0 0
  %79 = vmatprep.subr.bf16.mxu0 0
  %80 = vmatpush1.bf16.msra.mxu0 0
  %81 = vmatprep.subr.bf16.mxu0 0
  %82 = vmatpush1.bf16.msra.mxu0 0
  %83 = vmatprep.subr.bf16.mxu0 0
  %84 = vmatpush1.bf16.msra.mxu0 0
  %85 = vmatprep.subr.bf16.mxu0 0
  %86 = vmatpush1.bf16.msra.mxu0 0
  %87 = vmatprep.subr.bf16.mxu0 0
  %88 = vmatpush1.bf16.msra.mxu0 0
  %89 = vmatprep.subr.bf16.mxu0 0
  %90 = vmatpush1.bf16.msra.mxu0 0
  %91 = vmatprep.subr.bf16.mxu0 0
  %92 = vmatpush1.bf16.msra.mxu0 0
  %93 = vmatprep.mubr.bf16.mxu0 0
  %94 = vmatmul.mubr.bf16.gmra.mrb[0].mxu0 %v59
  %v95 = vpop.f32.mrb[0].mxu0
  %v96 = vadd.f32 %v38, %v95
  %v97 = vpop.f32.mrb[0].mxu0
  %v98 = vpop.f32.mrb[0].mxu0
  %v99 = vadd.f32 %v38, %v98
  %v100 = vpop.f32.mrb[0].mxu0
  %101 = vdwg.mxu0
  %v102 = vmax.f32 %v96, 0.0
  %v103 = vmax.f32 %v99, 0.0
  %v104 = vpack.c.bf16 %v103, %v102
  %v105 = vld [vmem:[%s3] sm:$0xf]
  %v106 = vld [vmem:[%s3 + $0x4] sm:$0xf]
  %v107 = vld [vmem:[%s3 + $0x8] sm:$0xf]
  %v108 = vld [vmem:[%s3 + $0xc] sm:$0xf]
  %v109 = vld [vmem:[%s3 + $0x10] sm:$0xf]
  %v110 = vld [vmem:[%s3 + $0x14] sm:$0xf]
  %v111 = vld [vmem:[%s3 + $0x18] sm:$0xf]
  %v112 = vld [vmem:[%s3 + $0x1c] sm:$0xf]
  %v113 = vld [vmem:[%s4] sm:$0x1]
  %v115 = vlaneseq
  %v116 = vshrl.u32 %v115, 7
  %v117 = vsub.s32 0, %v116
  %v118 = vrot.slane %v113, %v117
  %v128 = vunpack.c.l.b16 %v105
  %v129 = vunpack.c.l.b16 %v106
  %v130 = vunpack.c.l.b16 %v107
  %v131 = vunpack.c.l.b16 %v108
  %v132 = vunpack.c.l.b16 %v109
  %v133 = vunpack.c.l.b16 %v110
  %v134 = vunpack.c.l.b16 %v111
  %v135 = vunpack.c.l.b16 %v112
  %v136 = vpack.c.b16 %v129, %v128
  %v137 = vpack.c.b16 %v131, %v130
  %v138 = vpack.c.b16 %v133, %v132
  %v139 = vpack.c.b16 %v135, %v134
  %vm144 = vcmask 523264
  %v146 = vsel %vm144, %v104, 0
  %148 = vmatprep.subr.bf16.mxu0 0
  %149 = vmatpush1.bf16.msra.mxu0 %v136
  %150 = vmatprep.subr.bf16.mxu0 0
  %151 = vmatpush1.bf16.msra.mxu0 %v137
  %152 = vmatprep.subr.bf16.mxu0 0
  %153 = vmatpush1.bf16.msra.mxu0 %v138
  %154 = vmatprep.subr.bf16.mxu0 0
  %155 = vmatpush1.bf16.msra.mxu0 %v139
  %156 = vmatprep.subr.bf16.mxu0 0
  %157 = vmatpush1.bf16.msra.mxu0 0
  %158 = vmatprep.subr.bf16.mxu0 0
  %159 = vmatpush1.bf16.msra.mxu0 0
  %160 = vmatprep.subr.bf16.mxu0 0
  %161 = vmatpush1.bf16.msra.mxu0 0
  %162 = vmatprep.subr.bf16.mxu0 0
  %163 = vmatpush1.bf16.msra.mxu0 0
  %164 = vmatprep.subr.bf16.mxu0 0
  %165 = vmatpush1.bf16.msra.mxu0 0
  %166 = vmatprep.subr.bf16.mxu0 0
  %167 = vmatpush1.bf16.msra.mxu0 0
  %168 = vmatprep.subr.bf16.mxu0 0
  %169 = vmatpush1.bf16.msra.mxu0 0
  %170 = vmatprep.subr.bf16.mxu0 0
  %171 = vmatpush1.bf16.msra.mxu0 0
  %172 = vmatprep.subr.bf16.mxu0 0
  %173 = vmatpush1.bf16.msra.mxu0 0
  %174 = vmatprep.subr.bf16.mxu0 0
  %175 = vmatpush1.bf16.msra.mxu0 0
  %176 = vmatprep.subr.bf16.mxu0 0
  %177 = vmatpush1.bf16.msra.mxu0 0
  %178 = vmatprep.subr.bf16.mxu0 0
  %179 = vmatpush1.bf16.msra.mxu0 0
  %180 = vmatprep.mubr.bf16.mxu0 0
  %181 = vmatmul.mubr.bf16.gmra.mrb[0].mxu0 %v146
  %v182 = vpop.f32.mrb[0].mxu0
  %v183 = vadd.f32 %v118, %v182
  %v184 = vpop.f32.mrb[0].mxu0
  %v185 = vpop.f32.mrb[0].mxu0
  %v186 = vadd.f32 %v118, %v185
  %v187 = vpop.f32.mrb[0].mxu0
  %188 = vdwg.mxu0
  %v189 = vunpack.c.l.bf16 %v27
  %v190 = vunpack.c.l.bf16 %v28
  %v191 = vadd.f32 %v183, %v189
  %v192 = vadd.f32 %v186, %v190
  %v193 = vsel %vm57, %v191, 0.0
  %194 = vadd.xlane.f32.xlu0 %v193
  %v195 = vpop.xlane.xlu0 %194
  %v196 = vsel %vm57, %v192, 0.0
  %197 = vadd.xlane.f32.xlu0 %v196
  %v198 = vpop.xlane.xlu0 %197
  %v199 = vrcp.pop 32.0
  %v200 = vmul.f32 %v195, %v199
  %v201 = vmul.f32 %v198, %v199
  %v202 = vsub.f32 %v191, %v200
  %v203 = vsub.f32 %v192, %v201
  %v204 = vmul.f32 %v202, %v202
  %v205 = vmul.f32 %v203, %v203
  %v206 = vsel %vm57, %v204, 0.0
  %207 = vadd.xlane.f32.xlu0 %v206
  %v208 = vpop.xlane.xlu0 %207
  %v209 = vsel %vm57, %v205, 0.0
  %210 = vadd.xlane.f32.xlu0 %v209
  %v211 = vpop.xlane.xlu0 %210
  %v212 = vmul.f32 %v208, %v199
  %v213 = vmul.f32 %v211, %v199
  %v214 = vadd.f32 %v212, 1e-05
  %v215 = vadd.f32 %v213, 1e-05
  %v216 = vrsqrt.pop %v214
  %v217 = vrsqrt.pop %v215
  %v218 = vmul.f32 %v202, %v216
  %v219 = vmul.f32 %v203, %v217
  %v220 = vld [vmem:[%s5] sm:$0x1]
  %v222 = vlaneseq
  %v223 = vshrl.u32 %v222, 7
  %v224 = vsub.s32 0, %v223
  %v225 = vrot.slane %v220, %v224
  %v227 = vmul.f32 %v218, %v225
  %v228 = vmul.f32 %v219, %v225
  %v229 = vld [vmem:[%s6] sm:$0x1]
  %v231 = vlaneseq
  %v232 = vshrl.u32 %v231, 7
  %v233 = vsub.s32 0, %v232
  %v234 = vrot.slane %v229, %v233
  %v236 = vadd.f32 %v227, %v234
  %v237 = vadd.f32 %v228, %v234
  %v238 = vpack.c.bf16 %v237, %v236
  %v240 = vunpack.c.l.b16 %v238
  %v241 = vunpack.c.h.b16 %v238
  %v242 = vpack.c.b16 %v240, %v240
  %v243 = vpack.c.b16 %v241, %v241
  %vm246 = vcmask 257024
  %247 = vst.msk [vmem:[%s7] sm:$0xf] %vm246, %v242
  %248 = vst.msk [vmem:[%s7 + $0x4] sm:$0xf] %vm246, %v243
  // Predicated region
  $region30: #{transformer_forward.28} parent=0 // pred_check
    _
  $region31: #{transformer_forward.28} parent=0 // pred_check_branch
    %250 = sbr.rel (0) target = $region33
  $region32: #{transformer_forward.28} parent=0 // pred_region
    _
  $region33: #{transformer_forward.28} parent=0 // pred_fallthru
    _
  // Predicated region
  $region34: #{transformer_forward.28} parent=0 // pred_check
    _
  $region35: #{transformer_forward.28} parent=0 // pred_check_branch
    %252 = sbr.rel (0) target = $region37
  $region36: #{transformer_forward.28} parent=0 // pred_region
    _
  $region37: #{transformer_forward.28} parent=0 // pred_fallthru
    _

// kernel: transformer_forward.26
$region0: #{transformer_forward.26}
  #allocation0 [shape = 'u32[]', space=smem, size = 0x4, offset = 0x4, fixed_abs, tag = 'smem constant byte address 0x4 - core index']
  #allocation1 [shape = 'u32[144,128]{1,0:T(1,128)}', space=vmem, size = 0x12000, scoped, tag = 'internal scratch']
  #allocation2 [shape = 'f32[8,1]{1,0:T(8,128)}', space=vmem, size = 0x1000, scoped, tag = 'scratch operand']
  #allocation3 [shape = 'f32[8,1]{1,0:T(8,128)}', space=vmem, size = 0x1000, scoped, tag = 'scratch operand']
  #allocation4 [shape = 'f32[8,8]{1,0:T(8,128)}', space=vmem, size = 0x1000, scoped, tag = 'scratch operand']
  %s0 = inlined_call_operand.vmem [shape: bf16[2,4,8,8], index: 0, kind: input, shape index: {}]
  %s1 = inlined_call_operand.vmem [shape: bf16[2,4,8,8], index: 1, kind: input, shape index: {}]
  %s2 = inlined_call_operand.vmem [shape: bf16[2,4,8,8], index: 2, kind: input, shape index: {}]
  %s3 = inlined_call_operand.vmem [shape: bf16[2,4,8,8], index: 3, kind: output, shape index: {}]
  %s4 = sld [smem:[#allocation0]]
  $region53: #{transformer_forward.26} parent=0
    _
  %s6 = ssub.s32 1, %s4
  %s7 = scalar_select 0, %s6, %s4
  loop: start=0, step=1, limit=10
  $region2: #{transformer_forward.26} parent=0 // loop_pre_header
    _
  $region3: #{transformer_forward.26} parent=0 // loop_header
    %s9 = sphi 0, %s13
    %p10 = scmp.ge.s32.totalorder %s9, 10
    %s16 = sphi 0, %s42
    %s17 = sphi 0, %s38
    %s18 = sphi 0, %s34
    %s19 = sphi 0, %s30
    %s20 = sphi 0, %s16
    %s21 = sphi 0, %s17
    %s22 = sphi 0, %s18
    %s23 = sphi 0, %s19
    %s24 = sphi 0, %s20
    %s25 = sphi 0, %s21
    %s26 = sphi 0, %s22
    %s27 = sphi 0, %s23
    %s49 = sphi 0, %s51
    %s52 = sphi 0, %s49
    %s53 = sphi 0, %s52
    %s69 = sphi 0, %s53
    %s79 = sphi 0, %s81
    %s82 = sphi 0, %s79
    %s83 = sphi 0, %s82
    %s99 = sphi 0, %s83
    %s109 = sphi 0, %s111
    %s112 = sphi 0, %s109
    %s113 = sphi 0, %s112
    %s129 = sphi 0, %s113
    %s139 = sphi 0, %s141
    %s142 = sphi 0, %s139
    %s143 = sphi 0, %s142
    %s159 = sphi 0, %s143
  $region4: #{transformer_forward.26} parent=0 // loop_header_branch
    %12 = sbr.rel (%p10) target = $region8
  $region5: #{transformer_forward.26} parent=0 // loop_body
    %s14 = ssub.s32 %s9, 1
    %s15 = ssub.s32 %s9, 2
    %s28 = sadd.s32 1, %s19
    %p29 = scmp.ge.s32.totalorder %s28, 1
    %s30 = scalar_select %p29, 0, %s28
    %s31 = sadd.s32 1, %s18
    %s32 = scalar_select %p29, %s31, %s18
    %p33 = scmp.ge.s32.totalorder %s32, 1
    %s34 = scalar_select %p33, 0, %s32
    %s35 = sadd.s32 1, %s17
    %s36 = scalar_select %p33, %s35, %s17
    %p37 = scmp.ge.s32.totalorder %s36, 4
    %s38 = scalar_select %p37, 0, %s36
    %s39 = sadd.s32 1, %s16
    %s40 = scalar_select %p37, %s39, %s16
    %p41 = scmp.ge.s32.totalorder %s40, 2
    %s42 = scalar_select %p41, 0, %s40
    %s43 = ssub.s32 %s16, %s42
    %s44 = ssub.s32 %s17, %s38
    %s45 = sor.u32 %s43, %s44
    %s46 = ssub.s32 %s18, %s34
    %s47 = sor.u32 %s45, %s46
    %p48 = scmp.eq.s32.totalorder %s47, 0
    %s50 = sadd.s32 %s49, 1
    %s51 = scalar_select %p48, %s49, %s50
    %p54 = pneg %p48
    %p55 = scmp.eq.s32.totalorder %s9, 7
    %p56 = por %p54, %p55
    %p57 = scmp.ne.s32.totalorder %s49, %s52
    %p58 = scmp.eq.s32.totalorder %s9, 0
    %p59 = por %p57, %p58
    %p60 = scmp.ne.s32.totalorder %s49, %s52
    %p61 = scmp.eq.s32.totalorder %s14, 7
    %p62 = por %p60, %p61
    %p63 = scmp.ne.s32.totalorder %s52, %s53
    %p64 = scmp.eq.s32.totalorder %s14, 0
    %p65 = por %p63, %p64
    %p66 = scmp.ne.s32.totalorder %s52, %s53
    %p67 = scmp.eq.s32.totalorder %s15, 7
    %p68 = por %p66, %p67
    %p70 = scmp.ne.s32.totalorder %s53, %s69
    %p71 = scmp.eq.s32.totalorder %s15, 0
    %p72 = por %p70, %p71
    %s73 = ssub.s32 %s16, %s42
    %s74 = ssub.s32 %s17, %s38
    %s75 = sor.u32 %s73, %s74
    %s76 = ssub.s32 %s19, %s30
    %s77 = sor.u32 %s75, %s76
    %p78 = scmp.eq.s32.totalorder %s77, 0
    %s80 = sadd.s32 %s79, 1
    %s81 = scalar_select %p78, %s79, %s80
    %p84 = pneg %p78
    %p85 = scmp.eq.s32.totalorder %s9, 7
    %p86 = por %p84, %p85
    %p87 = scmp.ne.s32.totalorder %s79, %s82
    %p88 = scmp.eq.s32.totalorder %s9, 0
    %p89 = por %p87, %p88
    %p90 = scmp.ne.s32.totalorder %s79, %s82
    %p91 = scmp.eq.s32.totalorder %s14, 7
    %p92 = por %p90, %p91
    %p93 = scmp.ne.s32.totalorder %s82, %s83
    %p94 = scmp.eq.s32.totalorder %s14, 0
    %p95 = por %p93, %p94
    %p96 = scmp.ne.s32.totalorder %s82, %s83
    %p97 = scmp.eq.s32.totalorder %s15, 7
    %p98 = por %p96, %p97
    %p100 = scmp.ne.s32.totalorder %s83, %s99
    %p101 = scmp.eq.s32.totalorder %s15, 0
    %p102 = por %p100, %p101
    %s103 = ssub.s32 %s16, %s42
    %s104 = ssub.s32 %s17, %s38
    %s105 = sor.u32 %s103, %s104
    %s106 = ssub.s32 %s19, %s30
    %s107 = sor.u32 %s105, %s106
    %p108 = scmp.eq.s32.totalorder %s107, 0
    %s110 = sadd.s32 %s109, 1
    %s111 = scalar_select %p108, %s109, %s110
    %p114 = pneg %p108
    %p115 = scmp.eq.s32.totalorder %s9, 7
    %p116 = por %p114, %p115
    %p117 = scmp.ne.s32.totalorder %s109, %s112
    %p118 = scmp.eq.s32.totalorder %s9, 0
    %p119 = por %p117, %p118
    %p120 = scmp.ne.s32.totalorder %s109, %s112
    %p121 = scmp.eq.s32.totalorder %s14, 7
    %p122 = por %p120, %p121
    %p123 = scmp.ne.s32.totalorder %s112, %s113
    %p124 = scmp.eq.s32.totalorder %s14, 0
    %p125 = por %p123, %p124
    %p126 = scmp.ne.s32.totalorder %s112, %s113
    %p127 = scmp.eq.s32.totalorder %s15, 7
    %p128 = por %p126, %p127
    %p130 = scmp.ne.s32.totalorder %s113, %s129
    %p131 = scmp.eq.s32.totalorder %s15, 0
    %p132 = por %p130, %p131
    %s133 = ssub.s32 %s16, %s42
    %s134 = ssub.s32 %s17, %s38
    %s135 = sor.u32 %s133, %s134
    %s136 = ssub.s32 %s18, %s34
    %s137 = sor.u32 %s135, %s136
    %p138 = scmp.eq.s32.totalorder %s137, 0
    %s140 = sadd.s32 %s139, 1
    %s141 = scalar_select %p138, %s139, %s140
    %p144 = pneg %p138
    %p145 = scmp.eq.s32.totalorder %s9, 7
    %p146 = por %p144, %p145
    %p147 = scmp.ne.s32.totalorder %s139, %s142
    %p148 = scmp.eq.s32.totalorder %s9, 0
    %p149 = por %p147, %p148
    %p150 = scmp.ne.s32.totalorder %s139, %s142
    %p151 = scmp.eq.s32.totalorder %s14, 7
    %p152 = por %p150, %p151
    %p153 = scmp.ne.s32.totalorder %s142, %s143
    %p154 = scmp.eq.s32.totalorder %s14, 0
    %p155 = por %p153, %p154
    %p156 = scmp.ne.s32.totalorder %s142, %s143
    %p157 = scmp.eq.s32.totalorder %s15, 7
    %p158 = por %p156, %p157
    %p160 = scmp.ne.s32.totalorder %s143, %s159
    %p161 = scmp.eq.s32.totalorder %s15, 0
    %p162 = por %p160, %p161
    %p163 = scmp.le.s32.totalorder 1, %s9
    %p164 = scmp.lt.s32.totalorder %s9, 9
    %p165 = pnand %p163, %p164
    %p166 = pneg %p165
    // Predicated region
    $region9: #{transformer_forward.26} parent=5 // pred_check
      _
    $region10: #{transformer_forward.26} parent=5 // pred_check_branch
      %168 = sbr.rel (%p165) target = $region12
    $region11: #{transformer_forward.26} parent=5 // pred_region
      %s169 = ssub.s32 %s9, 1
    $region12: #{transformer_forward.26} parent=5 // pred_fallthru
      _
    %p170 = scmp.lt.s32.totalorder %s9, 8
    // Predicated region
    $region13: #{transformer_forward.26} parent=5 // pred_check
      %p171 = pneg %p170
    $region14: #{transformer_forward.26} parent=5 // pred_check_branch
      %173 = sbr.rel (%p171) target = $region16
    $region15: #{transformer_forward.26} parent=5 // pred_region
      // Predicated region
      $region17: #{transformer_forward.26} parent=15 // pred_check
        %p174 = pneg %p59
      $region18: #{transformer_forward.26} parent=15 // pred_check_branch
        %176 = sbr.rel (%p174) target = $region20
      $region19: #{transformer_forward.26} parent=15 // pred_region
        %p177 = scmp.lt.s32.totalorder %s16, 1
        %s178 = scalar_select %p177, %s16, 1
        %p179 = scmp.lt.s32.totalorder %s17, 3
        %s180 = scalar_select %p179, %s17, 3
        %p181 = scmp.lt.s32.totalorder %s18, 0
        %s182 = scalar_select %p181, %s18, 0
        %s183 = sadd.s32 %s182, %s180
        %s184 = smul.addr %s178, 4
        %s185 = sadd.s32 %s183, %s184
        %s186 = smul.addr %s185, 4
        %s187 = scalar_lea.vmem %s0, %s186
      $region20: #{transformer_forward.26} parent=15 // pred_fallthru
        _
      // Predicated region
      $region21: #{transformer_forward.26} parent=15 // pred_check
        %p188 = pneg %p89
      $region22: #{transformer_forward.26} parent=15 // pred_check_branch
        %190 = sbr.rel (%p188) target = $region24
      $region23: #{transformer_forward.26} parent=15 // pred_region
        %p191 = scmp.lt.s32.totalorder %s16, 1
        %s192 = scalar_select %p191, %s16, 1
        %p193 = scmp.lt.s32.totalorder %s17, 3
        %s194 = scalar_select %p193, %s17, 3
        %p195 = scmp.lt.s32.totalorder %s19, 0
        %s196 = scalar_select %p195, %s19, 0
        %s197 = sadd.s32 %s196, %s194
        %s198 = smul.addr %s192, 4
        %s199 = sadd.s32 %s197, %s198
        %s200 = smul.addr %s199, 4
        %s201 = scalar_lea.vmem %s1, %s200
      $region24: #{transformer_forward.26} parent=15 // pred_fallthru
        _
      // Predicated region
      $region25: #{transformer_forward.26} parent=15 // pred_check
        %p202 = pneg %p119
      $region26: #{transformer_forward.26} parent=15 // pred_check_branch
        %204 = sbr.rel (%p202) target = $region28
      $region27: #{transformer_forward.26} parent=15 // pred_region
        %p205 = scmp.lt.s32.totalorder %s16, 1
        %s206 = scalar_select %p205, %s16, 1
        %p207 = scmp.lt.s32.totalorder %s17, 3
        %s208 = scalar_select %p207, %s17, 3
        %p209 = scmp.lt.s32.totalorder %s19, 0
        %s210 = scalar_select %p209, %s19, 0
        %s211 = sadd.s32 %s210, %s208
        %s212 = smul.addr %s206, 4
        %s213 = sadd.s32 %s211, %s212
        %s214 = smul.addr %s213, 4
        %s215 = scalar_lea.vmem %s2, %s214
      $region28: #{transformer_forward.26} parent=15 // pred_fallthru
        _
    $region16: #{transformer_forward.26} parent=5 // pred_fallthru
      _
    %p216 = scmp.le.s32.totalorder 1, %s9
    %p217 = scmp.lt.s32.totalorder %s9, 9
    %p218 = pnand %p216, %p217
    %p219 = pneg %p218
    // Predicated region
    $region29: #{transformer_forward.26} parent=5 // pred_check
      _
    $region30: #{transformer_forward.26} parent=5 // pred_check_branch
      %221 = sbr.rel (%p218) target = $region32
    $region31: #{transformer_forward.26} parent=5 // pred_region
      %s222 = ssub.s32 %s9, 1
      %p223 = scmp.lt.s32.totalorder %s20, 1
      %s224 = scalar_select %p223, %s20, 1
      %p225 = scmp.lt.s32.totalorder %s21, 3
      %s226 = scalar_select %p225, %s21, 3
      %p227 = scmp.lt.s32.totalorder %s22, 0
      %s228 = scalar_select %p227, %s22, 0
      %s229 = sadd.s32 %s228, %s226
      %s230 = smul.addr %s224, 4
      %s231 = sadd.s32 %s229, %s230
      %s232 = smul.addr %s231, 4
      %s233 = scalar_lea.vmem %s0, %s232
      %p234 = pneg %p65
      %p235 = pneg %p62
      %p236 = scmp.lt.s32.totalorder %s20, 1
      %s237 = scalar_select %p236, %s20, 1
      %p238 = scmp.lt.s32.totalorder %s21, 3
      %s239 = scalar_select %p238, %s21, 3
      %p240 = scmp.lt.s32.totalorder %s23, 0
      %s241 = scalar_select %p240, %s23, 0
      %s242 = sadd.s32 %s241, %s239
      %s243 = smul.addr %s237, 4
      %s244 = sadd.s32 %s242, %s243
      %s245 = smul.addr %s244, 4
      %s246 = scalar_lea.vmem %s1, %s245
      %p247 = pneg %p95
      %p248 = pneg %p92
      %p249 = scmp.lt.s32.totalorder %s20, 1
      %s250 = scalar_select %p249, %s20, 1
      %p251 = scmp.lt.s32.totalorder %s21, 3
      %s252 = scalar_select %p251, %s21, 3
      %p253 = scmp.lt.s32.totalorder %s23, 0
      %s254 = scalar_select %p253, %s23, 0
      %s255 = sadd.s32 %s254, %s252
      %s256 = smul.addr %s250, 4
      %s257 = sadd.s32 %s255, %s256
      %s258 = smul.addr %s257, 4
      %s259 = scalar_lea.vmem %s2, %s258
      %p260 = pneg %p125
      %p261 = pneg %p122
      %p262 = pneg %p155
      %p263 = pneg %p152
      %p264 = scmp.lt.s32.totalorder %s20, 1
      %s265 = scalar_select %p264, %s20, 1
      %p266 = scmp.lt.s32.totalorder %s21, 3
      %s267 = scalar_select %p266, %s21, 3
      %p268 = scmp.lt.s32.totalorder %s22, 0
      %s269 = scalar_select %p268, %s22, 0
      %s270 = sadd.s32 %s269, %s267
      %s271 = smul.addr %s265, 4
      %s272 = sadd.s32 %s270, %s271
      %s273 = smul.addr %s272, 4
      %s274 = scalar_lea.vmem %s3, %s273
      %p275 = scmp.lt.s32.totalorder %s20, 1
      %s276 = scalar_select %p275, %s20, 1
      %p277 = scmp.lt.s32.totalorder %s21, 3
      %s278 = scalar_select %p277, %s21, 3
      %p279 = scmp.lt.s32.totalorder %s22, 0
      %s280 = scalar_select %p279, %s22, 0
      %s281 = sadd.s32 %s280, %s278
      %s282 = smul.addr %s276, 4
      %s283 = sadd.s32 %s281, %s282
      %s284 = smul.addr %s283, 4
      %s285 = scalar_lea.vmem %s0, %s284
      %p286 = scmp.lt.s32.totalorder %s20, 1
      %s287 = scalar_select %p286, %s20, 1
      %p288 = scmp.lt.s32.totalorder %s21, 3
      %s289 = scalar_select %p288, %s21, 3
      %p290 = scmp.lt.s32.totalorder %s23, 0
      %s291 = scalar_select %p290, %s23, 0
      %s292 = sadd.s32 %s291, %s289
      %s293 = smul.addr %s287, 4
      %s294 = sadd.s32 %s292, %s293
      %s295 = smul.addr %s294, 4
      %s296 = scalar_lea.vmem %s1, %s295
      %p297 = scmp.lt.s32.totalorder %s20, 1
      %s298 = scalar_select %p297, %s20, 1
      %p299 = scmp.lt.s32.totalorder %s21, 3
      %s300 = scalar_select %p299, %s21, 3
      %p301 = scmp.lt.s32.totalorder %s23, 0
      %s302 = scalar_select %p301, %s23, 0
      %s303 = sadd.s32 %s302, %s300
      %s304 = smul.addr %s298, 4
      %s305 = sadd.s32 %s303, %s304
      %s306 = smul.addr %s305, 4
      %s307 = scalar_lea.vmem %s2, %s306
      %p308 = scmp.lt.s32.totalorder %s20, 1
      %s309 = scalar_select %p308, %s20, 1
      %p310 = scmp.lt.s32.totalorder %s21, 3
      %s311 = scalar_select %p310, %s21, 3
      %p312 = scmp.lt.s32.totalorder %s22, 0
      %s313 = scalar_select %p312, %s22, 0
      %s314 = sadd.s32 %s313, %s311
      %s315 = smul.addr %s309, 4
      %s316 = sadd.s32 %s314, %s315
      %s317 = smul.addr %s316, 4
      %s318 = scalar_lea.vmem %s3, %s317
      %p321 = scmp.eq.s32.totalorder %s23, 0
      // Predicated region
      $region33: #{transformer_forward.26} parent=31 // pred_check
        %p322 = pneg %p321
      $region34: #{transformer_forward.26} parent=31 // pred_check_branch
        %324 = sbr.rel (%p322) target = $region36
      $region35: #{transformer_forward.26} parent=31 // pred_region
        %vm325 = vcmask 7168
        %326 = vst.msk [vmem:[#allocation2] sm:$0xff] %vm325, -1e+30
        %327 = vst.msk [vmem:[#allocation3] sm:$0xff] %vm325, 0.0
        %vm328 = vcmask 64512
        %329 = vst.msk [vmem:[#allocation4] sm:$0xff] %vm328, 0.0
      $region36: #{transformer_forward.26} parent=31 // pred_fallthru
        _
      %v330 = vld [vmem:[%s285] sm:$0xf]
      %v331 = vmul.bf16 %v330, 1052065461
      %v332 = vld [vmem:[%s296] sm:$0xf]
      %v333 = vld [vmem:[%s307] sm:$0xf]
      %vm334 = vcmask 64512
      %v336 = vsel %vm334, %v331, 0
      %v339 = vsel %vm334, %v332, 0
      %341 = vmatprep.subr.bf16.mxu0 0
      %342 = vmatpush1.bf16.xpose.msra.mxu0 %v339
      %343 = vmatprep.subr.bf16.mxu0 0
      %344 = vmatpush1.bf16.xpose.msra.mxu0 0
      %345 = vmatprep.subr.bf16.mxu0 0
      %346 = vmatpush1.bf16.xpose.msra.mxu0 0
      %347 = vmatprep.subr.bf16.mxu0 0
      %348 = vmatpush1.bf16.xpose.msra.mxu0 0
      %349 = vmatprep.subr.bf16.mxu0 0
      %350 = vmatpush1.bf16.xpose.msra.mxu0 0
      %351 = vmatprep.subr.bf16.mxu0 0
      %352 = vmatpush1.bf16.xpose.msra.mxu0 0
      %353 = vmatprep.subr.bf16.mxu0 0
      %354 = vmatpush1.bf16.xpose.msra.mxu0 0
      %355 = vmatprep.subr.bf16.mxu0 0
      %356 = vmatpush1.bf16.xpose.msra.mxu0 0
      %357 = vmatprep.subr.bf16.mxu0 0
      %358 = vmatpush1.bf16.xpose.msra.mxu0 0
      %359 = vmatprep.subr.bf16.mxu0 0
      %360 = vmatpush1.bf16.xpose.msra.mxu0 0
      %361 = vmatprep.subr.bf16.mxu0 0
      %362 = vmatpush1.bf16.xpose.msra.mxu0 0
      %363 = vmatprep.subr.bf16.mxu0 0
      %364 = vmatpush1.bf16.xpose.msra.mxu0 0
      %365 = vmatprep.subr.bf16.mxu0 0
      %366 = vmatpush1.bf16.xpose.msra.mxu0 0
      %367 = vmatprep.subr.bf16.mxu0 0
      %368 = vmatpush1.bf16.xpose.msra.mxu0 0
      %369 = vmatprep.subr.bf16.mxu0 0
      %370 = vmatpush1.bf16.xpose.msra.mxu0 0
      %371 = vmatprep.subr.bf16.mxu0 0
      %372 = vmatpush1.bf16.xpose.msra.mxu0 0
      %373 = vmatprep.mubr.bf16.mxu0 0
      %374 = vmatmul.mubr.bf16.gmra.mrb[0].mxu0 %v336
      %v375 = vpop.f32.mrb[0].mxu0
      %v376 = vadd.f32 0.0, %v375
      %v377 = vpop.f32.mrb[0].mxu0
      %v378 = vpop.f32.mrb[0].mxu0
      %v379 = vpop.f32.mrb[0].mxu0
      %380 = vdwg.mxu0
      %v381 = vld [vmem:[#allocation2] sm:$0xff]
      %v382 = vsel %vm334, %v376, -inf
      %383 = vmax.xlane.f32.xlu0 %v382
      %v384 = vpop.xlane.xlu0 %383
      %v385 = vmax.f32 %v381, %v384
      %v386 = vsub.f32 %v381, %v385
      %v387 = vmul.f32 %v386, 1.442695
      %v388 = vpow.pop %v387
      %390 = vset.pattern.permute.xlu0 0
      %391 = vperm.xlu0 %390, %v385
      %v392 = vpop.permute.xlu0 %391
      %v394 = vsub.f32 %v376, %v392
      %v395 = vmul.f32 %v394, 1.442695
      %v396 = vpow.pop %v395
      %v397 = vld [vmem:[#allocation3] sm:$0xff]
      %v398 = vmul.f32 %v388, %v397
      %v399 = vsel %vm334, %v396, 0.0
      %400 = vadd.xlane.f32.xlu0 %v399
      %v401 = vpop.xlane.xlu0 %400
      %v402 = vadd.f32 %v398, %v401
      %vm403 = vcmask 7168
      %404 = vst.msk [vmem:[#allocation3] sm:$0xff] %vm403, %v402
      %v405 = vld [vmem:[#allocation4] sm:$0xff]
      %407 = vset.pattern.permute.xlu0 0
      %408 = vperm.xlu0 %407, %v388
      %v409 = vpop.permute.xlu0 %408
      %v411 = vmul.f32 %v409, %v405
      %v412 = vpack.c.bf16 %v396, %v396
      %v414 = vsel %vm334, %v412, 0
      %vm416 = vcmask 1043456
      %v418 = vsel %vm416, %v333, 0
      %420 = vmatprep.subr.bf16.mxu0 0
      %421 = vmatpush1.bf16.msra.mxu0 %v418
      %422 = vmatprep.subr.bf16.mxu0 0
      %423 = vmatpush1.bf16.msra.mxu0 0
      %424 = vmatprep.subr.bf16.mxu0 0
      %425 = vmatpush1.bf16.msra.mxu0 0
      %426 = vmatprep.subr.bf16.mxu0 0
      %427 = vmatpush1.bf16.msra.mxu0 0
      %428 = vmatprep.subr.bf16.mxu0 0
      %429 = vmatpush1.bf16.msra.mxu0 0
      %430 = vmatprep.subr.bf16.mxu0 0
      %431 = vmatpush1.bf16.msra.mxu0 0
      %432 = vmatprep.subr.bf16.mxu0 0
      %433 = vmatpush1.bf16.msra.mxu0 0
      %434 = vmatprep.subr.bf16.mxu0 0
      %435 = vmatpush1.bf16.msra.mxu0 0
      %436 = vmatprep.subr.bf16.mxu0 0
      %437 = vmatpush1.bf16.msra.mxu0 0
      %438 = vmatprep.subr.bf16.mxu0 0
      %439 = vmatpush1.bf16.msra.mxu0 0
      %440 = vmatprep.subr.bf16.mxu0 0
      %441 = vmatpush1.bf16.msra.mxu0 0
      %442 = vmatprep.subr.bf16.mxu0 0
      %443 = vmatpush1.bf16.msra.mxu0 0
      %444 = vmatprep.subr.bf16.mxu0 0
      %445 = vmatpush1.bf16.msra.mxu0 0
      %446 = vmatprep.subr.bf16.mxu0 0
      %447 = vmatpush1.bf16.msra.mxu0 0
      %448 = vmatprep.subr.bf16.mxu0 0
      %449 = vmatpush1.bf16.msra.mxu0 0
      %450 = vmatprep.subr.bf16.mxu0 0
      %451 = vmatpush1.bf16.msra.mxu0 0
      %452 = vmatprep.mubr.bf16.mxu0 0
      %453 = vmatmul.mubr.bf16.gmra.mrb[0].mxu0 %v414
      %v454 = vpop.f32.mrb[0].mxu0
      %v455 = vadd.f32 0.0, %v454
      %v456 = vpop.f32.mrb[0].mxu0
      %v457 = vpop.f32.mrb[0].mxu0
      %v458 = vpop.f32.mrb[0].mxu0
      %459 = vdwg.mxu0
      %v460 = vadd.f32 %v411, %v455
      %461 = vst.msk [vmem:[#allocation4] sm:$0xff] %vm334, %v460
      %462 = vst.msk [vmem:[#allocation2] sm:$0xff] %vm403, %v385
      // Predicated region
      $region37: #{transformer_forward.26} parent=31 // pred_check
        %p463 = pneg %p321
      $region38: #{transformer_forward.26} parent=31 // pred_check_branch
        %465 = sbr.rel (%p463) target = $region40
      $region39: #{transformer_forward.26} parent=31 // pred_region
        %v466 = vld [vmem:[#allocation4] sm:$0xff]
        %v467 = vld [vmem:[#allocation3] sm:$0xff]
        %v468 = vrcp.pop %v467
        %470 = vset.pattern.permute.xlu0 0
        %471 = vperm.xlu0 %470, %v468
        %v472 = vpop.permute.xlu0 %471
        %v474 = vmul.f32 %v466, %v472
        %v475 = vpack.c.bf16 %v474, %v474
        %vm476 = vcmask 60416
        %477 = vst.msk [vmem:[%s318] sm:$0xf] %vm476, %v475
      $region40: #{transformer_forward.26} parent=31 // pred_fallthru
        _
      %p478 = scmp.lt.s32.totalorder %s20, 1
      %s479 = scalar_select %p478, %s20, 1
      %p480 = scmp.lt.s32.totalorder %s21, 3
      %s481 = scalar_select %p480, %s21, 3
      %p482 = scmp.lt.s32.totalorder %s22, 0
      %s483 = scalar_select %p482, %s22, 0
      %s484 = sadd.s32 %s483, %s481
      %s485 = smul.addr %s479, 4
      %s486 = sadd.s32 %s484, %s485
      %s487 = smul.addr %s486, 4
      %s488 = scalar_lea.vmem %s3, %s487
      // Predicated region
      $region41: #{transformer_forward.26} parent=31 // pred_check
        %p489 = pneg %p152
      $region42: #{transformer_forward.26} parent=31 // pred_check_branch
        %491 = sbr.rel (%p489) target = $region44
      $region43: #{transformer_forward.26} parent=31 // pred_region
        _
      $region44: #{transformer_forward.26} parent=31 // pred_fallthru
        _
    $region32: #{transformer_forward.26} parent=5 // pred_fallthru
      _
    %p492 = scmp.le.s32.totalorder 2, %s9
    // Predicated region
    $region45: #{transformer_forward.26} parent=5 // pred_check
      %p493 = pneg %p492
    $region46: #{transformer_forward.26} parent=5 // pred_check_branch
      %495 = sbr.rel (%p493) target = $region48
    $region47: #{transformer_forward.26} parent=5 // pred_region
      %s496 = ssub.s32 %s9, 2
      // Predicated region
      $region49: #{transformer_forward.26} parent=47 // pred_check
        %p497 = pneg %p158
      $region50: #{transformer_forward.26} parent=47 // pred_check_branch
        %499 = sbr.rel (%p497) target = $region52
      $region51: #{transformer_forward.26} parent=47 // pred_region
        %p500 = scmp.lt.s32.totalorder %s24, 1
        %s501 = scalar_select %p500, %s24, 1
        %p502 = scmp.lt.s32.totalorder %s25, 3
        %s503 = scalar_select %p502, %s25, 3
        %p504 = scmp.lt.s32.totalorder %s26, 0
        %s505 = scalar_select %p504, %s26, 0
        %s506 = sadd.s32 %s505, %s503
        %s507 = smul.addr %s501, 4
        %s508 = sadd.s32 %s506, %s507
        %s509 = smul.addr %s508, 4
        %s510 = scalar_lea.vmem %s3, %s509
      $region52: #{transformer_forward.26} parent=47 // pred_fallthru
        _
    $region48: #{transformer_forward.26} parent=5 // pred_fallthru
      _
  $region6: #{transformer_forward.26} parent=0 // loop_footer
    %s13 = sadd.s32 1, %s9
  $region7: #{transformer_forward.26} parent=0 // loop_footer_branch
    %8 = sbr.rel target = $region3
  $region8: #{transformer_forward.26} parent=0 // loop_exit
    _

// kernel: transformer_forward.38
$region0: #{transformer_forward.38}
  #allocation0 [shape = 'u32[]', space=smem, size = 0x4, offset = 0x4, fixed_abs, tag = 'smem constant byte address 0x4 - core index']
  #allocation1 [shape = 'u32[144,128]{1,0:T(1,128)}', space=vmem, size = 0x12000, scoped, tag = 'internal scratch']
  #allocation2 [shape = 'f32[8,1]{1,0:T(8,128)}', space=vmem, size = 0x1000, scoped, tag = 'scratch operand']
  #allocation3 [shape = 'f32[8,1]{1,0:T(8,128)}', space=vmem, size = 0x1000, scoped, tag = 'scratch operand']
  #allocation4 [shape = 'f32[8,8]{1,0:T(8,128)}', space=vmem, size = 0x1000, scoped, tag = 'scratch operand']
  %s0 = inlined_call_operand.vmem [shape: bf16[2,4,8,8], index: 0, kind: input, shape index: {}]
  %s1 = inlined_call_operand.vmem [shape: bf16[2,4,8,8], index: 1, kind: input, shape index: {}]
  %s2 = inlined_call_operand.vmem [shape: bf16[2,4,8,8], index: 2, kind: input, shape index: {}]
  %s3 = inlined_call_operand.vmem [shape: f32[2,1,8], index: 3, kind: input, shape index: {}]
  %s4 = inlined_call_operand.vmem [shape: bf16[2,4,8,8], index: 4, kind: output, shape index: {}]
  %s5 = sld [smem:[#allocation0]]
  $region57: #{transformer_forward.38} parent=0
    _
  %s7 = ssub.s32 1, %s5
  %s8 = scalar_select 0, %s7, %s5
  loop: start=0, step=1, limit=10
  $region2: #{transformer_forward.38} parent=0 // loop_pre_header
    _
  $region3: #{transformer_forward.38} parent=0 // loop_header
    %s10 = sphi 0, %s14
    %p11 = scmp.ge.s32.totalorder %s10, 10
    %s17 = sphi 0, %s43
    %s18 = sphi 0, %s39
    %s19 = sphi 0, %s35
    %s20 = sphi 0, %s31
    %s21 = sphi 0, %s17
    %s22 = sphi 0, %s18
    %s23 = sphi 0, %s19
    %s24 = sphi 0, %s20
    %s25 = sphi 0, %s21
    %s26 = sphi 0, %s22
    %s27 = sphi 0, %s23
    %s28 = sphi 0, %s24
    %s50 = sphi 0, %s52
    %s53 = sphi 0, %s50
    %s54 = sphi 0, %s53
    %s70 = sphi 0, %s54
    %s80 = sphi 0, %s82
    %s83 = sphi 0, %s80
    %s84 = sphi 0, %s83
    %s100 = sphi 0, %s84
    %s110 = sphi 0, %s112
    %s113 = sphi 0, %s110
    %s114 = sphi 0, %s113
    %s130 = sphi 0, %s114
    %s138 = sphi 0, %s140
    %s141 = sphi 0, %s138
    %s142 = sphi 0, %s141
    %s158 = sphi 0, %s142
    %s168 = sphi 0, %s170
    %s171 = sphi 0, %s168
    %s172 = sphi 0, %s171
    %s188 = sphi 0, %s172
  $region4: #{transformer_forward.38} parent=0 // loop_header_branch
    %13 = sbr.rel (%p11) target = $region8
  $region5: #{transformer_forward.38} parent=0 // loop_body
    %s15 = ssub.s32 %s10, 1
    %s16 = ssub.s32 %s10, 2
    %s29 = sadd.s32 1, %s20
    %p30 = scmp.ge.s32.totalorder %s29, 1
    %s31 = scalar_select %p30, 0, %s29
    %s32 = sadd.s32 1, %s19
    %s33 = scalar_select %p30, %s32, %s19
    %p34 = scmp.ge.s32.totalorder %s33, 1
    %s35 = scalar_select %p34, 0, %s33
    %s36 = sadd.s32 1, %s18
    %s37 = scalar_select %p34, %s36, %s18
    %p38 = scmp.ge.s32.totalorder %s37, 4
    %s39 = scalar_select %p38, 0, %s37
    %s40 = sadd.s32 1, %s17
    %s41 = scalar_select %p38, %s40, %s17
    %p42 = scmp.ge.s32.totalorder %s41, 2
    %s43 = scalar_select %p42, 0, %s41
    %s44 = ssub.s32 %s17, %s43
    %s45 = ssub.s32 %s18, %s39
    %s46 = sor.u32 %s44, %s45
    %s47 = ssub.s32 %s19, %s35
    %s48 = sor.u32 %s46, %s47
    %p49 = scmp.eq.s32.totalorder %s48, 0
    %s51 = sadd.s32 %s50, 1
    %s52 = scalar_select %p49, %s50, %s51
    %p55 = pneg %p49
    %p56 = scmp.eq.s32.totalorder %s10, 7
    %p57 = por %p55, %p56
    %p58 = scmp.ne.s32.totalorder %s50, %s53
    %p59 = scmp.eq.s32.totalorder %s10, 0
    %p60 = por %p58, %p59
    %p61 = scmp.ne.s32.totalorder %s50, %s53
    %p62 = scmp.eq.s32.totalorder %s15, 7
    %p63 = por %p61, %p62
    %p64 = scmp.ne.s32.totalorder %s53, %s54
    %p65 = scmp.eq.s32.totalorder %s15, 0
    %p66 = por %p64, %p65
    %p67 = scmp.ne.s32.totalorder %s53, %s54
    %p68 = scmp.eq.s32.totalorder %s16, 7
    %p69 = por %p67, %p68
    %p71 = scmp.ne.s32.totalorder %s54, %s70
    %p72 = scmp.eq.s32.totalorder %s16, 0
    %p73 = por %p71, %p72
    %s74 = ssub.s32 %s17, %s43
    %s75 = ssub.s32 %s18, %s39
    %s76 = sor.u32 %s74, %s75
    %s77 = ssub.s32 %s20, %s31
    %s78 = sor.u32 %s76, %s77
    %p79 = scmp.eq.s32.totalorder %s78, 0
    %s81 = sadd.s32 %s80, 1
    %s82 = scalar_select %p79, %s80, %s81
    %p85 = pneg %p79
    %p86 = scmp.eq.s32.totalorder %s10, 7
    %p87 = por %p85, %p86
    %p88 = scmp.ne.s32.totalorder %s80, %s83
    %p89 = scmp.eq.s32.totalorder %s10, 0
    %p90 = por %p88, %p89
    %p91 = scmp.ne.s32.totalorder %s80, %s83
    %p92 = scmp.eq.s32.totalorder %s15, 7
    %p93 = por %p91, %p92
    %p94 = scmp.ne.s32.totalorder %s83, %s84
    %p95 = scmp.eq.s32.totalorder %s15, 0
    %p96 = por %p94, %p95
    %p97 = scmp.ne.s32.totalorder %s83, %s84
    %p98 = scmp.eq.s32.totalorder %s16, 7
    %p99 = por %p97, %p98
    %p101 = scmp.ne.s32.totalorder %s84, %s100
    %p102 = scmp.eq.s32.totalorder %s16, 0
    %p103 = por %p101, %p102
    %s104 = ssub.s32 %s17, %s43
    %s105 = ssub.s32 %s18, %s39
    %s106 = sor.u32 %s104, %s105
    %s107 = ssub.s32 %s20, %s31
    %s108 = sor.u32 %s106, %s107
    %p109 = scmp.eq.s32.totalorder %s108, 0
    %s111 = sadd.s32 %s110, 1
    %s112 = scalar_select %p109, %s110, %s111
    %p115 = pneg %p109
    %p116 = scmp.eq.s32.totalorder %s10, 7
    %p117 = por %p115, %p116
    %p118 = scmp.ne.s32.totalorder %s110, %s113
    %p119 = scmp.eq.s32.totalorder %s10, 0
    %p120 = por %p118, %p119
    %p121 = scmp.ne.s32.totalorder %s110, %s113
    %p122 = scmp.eq.s32.totalorder %s15, 7
    %p123 = por %p121, %p122
    %p124 = scmp.ne.s32.totalorder %s113, %s114
    %p125 = scmp.eq.s32.totalorder %s15, 0
    %p126 = por %p124, %p125
    %p127 = scmp.ne.s32.totalorder %s113, %s114
    %p128 = scmp.eq.s32.totalorder %s16, 7
    %p129 = por %p127, %p128
    %p131 = scmp.ne.s32.totalorder %s114, %s130
    %p132 = scmp.eq.s32.totalorder %s16, 0
    %p133 = por %p131, %p132
    %s134 = ssub.s32 %s17, %s43
    %s135 = ssub.s32 %s20, %s31
    %s136 = sor.u32 %s134, %s135
    %p137 = scmp.eq.s32.totalorder %s136, 0
    %s139 = sadd.s32 %s138, 1
    %s140 = scalar_select %p137, %s138, %s139
    %p143 = pneg %p137
    %p144 = scmp.eq.s32.totalorder %s10, 7
    %p145 = por %p143, %p144
    %p146 = scmp.ne.s32.totalorder %s138, %s141
    %p147 = scmp.eq.s32.totalorder %s10, 0
    %p148 = por %p146, %p147
    %p149 = scmp.ne.s32.totalorder %s138, %s141
    %p150 = scmp.eq.s32.totalorder %s15, 7
    %p151 = por %p149, %p150
    %p152 = scmp.ne.s32.totalorder %s141, %s142
    %p153 = scmp.eq.s32.totalorder %s15, 0
    %p154 = por %p152, %p153
    %p155 = scmp.ne.s32.totalorder %s141, %s142
    %p156 = scmp.eq.s32.totalorder %s16, 7
    %p157 = por %p155, %p156
    %p159 = scmp.ne.s32.totalorder %s142, %s158
    %p160 = scmp.eq.s32.totalorder %s16, 0
    %p161 = por %p159, %p160
    %s162 = ssub.s32 %s17, %s43
    %s163 = ssub.s32 %s18, %s39
    %s164 = sor.u32 %s162, %s163
    %s165 = ssub.s32 %s19, %s35
    %s166 = sor.u32 %s164, %s165
    %p167 = scmp.eq.s32.totalorder %s166, 0
    %s169 = sadd.s32 %s168, 1
    %s170 = scalar_select %p167, %s168, %s169
    %p173 = pneg %p167
    %p174 = scmp.eq.s32.totalorder %s10, 7
    %p175 = por %p173, %p174
    %p176 = scmp.ne.s32.totalorder %s168, %s171
    %p177 = scmp.eq.s32.totalorder %s10, 0
    %p178 = por %p176, %p177
    %p179 = scmp.ne.s32.totalorder %s168, %s171
    %p180 = scmp.eq.s32.totalorder %s15, 7
    %p181 = por %p179, %p180
    %p182 = scmp.ne.s32.totalorder %s171, %s172
    %p183 = scmp.eq.s32.totalorder %s15, 0
    %p184 = por %p182, %p183
    %p185 = scmp.ne.s32.totalorder %s171, %s172
    %p186 = scmp.eq.s32.totalorder %s16, 7
    %p187 = por %p185, %p186
    %p189 = scmp.ne.s32.totalorder %s172, %s188
    %p190 = scmp.eq.s32.totalorder %s16, 0
    %p191 = por %p189, %p190
    %p192 = scmp.le.s32.totalorder 1, %s10
    %p193 = scmp.lt.s32.totalorder %s10, 9
    %p194 = pnand %p192, %p193
    %p195 = pneg %p194
    // Predicated region
    $region9: #{transformer_forward.38} parent=5 // pred_check
      _
    $region10: #{transformer_forward.38} parent=5 // pred_check_branch
      %197 = sbr.rel (%p194) target = $region12
    $region11: #{transformer_forward.38} parent=5 // pred_region
      %s198 = ssub.s32 %s10, 1
    $region12: #{transformer_forward.38} parent=5 // pred_fallthru
      _
    %p199 = scmp.lt.s32.totalorder %s10, 8
    // Predicated region
    $region13: #{transformer_forward.38} parent=5 // pred_check
      %p200 = pneg %p199
    $region14: #{transformer_forward.38} parent=5 // pred_check_branch
      %202 = sbr.rel (%p200) target = $region16
    $region15: #{transformer_forward.38} parent=5 // pred_region
      // Predicated region
      $region17: #{transformer_forward.38} parent=15 // pred_check
        %p203 = pneg %p60
      $region18: #{transformer_forward.38} parent=15 // pred_check_branch
        %205 = sbr.rel (%p203) target = $region20
      $region19: #{transformer_forward.38} parent=15 // pred_region
        %p206 = scmp.lt.s32.totalorder %s17, 1
        %s207 = scalar_select %p206, %s17, 1
        %p208 = scmp.lt.s32.totalorder %s18, 3
        %s209 = scalar_select %p208, %s18, 3
        %p210 = scmp.lt.s32.totalorder %s19, 0
        %s211 = scalar_select %p210, %s19, 0
        %s212 = sadd.s32 %s211, %s209
        %s213 = smul.addr %s207, 4
        %s214 = sadd.s32 %s212, %s213
        %s215 = smul.addr %s214, 4
        %s216 = scalar_lea.vmem %s0, %s215
      $region20: #{transformer_forward.38} parent=15 // pred_fallthru
        _
      // Predicated region
      $region21: #{transformer_forward.38} parent=15 // pred_check
        %p217 = pneg %p90
      $region22: #{transformer_forward.38} parent=15 // pred_check_branch
        %219 = sbr.rel (%p217) target = $region24
      $region23: #{transformer_forward.38} parent=15 // pred_region
        %p220 = scmp.lt.s32.totalorder %s17, 1
        %s221 = scalar_select %p220, %s17, 1
        %p222 = scmp.lt.s32.totalorder %s18, 3
        %s223 = scalar_select %p222, %s18, 3
        %p224 = scmp.lt.s32.totalorder %s20, 0
        %s225 = scalar_select %p224, %s20, 0
        %s226 = sadd.s32 %s225, %s223
        %s227 = smul.addr %s221, 4
        %s228 = sadd.s32 %s226, %s227
        %s229 = smul.addr %s228, 4
        %s230 = scalar_lea.vmem %s1, %s229
      $region24: #{transformer_forward.38} parent=15 // pred_fallthru
        _
      // Predicated region
      $region25: #{transformer_forward.38} parent=15 // pred_check
        %p231 = pneg %p120
      $region26: #{transformer_forward.38} parent=15 // pred_check_branch
        %233 = sbr.rel (%p231) target = $region28
      $region27: #{transformer_forward.38} parent=15 // pred_region
        %p234 = scmp.lt.s32.totalorder %s17, 1
        %s235 = scalar_select %p234, %s17, 1
        %p236 = scmp.lt.s32.totalorder %s18, 3
        %s237 = scalar_select %p236, %s18, 3
        %p238 = scmp.lt.s32.totalorder %s20, 0
        %s239 = scalar_select %p238, %s20, 0
        %s240 = sadd.s32 %s239, %s237
        %s241 = smul.addr %s235, 4
        %s242 = sadd.s32 %s240, %s241
        %s243 = smul.addr %s242, 4
        %s244 = scalar_lea.vmem %s2, %s243
      $region28: #{transformer_forward.38} parent=15 // pred_fallthru
        _
      // Predicated region
      $region29: #{transformer_forward.38} parent=15 // pred_check
        %p245 = pneg %p148
      $region30: #{transformer_forward.38} parent=15 // pred_check_branch
        %247 = sbr.rel (%p245) target = $region32
      $region31: #{transformer_forward.38} parent=15 // pred_region
        %p248 = scmp.lt.s32.totalorder %s17, 1
        %s249 = scalar_select %p248, %s17, 1
        %p250 = scmp.lt.s32.totalorder %s20, 0
        %s251 = scalar_select %p250, %s20, 0
        %s252 = sadd.s32 %s251, %s249
        %s253 = scalar_lea.vmem %s3, %s252
      $region32: #{transformer_forward.38} parent=15 // pred_fallthru
        _
    $region16: #{transformer_forward.38} parent=5 // pred_fallthru
      _
    %p254 = scmp.le.s32.totalorder 1, %s10
    %p255 = scmp.lt.s32.totalorder %s10, 9
    %p256 = pnand %p254, %p255
    %p257 = pneg %p256
    // Predicated region
    $region33: #{transformer_forward.38} parent=5 // pred_check
      _
    $region34: #{transformer_forward.38} parent=5 // pred_check_branch
      %259 = sbr.rel (%p256) target = $region36
    $region35: #{transformer_forward.38} parent=5 // pred_region
      %s260 = ssub.s32 %s10, 1
      %p261 = scmp.lt.s32.totalorder %s21, 1
      %s262 = scalar_select %p261, %s21, 1
      %p263 = scmp.lt.s32.totalorder %s22, 3
      %s264 = scalar_select %p263, %s22, 3
      %p265 = scmp.lt.s32.totalorder %s23, 0
      %s266 = scalar_select %p265, %s23, 0
      %s267 = sadd.s32 %s266, %s264
      %s268 = smul.addr %s262, 4
      %s269 = sadd.s32 %s267, %s268
      %s270 = smul.addr %s269, 4
      %s271 = scalar_lea.vmem %s0, %s270
      %p272 = pneg %p66
      %p273 = pneg %p63
      %p274 = scmp.lt.s32.totalorder %s21, 1
      %s275 = scalar_select %p274, %s21, 1
      %p276 = scmp.lt.s32.totalorder %s22, 3
      %s277 = scalar_select %p276, %s22, 3
      %p278 = scmp.lt.s32.totalorder %s24, 0
      %s279 = scalar_select %p278, %s24, 0
      %s280 = sadd.s32 %s279, %s277
      %s281 = smul.addr %s275, 4
      %s282 = sadd.s32 %s280, %s281
      %s283 = smul.addr %s282, 4
      %s284 = scalar_lea.vmem %s1, %s283
      %p285 = pneg %p96
      %p286 = pneg %p93
      %p287 = scmp.lt.s32.totalorder %s21, 1
      %s288 = scalar_select %p287, %s21, 1
      %p289 = scmp.lt.s32.totalorder %s22, 3
      %s290 = scalar_select %p289, %s22, 3
      %p291 = scmp.lt.s32.totalorder %s24, 0
      %s292 = scalar_select %p291, %s24, 0
      %s293 = sadd.s32 %s292, %s290
      %s294 = smul.addr %s288, 4
      %s295 = sadd.s32 %s293, %s294
      %s296 = smul.addr %s295, 4
      %s297 = scalar_lea.vmem %s2, %s296
      %p298 = pneg %p126
      %p299 = pneg %p123
      %p300 = scmp.lt.s32.totalorder %s21, 1
      %s301 = scalar_select %p300, %s21, 1
      %p302 = scmp.lt.s32.totalorder %s24, 0
      %s303 = scalar_select %p302, %s24, 0
      %s304 = sadd.s32 %s303, %s301
      %s305 = scalar_lea.vmem %s3, %s304
      %p306 = pneg %p154
      %p307 = pneg %p151
      %p308 = pneg %p184
      %p309 = pneg %p181
      %p310 = scmp.lt.s32.totalorder %s21, 1
      %s311 = scalar_select %p310, %s21, 1
      %p312 = scmp.lt.s32.totalorder %s22, 3
      %s313 = scalar_select %p312, %s22, 3
      %p314 = scmp.lt.s32.totalorder %s23, 0
      %s315 = scalar_select %p314, %s23, 0
      %s316 = sadd.s32 %s315, %s313
      %s317 = smul.addr %s311, 4
      %s318 = sadd.s32 %s316, %s317
      %s319 = smul.addr %s318, 4
      %s320 = scalar_lea.vmem %s4, %s319
      %p321 = scmp.lt.s32.totalorder %s21, 1
      %s322 = scalar_select %p321, %s21, 1
      %p323 = scmp.lt.s32.totalorder %s22, 3
      %s324 = scalar_select %p323, %s22, 3
      %p325 = scmp.lt.s32.totalorder %s23, 0
      %s326 = scalar_select %p325, %s23, 0
      %s327 = sadd.s32 %s326, %s324
      %s328 = smul.addr %s322, 4
      %s329 = sadd.s32 %s327, %s328
      %s330 = smul.addr %s329, 4
      %s331 = scalar_lea.vmem %s0, %s330
      %p332 = scmp.lt.s32.totalorder %s21, 1
      %s333 = scalar_select %p332, %s21, 1
      %p334 = scmp.lt.s32.totalorder %s22, 3
      %s335 = scalar_select %p334, %s22, 3
      %p336 = scmp.lt.s32.totalorder %s24, 0
      %s337 = scalar_select %p336, %s24, 0
      %s338 = sadd.s32 %s337, %s335
      %s339 = smul.addr %s333, 4
      %s340 = sadd.s32 %s338, %s339
      %s341 = smul.addr %s340, 4
      %s342 = scalar_lea.vmem %s1, %s341
      %p343 = scmp.lt.s32.totalorder %s21, 1
      %s344 = scalar_select %p343, %s21, 1
      %p345 = scmp.lt.s32.totalorder %s22, 3
      %s346 = scalar_select %p345, %s22, 3
      %p347 = scmp.lt.s32.totalorder %s24, 0
      %s348 = scalar_select %p347, %s24, 0
      %s349 = sadd.s32 %s348, %s346
      %s350 = smul.addr %s344, 4
      %s351 = sadd.s32 %s349, %s350
      %s352 = smul.addr %s351, 4
      %s353 = scalar_lea.vmem %s2, %s352
      %p354 = scmp.lt.s32.totalorder %s21, 1
      %s355 = scalar_select %p354, %s21, 1
      %p356 = scmp.lt.s32.totalorder %s24, 0
      %s357 = scalar_select %p356, %s24, 0
      %s358 = sadd.s32 %s357, %s355
      %s359 = scalar_lea.vmem %s3, %s358
      %p360 = scmp.lt.s32.totalorder %s21, 1
      %s361 = scalar_select %p360, %s21, 1
      %p362 = scmp.lt.s32.totalorder %s22, 3
      %s363 = scalar_select %p362, %s22, 3
      %p364 = scmp.lt.s32.totalorder %s23, 0
      %s365 = scalar_select %p364, %s23, 0
      %s366 = sadd.s32 %s365, %s363
      %s367 = smul.addr %s361, 4
      %s368 = sadd.s32 %s366, %s367
      %s369 = smul.addr %s368, 4
      %s370 = scalar_lea.vmem %s4, %s369
      %p373 = scmp.eq.s32.totalorder %s24, 0
      // Predicated region
      $region37: #{transformer_forward.38} parent=35 // pred_check
        %p374 = pneg %p373
      $region38: #{transformer_forward.38} parent=35 // pred_check_branch
        %376 = sbr.rel (%p374) target = $region40
      $region39: #{transformer_forward.38} parent=35 // pred_region
        %vm377 = vcmask 7168
        %378 = vst.msk [vmem:[#allocation2] sm:$0xff] %vm377, -1e+30
        %379 = vst.msk [vmem:[#allocation3] sm:$0xff] %vm377, 0.0
        %vm380 = vcmask 64512
        %381 = vst.msk [vmem:[#allocation4] sm:$0xff] %vm380, 0.0
      $region40: #{transformer_forward.38} parent=35 // pred_fallthru
        _
      %v382 = vld [vmem:[%s331] sm:$0xf]
      %v383 = vmul.bf16 %v382, 1052065461
      %v384 = vld [vmem:[%s342] sm:$0xf]
      %v385 = vld [vmem:[%s353] sm:$0xf]
      %v386 = vld [vmem:[%s359] sm:$0x1]
      %v388 = vlaneseq
      %v389 = vshrl.u32 %v388, 7
      %v390 = vsub.s32 0, %v389
      %v391 = vrot.slane %v386, %v390
      %vm393 = vcmask 64512
      %v395 = vsel %vm393, %v383, 0
      %v398 = vsel %vm393, %v384, 0
      %400 = vmatprep.subr.bf16.mxu0 0
      %401 = vmatpush1.bf16.xpose.msra.mxu0 %v398
      %402 = vmatprep.subr.bf16.mxu0 0
      %403 = vmatpush1.bf16.xpose.msra.mxu0 0
      %404 = vmatprep.subr.bf16.mxu0 0
      %405 = vmatpush1.bf16.xpose.msra.mxu0 0
      %406 = vmatprep.subr.bf16.mxu0 0
      %407 = vmatpush1.bf16.xpose.msra.mxu0 0
      %408 = vmatprep.subr.bf16.mxu0 0
      %409 = vmatpush1.bf16.xpose.msra.mxu0 0
      %410 = vmatprep.subr.bf16.mxu0 0
      %411 = vmatpush1.bf16.xpose.msra.mxu0 0
      %412 = vmatprep.subr.bf16.mxu0 0
      %413 = vmatpush1.bf16.xpose.msra.mxu0 0
      %414 = vmatprep.subr.bf16.mxu0 0
      %415 = vmatpush1.bf16.xpose.msra.mxu0 0
      %416 = vmatprep.subr.bf16.mxu0 0
      %417 = vmatpush1.bf16.xpose.msra.mxu0 0
      %418 = vmatprep.subr.bf16.mxu0 0
      %419 = vmatpush1.bf16.xpose.msra.mxu0 0
      %420 = vmatprep.subr.bf16.mxu0 0
      %421 = vmatpush1.bf16.xpose.msra.mxu0 0
      %422 = vmatprep.subr.bf16.mxu0 0
      %423 = vmatpush1.bf16.xpose.msra.mxu0 0
      %424 = vmatprep.subr.bf16.mxu0 0
      %425 = vmatpush1.bf16.xpose.msra.mxu0 0
      %426 = vmatprep.subr.bf16.mxu0 0
      %427 = vmatpush1.bf16.xpose.msra.mxu0 0
      %428 = vmatprep.subr.bf16.mxu0 0
      %429 = vmatpush1.bf16.xpose.msra.mxu0 0
      %430 = vmatprep.subr.bf16.mxu0 0
      %431 = vmatpush1.bf16.xpose.msra.mxu0 0
      %432 = vmatprep.mubr.bf16.mxu0 0
      %433 = vmatmul.mubr.bf16.gmra.mrb[0].mxu0 %v395
      %v434 = vpop.f32.mrb[0].mxu0
      %v435 = vadd.f32 %v391, %v434
      %v436 = vpop.f32.mrb[0].mxu0
      %v437 = vpop.f32.mrb[0].mxu0
      %v438 = vpop.f32.mrb[0].mxu0
      %439 = vdwg.mxu0
      %v440 = vld [vmem:[#allocation2] sm:$0xff]
      %v441 = vsel %vm393, %v435, -inf
      %442 = vmax.xlane.f32.xlu0 %v441
      %v443 = vpop.xlane.xlu0 %442
      %v444 = vmax.f32 %v440, %v443
      %v445 = vsub.f32 %v440, %v444
      %v446 = vmul.f32 %v445, 1.442695
      %v447 = vpow.pop %v446
      %449 = vset.pattern.permute.xlu0 0
      %450 = vperm.xlu0 %449, %v444
      %v451 = vpop.permute.xlu0 %450
      %v453 = vsub.f32 %v435, %v451
      %v454 = vmul.f32 %v453, 1.442695
      %v455 = vpow.pop %v454
      %v456 = vld [vmem:[#allocation3] sm:$0xff]
      %v457 = vmul.f32 %v447, %v456
      %v458 = vsel %vm393, %v455, 0.0
      %459 = vadd.xlane.f32.xlu0 %v458
      %v460 = vpop.xlane.xlu0 %459
      %v461 = vadd.f32 %v457, %v460
      %vm462 = vcmask 7168
      %463 = vst.msk [vmem:[#allocation3] sm:$0xff] %vm462, %v461
      %v464 = vld [vmem:[#allocation4] sm:$0xff]
      %466 = vset.pattern.permute.xlu0 0
      %467 = vperm.xlu0 %466, %v447
      %v468 = vpop.permute.xlu0 %467
      %v470 = vmul.f32 %v468, %v464
      %v471 = vpack.c.bf16 %v455, %v455
      %v473 = vsel %vm393, %v471, 0
      %vm475 = vcmask 1043456
      %v477 = vsel %vm475, %v385, 0
      %479 = vmatprep.subr.bf16.mxu0 0
      %480 = vmatpush1.bf16.msra.mxu0 %v477
      %481 = vmatprep.subr.bf16.mxu0 0
      %482 = vmatpush1.bf16.msra.mxu0 0
      %483 = vmatprep.subr.bf16.mxu0 0
      %484 = vmatpush1.bf16.msra.mxu0 0
      %485 = vmatprep.subr.bf16.mxu0 0
      %486 = vmatpush1.bf16.msra.mxu0 0
      %487 = vmatprep.subr.bf16.mxu0 0
      %488 = vmatpush1.bf16.msra.mxu0 0
      %489 = vmatprep.subr.bf16.mxu0 0
      %490 = vmatpush1.bf16.msra.mxu0 0
      %491 = vmatprep.subr.bf16.mxu0 0
      %492 = vmatpush1.bf16.msra.mxu0 0
      %493 = vmatprep.subr.bf16.mxu0 0
      %494 = vmatpush1.bf16.msra.mxu0 0
      %495 = vmatprep.subr.bf16.mxu0 0
      %496 = vmatpush1.bf16.msra.mxu0 0
      %497 = vmatprep.subr.bf16.mxu0 0
      %498 = vmatpush1.bf16.msra.mxu0 0
      %499 = vmatprep.subr.bf16.mxu0 0
      %500 = vmatpush1.bf16.msra.mxu0 0
      %501 = vmatprep.subr.bf16.mxu0 0
      %502 = vmatpush1.bf16.msra.mxu0 0
      %503 = vmatprep.subr.bf16.mxu0 0
      %504 = vmatpush1.bf16.msra.mxu0 0
      %505 = vmatprep.subr.bf16.mxu0 0
      %506 = vmatpush1.bf16.msra.mxu0 0
      %507 = vmatprep.subr.bf16.mxu0 0
      %508 = vmatpush1.bf16.msra.mxu0 0
      %509 = vmatprep.subr.bf16.mxu0 0
      %510 = vmatpush1.bf16.msra.mxu0 0
      %511 = vmatprep.mubr.bf16.mxu0 0
      %512 = vmatmul.mubr.bf16.gmra.mrb[0].mxu0 %v473
      %v513 = vpop.f32.mrb[0].mxu0
      %v514 = vadd.f32 0.0, %v513
      %v515 = vpop.f32.mrb[0].mxu0
      %v516 = vpop.f32.mrb[0].mxu0
      %v517 = vpop.f32.mrb[0].mxu0
      %518 = vdwg.mxu0
      %v519 = vadd.f32 %v470, %v514
      %520 = vst.msk [vmem:[#allocation4] sm:$0xff] %vm393, %v519
      %521 = vst.msk [vmem:[#allocation2] sm:$0xff] %vm462, %v444
      // Predicated region
      $region41: #{transformer_forward.38} parent=35 // pred_check
        %p522 = pneg %p373
      $region42: #{transformer_forward.38} parent=35 // pred_check_branch
        %524 = sbr.rel (%p522) target = $region44
      $region43: #{transformer_forward.38} parent=35 // pred_region
        %v525 = vld [vmem:[#allocation4] sm:$0xff]
        %v526 = vld [vmem:[#allocation3] sm:$0xff]
        %v527 = vrcp.pop %v526
        %529 = vset.pattern.permute.xlu0 0
        %530 = vperm.xlu0 %529, %v527
        %v531 = vpop.permute.xlu0 %530
        %v533 = vmul.f32 %v525, %v531
        %v534 = vpack.c.bf16 %v533, %v533
        %vm535 = vcmask 60416
        %536 = vst.msk [vmem:[%s370] sm:$0xf] %vm535, %v534
      $region44: #{transformer_forward.38} parent=35 // pred_fallthru
        _
      %p537 = scmp.lt.s32.totalorder %s21, 1
      %s538 = scalar_select %p537, %s21, 1
      %p539 = scmp.lt.s32.totalorder %s22, 3
      %s540 = scalar_select %p539, %s22, 3
      %p541 = scmp.lt.s32.totalorder %s23, 0
      %s542 = scalar_select %p541, %s23, 0
      %s543 = sadd.s32 %s542, %s540
      %s544 = smul.addr %s538, 4
      %s545 = sadd.s32 %s543, %s544
      %s546 = smul.addr %s545, 4
      %s547 = scalar_lea.vmem %s4, %s546
      // Predicated region
      $region45: #{transformer_forward.38} parent=35 // pred_check
        %p548 = pneg %p181
      $region46: #{transformer_forward.38} parent=35 // pred_check_branch
        %550 = sbr.rel (%p548) target = $region48
      $region47: #{transformer_forward.38} parent=35 // pred_region
        _
      $region48: #{transformer_forward.38} parent=35 // pred_fallthru
        _
    $region36: #{transformer_forward.38} parent=5 // pred_fallthru
      _
    %p551 = scmp.le.s32.totalorder 2, %s10
    // Predicated region
    $region49: #{transformer_forward.38} parent=5 // pred_check
      %p552 = pneg %p551
    $region50: #{transformer_forward.38} parent=5 // pred_check_branch
      %554 = sbr.rel (%p552) target = $region52
    $region51: #{transformer_forward.38} parent=5 // pred_region
      %s555 = ssub.s32 %s10, 2
      // Predicated region
      $region53: #{transformer_forward.38} parent=51 // pred_check
        %p556 = pneg %p187
      $region54: #{transformer_forward.38} parent=51 // pred_check_branch
        %558 = sbr.rel (%p556) target = $region56
      $region55: #{transformer_forward.38} parent=51 // pred_region
        %p559 = scmp.lt.s32.totalorder %s25, 1
        %s560 = scalar_select %p559, %s25, 1
        %p561 = scmp.lt.s32.totalorder %s26, 3
        %s562 = scalar_select %p561, %s26, 3
        %p563 = scmp.lt.s32.totalorder %s27, 0
        %s564 = scalar_select %p563, %s27, 0
        %s565 = sadd.s32 %s564, %s562
        %s566 = smul.addr %s560, 4
        %s567 = sadd.s32 %s565, %s566
        %s568 = smul.addr %s567, 4
        %s569 = scalar_lea.vmem %s4, %s568
      $region56: #{transformer_forward.38} parent=51 // pred_fallthru
        _
    $region52: #{transformer_forward.38} parent=5 // pred_fallthru
      _
  $region6: #{transformer_forward.38} parent=0 // loop_footer
    %s14 = sadd.s32 1, %s10
  $region7: #{transformer_forward.38} parent=0 // loop_footer_branch
    %9 = sbr.rel target = $region3
  $region8: #{transformer_forward.38} parent=0 // loop_exit
    _

// kernel: transformer_forward.49
$region0: #{transformer_forward.49}
  #allocation0 [shape = 'u32[]', space=smem, size = 0x4, offset = 0x4, fixed_abs, tag = 'smem constant byte address 0x4 - core index']
  #allocation1 [shape = 'u32[144,128]{1,0:T(1,128)}', space=vmem, size = 0x12000, scoped, tag = 'internal scratch']
  #allocation2 [shape = 'f32[16,96]{1,0:T(8,128)}', space=vmem, size = 0x2000, scoped, tag = 'scratch operand']
  %s0 = inlined_call_operand.vmem [shape: bf16[16,32], index: 0, kind: input, shape index: {}]
  %s1 = inlined_call_operand.vmem [shape: bf16[32,96], index: 1, kind: input, shape index: {}]
  %s2 = inlined_call_operand.vmem [shape: f32[1,96], index: 2, kind: input, shape index: {}]
  %s3 = inlined_call_operand.hbm [shape: f32[16,96], index: 3, kind: output, shape index: {}]
  %s4 = sld [smem:[#allocation0]]
  $region30: #{transformer_forward.49} parent=0
    _
  %s6 = ssub.s32 1, %s4
  %s7 = scalar_select 0, %s6, %s4
  $region1: #{transformer_forward.49} parent=0
    #allocation3 [shape = 'u8[8192]{0}', space=vmem, size = 0x2000, scoped, tag = 'output window, operand 0, single buffered']
    #allocation4 [shape = 's32[1]{0}', space=sflag, size = 0x4, scoped, tag = 'scoped memory for transformer_forward.49']
    %8 = vsyncpa [#allocation4], 0
    // Predicated region
    $region2: #{transformer_forward.49} parent=1 // pred_check
      _
    $region3: #{transformer_forward.49} parent=1 // pred_check_branch
      %10 = sbr.rel (0) target = $region5
    $region4: #{transformer_forward.49} parent=1 // pred_region
      _
    $region5: #{transformer_forward.49} parent=1 // pred_fallthru
      _
    // Predicated region
    $region6: #{transformer_forward.49} parent=1 // pred_check
      _
    $region7: #{transformer_forward.49} parent=1 // pred_check_branch
      %12 = sbr.rel (0) target = $region9
    $region8: #{transformer_forward.49} parent=1 // pred_region
      _
    $region9: #{transformer_forward.49} parent=1 // pred_fallthru
      _
    // Predicated region
    $region10: #{transformer_forward.49} parent=1 // pred_check
      _
    $region11: #{transformer_forward.49} parent=1 // pred_check_branch
      %14 = sbr.rel (0) target = $region13
    $region12: #{transformer_forward.49} parent=1 // pred_region
      _
    $region13: #{transformer_forward.49} parent=1 // pred_fallthru
      _
    %p16 = scmp.eq.s32.totalorder 0, 0
    // Predicated region
    $region14: #{transformer_forward.49} parent=1 // pred_check
      %p17 = pneg %p16
    $region15: #{transformer_forward.49} parent=1 // pred_check_branch
      %19 = sbr.rel (%p17) target = $region17
    $region16: #{transformer_forward.49} parent=1 // pred_region
      %vm20 = vcmask 785408
      %21 = vst.msk [vmem:[#allocation2] sm:$0xff] %vm20, 0.0
      %22 = vst.msk [vmem:[#allocation2 + $0x8] sm:$0xff] %vm20, 0.0
    $region17: #{transformer_forward.49} parent=1 // pred_fallthru
      _
    %v23 = vld [vmem:[#allocation2] sm:$0xff]
    %v24 = vld [vmem:[#allocation2 + $0x8] sm:$0xff]
    %v25 = vld [vmem:[%s0] sm:$0xf]
    %v26 = vld [vmem:[%s0 + $0x4] sm:$0xf]
    %v27 = vld [vmem:[%s1] sm:$0xf]
    %v28 = vld [vmem:[%s1 + $0x4] sm:$0xf]
    %v29 = vld [vmem:[%s1 + $0x8] sm:$0xf]
    %v30 = vld [vmem:[%s1 + $0xc] sm:$0xf]
    %v33 = vunpack.c.l.b16 %v25
    %v34 = vunpack.c.l.b16 %v26
    %v35 = vpack.c.b16 %v34, %v33
    %v40 = vunpack.c.l.b16 %v27
    %v41 = vunpack.c.l.b16 %v28
    %v42 = vunpack.c.l.b16 %v29
    %v43 = vunpack.c.l.b16 %v30
    %v44 = vpack.c.b16 %v41, %v40
    %v45 = vpack.c.b16 %v43, %v42
    %vm48 = vcmask 261120
    %v50 = vsel %vm48, %v35, 0
    %52 = vmatprep.subr.bf16.mxu0 0
    %53 = vmatpush1.bf16.msra.mxu0 %v44
    %54 = vmatprep.subr.bf16.mxu0 0
    %55 = vmatpush1.bf16.msra.mxu0 %v45
    %56 = vmatprep.subr.bf16.mxu0 0
    %57 = vmatpush1.bf16.msra.mxu0 0
    %58 = vmatprep.subr.bf16.mxu0 0
    %59 = vmatpush1.bf16.msra.mxu0 0
    %60 = vmatprep.subr.bf16.mxu0 0
    %61 = vmatpush1.bf16.msra.mxu0 0
    %62 = vmatprep.subr.bf16.mxu0 0
    %63 = vmatpush1.bf16.msra.mxu0 0
    %64 = vmatprep.subr.bf16.mxu0 0
    %65 = vmatpush1.bf16.msra.mxu0 0
    %66 = vmatprep.subr.bf16.mxu0 0
    %67 = vmatpush1.bf16.msra.mxu0 0
    %68 = vmatprep.subr.bf16.mxu0 0
    %69 = vmatpush1.bf16.msra.mxu0 0
    %70 = vmatprep.subr.bf16.mxu0 0
    %71 = vmatpush1.bf16.msra.mxu0 0
    %72 = vmatprep.subr.bf16.mxu0 0
    %73 = vmatpush1.bf16.msra.mxu0 0
    %74 = vmatprep.subr.bf16.mxu0 0
    %75 = vmatpush1.bf16.msra.mxu0 0
    %76 = vmatprep.subr.bf16.mxu0 0
    %77 = vmatpush1.bf16.msra.mxu0 0
    %78 = vmatprep.subr.bf16.mxu0 0
    %79 = vmatpush1.bf16.msra.mxu0 0
    %80 = vmatprep.subr.bf16.mxu0 0
    %81 = vmatpush1.bf16.msra.mxu0 0
    %82 = vmatprep.subr.bf16.mxu0 0
    %83 = vmatpush1.bf16.msra.mxu0 0
    %84 = vmatprep.mubr.bf16.mxu0 0
    %85 = vmatmul.mubr.bf16.gmra.mrb[0].mxu0 %v50
    %v86 = vpop.f32.mrb[0].mxu0
    %v87 = vadd.f32 0.0, %v86
    %v88 = vpop.f32.mrb[0].mxu0
    %v89 = vpop.f32.mrb[0].mxu0
    %v90 = vadd.f32 0.0, %v89
    %v91 = vpop.f32.mrb[0].mxu0
    %92 = vdwg.mxu0
    %v93 = vadd.f32 %v23, %v87
    %v94 = vadd.f32 %v24, %v90
    %vm95 = vcmask 785408
    %96 = vst.msk [vmem:[#allocation2] sm:$0xff] %vm95, %v93
    %97 = vst.msk [vmem:[#allocation2 + $0x8] sm:$0xff] %vm95, %v94
    // Predicated region
    $region18: #{transformer_forward.49} parent=1 // pred_check
      %p98 = pneg %p16
    $region19: #{transformer_forward.49} parent=1 // pred_check_branch
      %100 = sbr.rel (%p98) target = $region21
    $region20: #{transformer_forward.49} parent=1 // pred_region
      %v101 = vld [vmem:[#allocation2] sm:$0xff]
      %v102 = vld [vmem:[#allocation2 + $0x8] sm:$0xff]
      %v103 = vld [vmem:[%s2] sm:$0x1]
      %v105 = vlaneseq
      %v106 = vshrl.u32 %v105, 7
      %v107 = vsub.s32 0, %v106
      %v108 = vrot.slane %v103, %v107
      %v110 = vadd.f32 %v101, %v108
      %v111 = vadd.f32 %v102, %v108
      %112 = vst.msk [vmem:[#allocation3] sm:$0xff] %vm95, %v110
      %113 = vst.msk [vmem:[#allocation3 + $0x8] sm:$0xff] %vm95, %v111
    $region21: #{transformer_forward.49} parent=1 // pred_fallthru
      _
    // Predicated region
    $region22: #{transformer_forward.49} parent=1 // pred_check
      _
    $region23: #{transformer_forward.49} parent=1 // pred_check_branch
      %115 = sbr.rel (0) target = $region25
    $region24: #{transformer_forward.49} parent=1 // pred_region
      %s117 = ssub.s32 256, 256
      %118 = vsyncadd [#allocation4], %s117
      %s119 = sshll.u32 [#allocation3], 4
      %s120 = int_to_ptr.vmem [resolvable:$true] %s119
      %125 = dma.vmem_to_hbm [thread:$0]  %s120, 256, %s3, [#allocation4], 128, 128, 8
    $region25: #{transformer_forward.49} parent=1 // pred_fallthru
      _
    // Predicated region
    $region26: #{transformer_forward.49} parent=1 // pred_check
      _
    $region27: #{transformer_forward.49} parent=1 // pred_check_branch
      %127 = sbr.rel (0) target = $region29
    $region28: #{transformer_forward.49} parent=1 // pred_region
      %128 = dma.done [#allocation4], 256
    $region29: #{transformer_forward.49} parent=1 // pred_fallthru
      _
    %129 = vsyncpa [#allocation4], 1

</llo_original>
